<compile_context>
chip_gen: v7x
topology: tpu7x:2x2x1
jax: 0.10.0
libtpu: 0.0.40
codegen_flags: <defaults>
</compile_context>

<pallas_src>
import math

import jax
import jax.numpy as jnp
from jax.experimental import pallas as pl
from jax.experimental.pallas import tpu as pltpu


# ----------------------------------------------------------------------------
# Small synthetic DETR config (shapes scaled down; num_classes kept at 101)
# ----------------------------------------------------------------------------

class Cfg:
    d_model = 32
    n_heads = 4
    ffn_dim = 64
    num_queries = 8
    num_labels = 101          # class head outputs num_labels + 1 (no-object)
    patch = 8                 # "backbone" conv stride / kernel
    backbone_ch = 48
    enc_layers = 1
    dec_layers = 1
    head_pad = 128            # lane-dense padded width for cls / bbox head outputs


# ----------------------------------------------------------------------------
# Slab packer: concatenates tensors into one lane-dense (rows, 128) slab.
# Row offsets are static Python ints -> static Ref slices inside the kernel.
# ----------------------------------------------------------------------------

class SlabPacker:
    def __init__(self, dtype, align):
        self.dtype = dtype
        self.align = align          # 16 for bf16 (sublane packing), 8 for f32
        self.blocks = []
        self.offs = {}
        self.cursor = 0

    def add(self, name, arr):
        arr = jnp.asarray(arr, jnp.float32)
        if arr.ndim == 1:
            arr = arr.reshape(1, -1)
        r, c = arr.shape
        assert c <= 128, name
        rp = ((r + self.align - 1) // self.align) * self.align
        block = jnp.zeros((rp, 128), jnp.float32).at[:r, :c].set(arr)
        self.offs[name] = (self.cursor, r, c)
        self.blocks.append(block)
        self.cursor += rp

    def finish(self):
        slab = jnp.concatenate(self.blocks, axis=0).astype(self.dtype)
        return slab, self.offs


# ----------------------------------------------------------------------------
# Fused forward-pass kernel (one pallas_call for the whole model)
# ----------------------------------------------------------------------------

def build_detr_kernel(cfg, offw, offa):
    D = cfg.d_model
    H = cfg.n_heads

    def kernel(patches_ref, w_ref, a_ref, logits_ref, boxes_ref):
        # --- slab loaders: static slices, loaded at the use site -------------
        def wm(name):                       # bf16 matrix operand
            off, r, c = offw[name]
            return w_ref[off:off + r, :c]

        def wa(name):                       # f32 bias / LN / fold / mask
            off, r, c = offa[name]
            return a_ref[off:off + r, :c]

        def dotw(x, name):                  # bf16 x bf16 -> f32 accumulate
            return jnp.dot(x.astype(jnp.bfloat16), wm(name),
                           preferred_element_type=jnp.float32)

        def layernorm(x, gname, bname, eps=1e-5):
            g = wa(gname)
            b = wa(bname)
            m = jnp.mean(x, axis=-1, keepdims=True)
            var = jnp.mean(x * x, axis=-1, keepdims=True) - m * m
            return (x - m) * jax.lax.rsqrt(var + eps) * g + b

        # Block-diagonal multi-head attention: one matmul each for scores,
        # context and denominator over all heads.  mask is a constant
        # (H*Sk, D) f32 with mask[h*Sk+s, d] = (d // Dh == h).
        def attend(q, k, v, mask, o_name, ob_name):
            k_bd = jnp.concatenate([k] * H, axis=0) * mask      # (H*Sk, D)
            v_bd = jnp.concatenate([v] * H, axis=0) * mask      # (H*Sk, D)
            s = jax.lax.dot_general(                            # (Sq, H*Sk)
                q, k_bd, (((1,), (1,)), ((), ())),
                preferred_element_type=jnp.float32)
            s = s - jnp.max(s, axis=-1, keepdims=True)          # global row max: exact
            p = jnp.exp(s)
            denom = jnp.dot(p, mask, preferred_element_type=jnp.float32)   # (Sq, D)
            ctx = jnp.dot(p, v_bd, preferred_element_type=jnp.float32)     # (Sq, D)
            ctx = ctx * pl.reciprocal(denom, approx=True)
            return dotw(ctx, o_name) + wa(ob_name)

        # Self-attention: single packed qkv matmul; pos / qpos / scale are
        # pre-folded into the "add" and "qkv" slab entries.
        def self_attn(x, pre, mask):
            qkv = dotw(x, pre + "qkv_w") + wa(pre + "qkv_b") + wa(pre + "add")
            return attend(qkv[:, :D], qkv[:, D:2 * D], qkv[:, 2 * D:],
                          mask, pre + "o_w", pre + "o_b")

        # Cross-attention: one matmul for q (from tgt), one for packed kv
        # (from memory); qpos@Wq and pos@Wk pre-folded.
        def cross_attn(tgt, mem, pre, mask):
            q = dotw(tgt, pre + "q_w") + wa(pre + "q_b") + wa(pre + "q_add")
            kv = dotw(mem, pre + "kv_w") + wa(pre + "kv_b") + wa(pre + "kv_add")
            return attend(q, kv[:, :D], kv[:, D:], mask, pre + "o_w", pre + "o_b")

        mask_S = wa("mask_S")
        mask_Q = wa("mask_Q")

        # "Backbone" patch embed (ImageNet normalization folded into weights)
        # + 1x1 input projection.
        patches = patches_ref[...]                              # (S, C*p*p) f32
        feat = jax.nn.relu(dotw(patches, "backbone_w") + wa("backbone_b"))
        memory = dotw(feat, "proj_w") + wa("proj_b")            # (S, D)

        # --- Encoder ---
        for li in range(cfg.enc_layers):
            pre = "enc%d_" % li
            attn = self_attn(memory, pre + "sa_", mask_S)
            memory = layernorm(memory + attn, pre + "ln1_g", pre + "ln1_b")
            h = jax.nn.relu(dotw(memory, pre + "fc1_w") + wa(pre + "fc1_b"))
            h = dotw(h, pre + "fc2_w") + wa(pre + "fc2_b")
            memory = layernorm(memory + h, pre + "ln2_g", pre + "ln2_b")

        # --- Decoder ---
        tgt = jnp.zeros((cfg.num_queries, D), jnp.float32)
        for li in range(cfg.dec_layers):
            pre = "dec%d_" % li
            attn = self_attn(tgt, pre + "sa_", mask_Q)
            tgt = layernorm(tgt + attn, pre + "ln1_g", pre + "ln1_b")
            attn = cross_attn(tgt, memory, pre + "ca_", mask_S)
            tgt = layernorm(tgt + attn, pre + "ln2_g", pre + "ln2_b")
            h = jax.nn.relu(dotw(tgt, pre + "fc1_w") + wa(pre + "fc1_b"))
            h = dotw(h, pre + "fc2_w") + wa(pre + "fc2_b")
            tgt = layernorm(tgt + h, pre + "ln3_g", pre + "ln3_b")

        hs = layernorm(tgt, "dec_ln_g", "dec_ln_b")             # (Q, D)

        # Heads (padded to 128 output lanes -> lane-dense stores).
        logits_ref[...] = dotw(hs, "cls_w") + wa("cls_b")
        h = jax.nn.relu(dotw(hs, "bbox1_w") + wa("bbox1_b"))
        h = jax.nn.relu(dotw(h, "bbox2_w") + wa("bbox2_b"))
        boxes_ref[...] = jax.nn.sigmoid(dotw(h, "bbox3_w") + wa("bbox3_b"))

    return kernel


# ----------------------------------------------------------------------------
# Parameter construction
# ----------------------------------------------------------------------------

def make_params(cfg, in_ch=3):
    key = jax.random.PRNGKey(0)
    counter = iter(range(100000))

    def w(shape, scale=0.02):
        return scale * jax.random.normal(jax.random.fold_in(key, next(counter)),
                                         shape, jnp.float32)

    def zeros(shape):
        return jnp.zeros(shape, jnp.float32)

    def ones(shape):
        return jnp.ones(shape, jnp.float32)

    d = cfg.d_model

    def attn_params():
        return dict(q_w=w((d, d)), q_b=zeros((d,)),
                    k_w=w((d, d)), k_b=zeros((d,)),
                    v_w=w((d, d)), v_b=zeros((d,)),
                    o_w=w((d, d)), o_b=zeros((d,)))

    def enc_layer():
        return dict(sa=attn_params(),
                    ln1_g=ones((d,)), ln1_b=zeros((d,)),
                    fc1_w=w((d, cfg.ffn_dim)), fc1_b=zeros((cfg.ffn_dim,)),
                    fc2_w=w((cfg.ffn_dim, d)), fc2_b=zeros((d,)),
                    ln2_g=ones((d,)), ln2_b=zeros((d,)))

    def dec_layer():
        return dict(sa=attn_params(), ca=attn_params(),
                    ln1_g=ones((d,)), ln1_b=zeros((d,)),
                    ln2_g=ones((d,)), ln2_b=zeros((d,)),
                    fc1_w=w((d, cfg.ffn_dim)), fc1_b=zeros((cfg.ffn_dim,)),
                    fc2_w=w((cfg.ffn_dim, d)), fc2_b=zeros((d,)),
                    ln3_g=ones((d,)), ln3_b=zeros((d,)))

    return dict(
        backbone_w=w((in_ch * cfg.patch * cfg.patch, cfg.backbone_ch)),
        backbone_b=zeros((cfg.backbone_ch,)),
        proj_w=w((cfg.backbone_ch, d)), proj_b=zeros((d,)),
        query_embed=w((cfg.num_queries, d), scale=1.0),
        enc_layers=[enc_layer() for _ in range(cfg.enc_layers)],
        dec_layers=[dec_layer() for _ in range(cfg.dec_layers)],
        dec_ln_g=ones((d,)), dec_ln_b=zeros((d,)),
        cls_w=w((d, cfg.num_labels + 1)), cls_b=zeros((cfg.num_labels + 1,)),
        bbox1_w=w((d, d)), bbox1_b=zeros((d,)),
        bbox2_w=w((d, d)), bbox2_b=zeros((d,)),
        bbox3_w=w((d, 4)), bbox3_b=zeros((4,)),
    )


# ----------------------------------------------------------------------------
# Pack everything (weights, biases, pos folds, masks) into two slabs.
# ----------------------------------------------------------------------------

def pack_model(params, cfg, pos):
    D = cfg.d_model
    H = cfg.n_heads
    Dh = D // H
    scale = 1.0 / math.sqrt(Dh)
    p = cfg.patch

    wm = SlabPacker(jnp.bfloat16, align=16)   # matrices (MXU rhs operands)
    aux = SlabPacker(jnp.float32, align=8)    # biases / LN / pos folds / masks

    # Fold ImageNet (x - mean) / std into the patch-embed weights.
    mean = jnp.array([0.485, 0.456, 0.406], jnp.float32)
    std = jnp.array([0.229, 0.224, 0.225], jnp.float32)
    mean_vec = jnp.repeat(mean, p * p)
    std_vec = jnp.repeat(std, p * p)
    wm.add("backbone_w", params["backbone_w"] / std_vec[:, None])
    aux.add("backbone_b",
            params["backbone_b"] - (mean_vec / std_vec) @ params["backbone_w"])
    wm.add("proj_w", params["proj_w"])
    aux.add("proj_b", params["proj_b"])

    qpos = params["query_embed"]

    def pack_self_attn(pre, ap, qk_pos):
        qw = ap["q_w"] * scale                        # fold 1/sqrt(Dh) into q
        qb = ap["q_b"] * scale
        wm.add(pre + "qkv_w", jnp.concatenate([qw, ap["k_w"], ap["v_w"]], axis=1))
        aux.add(pre + "qkv_b", jnp.concatenate([qb, ap["k_b"], ap["v_b"]]))
        zeros_v = jnp.zeros((qk_pos.shape[0], D), jnp.float32)
        aux.add(pre + "add",
                jnp.concatenate([qk_pos @ qw, qk_pos @ ap["k_w"], zeros_v], axis=1))
        wm.add(pre + "o_w", ap["o_w"])
        aux.add(pre + "o_b", ap["o_b"])

    def pack_cross_attn(pre, ap, q_pos, k_pos):
        qw = ap["q_w"] * scale
        qb = ap["q_b"] * scale
        wm.add(pre + "q_w", qw)
        aux.add(pre + "q_b", qb)
        aux.add(pre + "q_add", q_pos @ qw)
        wm.add(pre + "kv_w", jnp.concatenate([ap["k_w"], ap["v_w"]], axis=1))
        aux.add(pre + "kv_b", jnp.concatenate([ap["k_b"], ap["v_b"]]))
        zeros_v = jnp.zeros((k_pos.shape[0], D), jnp.float32)
        aux.add(pre + "kv_add",
                jnp.concatenate([k_pos @ ap["k_w"], zeros_v], axis=1))
        wm.add(pre + "o_w", ap["o_w"])
        aux.add(pre + "o_b", ap["o_b"])

    for li, lp in enumerate(params["enc_layers"]):
        pre = "enc%d_" % li
        pack_self_attn(pre + "sa_", lp["sa"], pos)
        aux.add(pre + "ln1_g", lp["ln1_g"]); aux.add(pre + "ln1_b", lp["ln1_b"])
        wm.add(pre + "fc1_w", lp["fc1_w"]); aux.add(pre + "fc1_b", lp["fc1_b"])
        wm.add(pre + "fc2_w", lp["fc2_w"]); aux.add(pre + "fc2_b", lp["fc2_b"])
        aux.add(pre + "ln2_g", lp["ln2_g"]); aux.add(pre + "ln2_b", lp["ln2_b"])

    for li, lp in enumerate(params["dec_layers"]):
        pre = "dec%d_" % li
        pack_self_attn(pre + "sa_", lp["sa"], qpos)
        pack_cross_attn(pre + "ca_", lp["ca"], qpos, pos)
        aux.add(pre + "ln1_g", lp["ln1_g"]); aux.add(pre + "ln1_b", lp["ln1_b"])
        aux.add(pre + "ln2_g", lp["ln2_g"]); aux.add(pre + "ln2_b", lp["ln2_b"])
        wm.add(pre + "fc1_w", lp["fc1_w"]); aux.add(pre + "fc1_b", lp["fc1_b"])
        wm.add(pre + "fc2_w", lp["fc2_w"]); aux.add(pre + "fc2_b", lp["fc2_b"])
        aux.add(pre + "ln3_g", lp["ln3_g"]); aux.add(pre + "ln3_b", lp["ln3_b"])

    aux.add("dec_ln_g", params["dec_ln_g"])
    aux.add("dec_ln_b", params["dec_ln_b"])

    # Heads: zero-pad output width to 128 lanes (sliced back in the wrapper).
    NC = cfg.head_pad
    ncls = cfg.num_labels + 1
    wm.add("cls_w", jnp.zeros((D, NC), jnp.float32).at[:, :ncls].set(params["cls_w"]))
    aux.add("cls_b", jnp.zeros((NC,), jnp.float32).at[:ncls].set(params["cls_b"]))
    wm.add("bbox1_w", params["bbox1_w"]); aux.add("bbox1_b", params["bbox1_b"])
    wm.add("bbox2_w", params["bbox2_w"]); aux.add("bbox2_b", params["bbox2_b"])
    wm.add("bbox3_w", jnp.zeros((D, NC), jnp.float32).at[:, :4].set(params["bbox3_w"]))
    aux.add("bbox3_b", jnp.zeros((NC,), jnp.float32).at[:4].set(params["bbox3_b"]))

    # Constant block-diagonal head masks: mask[h*Sk+s, d] = (d // Dh == h).
    def head_mask(sk):
        rows = jnp.arange(H * sk) // sk
        cols = jnp.arange(D) // Dh
        return (rows[:, None] == cols[None, :]).astype(jnp.float32)

    aux.add("mask_S", head_mask(pos.shape[0]))
    aux.add("mask_Q", head_mask(qpos.shape[0]))

    w_slab, offw = wm.finish()
    a_slab, offa = aux.finish()
    return w_slab, offw, a_slab, offa


# ----------------------------------------------------------------------------
# Forward pass wrapper (im2col in JAX, everything else in the Pallas kernel)
# ----------------------------------------------------------------------------

def sine_pos_embed(h, w, d_model):
    """DETR sine position embedding, returns (h*w, d_model)."""
    num_pos_feats = d_model // 2
    temperature = 10000.0
    eps = 1e-6
    scale = 2.0 * math.pi
    y_embed = jnp.broadcast_to(jnp.arange(1, h + 1, dtype=jnp.float32)[:, None], (h, w))
    x_embed = jnp.broadcast_to(jnp.arange(1, w + 1, dtype=jnp.float32)[None, :], (h, w))
    y_embed = y_embed / (h + eps) * scale
    x_embed = x_embed / (w + eps) * scale
    dim_t = jnp.arange(num_pos_feats, dtype=jnp.float32)
    dim_t = temperature ** (2.0 * jnp.floor(dim_t / 2.0) / num_pos_feats)
    pos_x = x_embed[..., None] / dim_t
    pos_y = y_embed[..., None] / dim_t
    pos_x = jnp.stack([jnp.sin(pos_x[..., 0::2]), jnp.cos(pos_x[..., 1::2])],
                      axis=-1).reshape(h, w, -1)
    pos_y = jnp.stack([jnp.sin(pos_y[..., 0::2]), jnp.cos(pos_y[..., 1::2])],
                      axis=-1).reshape(h, w, -1)
    return jnp.concatenate([pos_y, pos_x], axis=-1).reshape(h * w, d_model)


def make_forward(cfg, offw, offa, seq_len):
    kernel = build_detr_kernel(cfg, offw, offa)
    Q = cfg.num_queries
    NC = cfg.head_pad

    @jax.jit
    def fwd(w_slab, a_slab, images):
        B, C, Himg, Wimg = images.shape
        p = cfg.patch
        Hp, Wp = Himg // p, Wimg // p
        S = Hp * Wp
        assert S == seq_len, "image size inconsistent with packed pos folds"
        Cp = C * p * p

        # im2col for the strided patch-embed "backbone" conv (layout only).
        patches = images.reshape(B, C, Hp, p, Wp, p).transpose(0, 2, 4, 1, 3, 5)
        patches = patches.reshape(B, S, Cp)

        Rw = w_slab.shape[0]
        Ra = a_slab.shape[0]
        out_shape = (jax.ShapeDtypeStruct((B, Q, NC), jnp.float32),
                     jax.ShapeDtypeStruct((B, Q, NC), jnp.float32))

        logits_pad, boxes_pad = pl.pallas_call(
            kernel,
            grid=(B,),
            in_specs=[pl.BlockSpec((None, S, Cp), lambda b: (b, 0, 0)),
                      pl.BlockSpec((Rw, 128), lambda b: (0, 0)),
                      pl.BlockSpec((Ra, 128), lambda b: (0, 0))],
            out_specs=(pl.BlockSpec((None, Q, NC), lambda b: (b, 0, 0)),
                       pl.BlockSpec((None, Q, NC), lambda b: (b, 0, 0))),
            out_shape=out_shape,
            compiler_params=pltpu.CompilerParams(
                dimension_semantics=("parallel",)),
        )(patches, w_slab, a_slab)

        logits = logits_pad[..., :cfg.num_labels + 1]
        pred_boxes = boxes_pad[..., :4]
        return logits, pred_boxes

    return fwd


def post_process(logits, pred_boxes, image_sizes):
    """DetrFeatureExtractor.post_process: softmax, drop no-object, scale boxes."""
    prob = jax.nn.softmax(logits, axis=-1)
    scores = jnp.max(prob[..., :-1], axis=-1)
    labels = jnp.argmax(prob[..., :-1], axis=-1)
    cx, cy, w, h = jnp.split(pred_boxes, 4, axis=-1)
    boxes = jnp.concatenate(
        [cx - 0.5 * w, cy - 0.5 * h, cx + 0.5 * w, cy + 0.5 * h], axis=-1)
    img_h = image_sizes[:, 0].astype(jnp.float32)
    img_w = image_sizes[:, 1].astype(jnp.float32)
    scale = jnp.stack([img_w, img_h, img_w, img_h], axis=1)[:, None, :]
    return scores, labels, boxes * scale


if __name__ == "__main__":
    cfg = Cfg()
    params = make_params(cfg)

    key = jax.random.PRNGKey(0)
    images = jax.random.uniform(key, (2, 3, 32, 32), jnp.float32)  # NCHW, [0, 1]
    image_sizes = jnp.array([[32, 32], [32, 32]], jnp.int32)       # (H, W) per image

    Hp = Wp = 32 // cfg.patch
    pos = sine_pos_embed(Hp, Wp, cfg.d_model)                      # (S, D)
    w_slab, offw, a_slab, offa = pack_model(params, cfg, pos)

    detr_forward = make_forward(cfg, offw, offa, Hp * Wp)
    logits, pred_boxes = detr_forward(w_slab, a_slab, images)
    scores, labels, boxes = post_process(logits, pred_boxes, image_sizes)
    jax.block_until_ready((logits, pred_boxes, scores, labels, boxes))

    assert logits.shape == (2, cfg.num_queries, cfg.num_labels + 1)
    assert pred_boxes.shape == (2, cfg.num_queries, 4)
    assert boxes.shape == (2, cfg.num_queries, 4)
    print("KERNEL_OK")
</pallas_src>

<mosaic_0001>
module attributes {stable_mosaic.version = 11 : i64} {
  func.func @kernel(%arg0: i32, %arg1: memref<1x16x192xf32, #tpu.memory_space<vmem>>, %arg2: memref<784x128xbf16, #tpu.memory_space<vmem>>, %arg3: memref<376x128xf32, #tpu.memory_space<vmem>>, %arg4: memref<1x8x128xf32, #tpu.memory_space<vmem>>, %arg5: memref<1x8x128xf32, #tpu.memory_space<vmem>>) attributes {dimension_semantics = [#tpu.dimension_semantics<parallel>], iteration_bounds = array<i64: 2>, scalar_prefetch = 0 : i64, scratch_operands = 0 : i64, tpu.core_type = #tpu.core_type<tc>, window_params = [{transform_indices = @transform_0, window_bounds = array<i64: 1, 16, 192>}, {pipeline_mode = #tpu.pipeline_mode<synchronous>, transform_indices = @transform_1, window_bounds = array<i64: 784, 128>}, {pipeline_mode = #tpu.pipeline_mode<synchronous>, transform_indices = @transform_2, window_bounds = array<i64: 376, 128>}, {transform_indices = @transform_3, window_bounds = array<i64: 1, 8, 128>}, {transform_indices = @transform_4, window_bounds = array<i64: 1, 8, 128>}]} {
    %c280 = arith.constant 280 : index
    %c0 = arith.constant 0 : index
    %0 = vector.load %arg3[%c280, %c0] : memref<376x128xf32, #tpu.memory_space<vmem>>, vector<64x32xf32>
    %c344 = arith.constant 344 : index
    %c0_0 = arith.constant 0 : index
    %1 = vector.load %arg3[%c344, %c0_0] : memref<376x128xf32, #tpu.memory_space<vmem>>, vector<32x32xf32>
    %c0_1 = arith.constant 0 : index
    %c0_2 = arith.constant 0 : index
    %c0_3 = arith.constant 0 : index
    %2 = vector.load %arg1[%c0_1, %c0_2, %c0_3] : memref<1x16x192xf32, #tpu.memory_space<vmem>>, vector<1x16x192xf32>
    %3 = vector.shape_cast %2 : vector<1x16x192xf32> to vector<16x192xf32>
    %4 = arith.truncf %3 : vector<16x192xf32> to vector<16x192xbf16>
    %c0_4 = arith.constant 0 : index
    %c0_5 = arith.constant 0 : index
    %5 = vector.load %arg2[%c0_4, %c0_5] : memref<784x128xbf16, #tpu.memory_space<vmem>>, vector<192x48xbf16>
    %cst = arith.constant dense<0.000000e+00> : vector<16x48xf32>
    %6 = tpu.matmul %4, %5, %cst {dimension_numbers = #tpu.dot_dimension_numbers<[1], [0], [0], [1], [0, 0, 1, 1], [], []>} : vector<16x192xbf16>, vector<192x48xbf16>, vector<16x48xf32> -> vector<16x48xf32>
    %c0_6 = arith.constant 0 : index
    %c0_7 = arith.constant 0 : index
    %7 = vector.load %arg3[%c0_6, %c0_7] : memref<376x128xf32, #tpu.memory_space<vmem>>, vector<1x48xf32>
    %8 = vector.broadcast %7 : vector<1x48xf32> to vector<16x48xf32>
    %9 = arith.addf %6, %8 : vector<16x48xf32>
    %cst_8 = arith.constant 0.000000e+00 : f32
    %10 = vector.broadcast %cst_8 : f32 to vector<16x48xf32>
    %11 = arith.maximumf %9, %10 : vector<16x48xf32>
    %12 = arith.truncf %11 : vector<16x48xf32> to vector<16x48xbf16>
    %c192 = arith.constant 192 : index
    %c0_9 = arith.constant 0 : index
    %13 = vector.load %arg2[%c192, %c0_9] : memref<784x128xbf16, #tpu.memory_space<vmem>>, vector<48x32xbf16>
    %cst_10 = arith.constant dense<0.000000e+00> : vector<16x32xf32>
    %14 = tpu.matmul %12, %13, %cst_10 {dimension_numbers = #tpu.dot_dimension_numbers<[1], [0], [0], [1], [0, 0, 1, 1], [], []>} : vector<16x48xbf16>, vector<48x32xbf16>, vector<16x32xf32> -> vector<16x32xf32>
    %c8 = arith.constant 8 : index
    %c0_11 = arith.constant 0 : index
    %15 = vector.load %arg3[%c8, %c0_11] : memref<376x128xf32, #tpu.memory_space<vmem>>, vector<1x32xf32>
    %16 = vector.broadcast %15 : vector<1x32xf32> to vector<16x32xf32>
    %17 = arith.addf %14, %16 : vector<16x32xf32>
    %18 = arith.truncf %17 : vector<16x32xf32> to vector<16x32xbf16>
    %c240 = arith.constant 240 : index
    %c0_12 = arith.constant 0 : index
    %19 = vector.load %arg2[%c240, %c0_12] : memref<784x128xbf16, #tpu.memory_space<vmem>>, vector<32x96xbf16>
    %cst_13 = arith.constant dense<0.000000e+00> : vector<16x96xf32>
    %20 = tpu.matmul %18, %19, %cst_13 {dimension_numbers = #tpu.dot_dimension_numbers<[1], [0], [0], [1], [0, 0, 1, 1], [], []>} : vector<16x32xbf16>, vector<32x96xbf16>, vector<16x96xf32> -> vector<16x96xf32>
    %c16 = arith.constant 16 : index
    %c0_14 = arith.constant 0 : index
    %21 = vector.load %arg3[%c16, %c0_14] : memref<376x128xf32, #tpu.memory_space<vmem>>, vector<1x96xf32>
    %22 = vector.broadcast %21 : vector<1x96xf32> to vector<16x96xf32>
    %23 = arith.addf %20, %22 : vector<16x96xf32>
    %c24 = arith.constant 24 : index
    %c0_15 = arith.constant 0 : index
    %24 = vector.load %arg3[%c24, %c0_15] : memref<376x128xf32, #tpu.memory_space<vmem>>, vector<16x96xf32>
    %25 = arith.addf %23, %24 : vector<16x96xf32>
    %26 = vector.extract_strided_slice %25 {offsets = [0, 0], sizes = [16, 32], strides = [1, 1]} : vector<16x96xf32> to vector<16x32xf32>
    %27 = vector.extract_strided_slice %25 {offsets = [0, 32], sizes = [16, 32], strides = [1, 1]} : vector<16x96xf32> to vector<16x32xf32>
    %28 = vector.extract_strided_slice %25 {offsets = [0, 64], sizes = [16, 32], strides = [1, 1]} : vector<16x96xf32> to vector<16x32xf32>
    %29 = tpu.concatenate %27, %27, %27, %27 in 0 : vector<16x32xf32>, vector<16x32xf32>, vector<16x32xf32>, vector<16x32xf32> -> vector<64x32xf32>
    %30 = arith.mulf %29, %0 : vector<64x32xf32>
    %31 = tpu.concatenate %28, %28, %28, %28 in 0 : vector<16x32xf32>, vector<16x32xf32>, vector<16x32xf32>, vector<16x32xf32> -> vector<64x32xf32>
    %32 = arith.mulf %31, %0 : vector<64x32xf32>
    %cst_16 = arith.constant dense<0.000000e+00> : vector<16x64xf32>
    %33 = tpu.matmul %26, %30, %cst_16 {dimension_numbers = #tpu.dot_dimension_numbers<[1], [1], [0], [0], [0, 0, 1, 0], [], []>} : vector<16x32xf32>, vector<64x32xf32>, vector<16x64xf32> -> vector<16x64xf32>
    %cst_17 = arith.constant dense<0xFF800000> : vector<16xf32>
    %34 = vector.multi_reduction <maximumf>, %33, %cst_17 [1] : vector<16x64xf32> to vector<16xf32>
    %35 = vector.shape_cast %34 : vector<16xf32> to vector<16x1xf32>
    %36 = vector.broadcast %35 : vector<16x1xf32> to vector<16x64xf32>
    %37 = arith.subf %33, %36 : vector<16x64xf32>
    %38 = math.exp %37 : vector<16x64xf32>
    %cst_18 = arith.constant dense<0.000000e+00> : vector<16x32xf32>
    %39 = tpu.matmul %38, %0, %cst_18 {dimension_numbers = #tpu.dot_dimension_numbers<[1], [0], [0], [1], [0, 0, 1, 1], [], []>} : vector<16x64xf32>, vector<64x32xf32>, vector<16x32xf32> -> vector<16x32xf32>
    %cst_19 = arith.constant dense<0.000000e+00> : vector<16x32xf32>
    %40 = tpu.matmul %38, %32, %cst_19 {dimension_numbers = #tpu.dot_dimension_numbers<[1], [0], [0], [1], [0, 0, 1, 1], [], []>} : vector<16x64xf32>, vector<64x32xf32>, vector<16x32xf32> -> vector<16x32xf32>
    %41 = tpu.reciprocal %39 {approx = true} : vector<16x32xf32> -> vector<16x32xf32>
    %42 = arith.mulf %40, %41 : vector<16x32xf32>
    %43 = arith.truncf %42 : vector<16x32xf32> to vector<16x32xbf16>
    %c272 = arith.constant 272 : index
    %c0_20 = arith.constant 0 : index
    %44 = vector.load %arg2[%c272, %c0_20] : memref<784x128xbf16, #tpu.memory_space<vmem>>, vector<32x32xbf16>
    %cst_21 = arith.constant dense<0.000000e+00> : vector<16x32xf32>
    %45 = tpu.matmul %43, %44, %cst_21 {dimension_numbers = #tpu.dot_dimension_numbers<[1], [0], [0], [1], [0, 0, 1, 1], [], []>} : vector<16x32xbf16>, vector<32x32xbf16>, vector<16x32xf32> -> vector<16x32xf32>
    %c40 = arith.constant 40 : index
    %c0_22 = arith.constant 0 : index
    %46 = vector.load %arg3[%c40, %c0_22] : memref<376x128xf32, #tpu.memory_space<vmem>>, vector<1x32xf32>
    %47 = vector.broadcast %46 : vector<1x32xf32> to vector<16x32xf32>
    %48 = arith.addf %45, %47 : vector<16x32xf32>
    %49 = arith.addf %17, %48 : vector<16x32xf32>
    %c48 = arith.constant 48 : index
    %c0_23 = arith.constant 0 : index
    %50 = vector.load %arg3[%c48, %c0_23] : memref<376x128xf32, #tpu.memory_space<vmem>>, vector<1x32xf32>
    %c56 = arith.constant 56 : index
    %c0_24 = arith.constant 0 : index
    %51 = vector.load %arg3[%c56, %c0_24] : memref<376x128xf32, #tpu.memory_space<vmem>>, vector<1x32xf32>
    %cst_25 = arith.constant dense<0.000000e+00> : vector<16xf32>
    %52 = vector.multi_reduction <add>, %49, %cst_25 [1] : vector<16x32xf32> to vector<16xf32>
    %53 = vector.shape_cast %52 : vector<16xf32> to vector<16x1xf32>
    %cst_26 = arith.constant 3.200000e+01 : f32
    %54 = vector.broadcast %cst_26 : f32 to vector<16x1xf32>
    %55 = arith.divf %53, %54 : vector<16x1xf32>
    %56 = arith.mulf %49, %49 : vector<16x32xf32>
    %cst_27 = arith.constant dense<0.000000e+00> : vector<16xf32>
    %57 = vector.multi_reduction <add>, %56, %cst_27 [1] : vector<16x32xf32> to vector<16xf32>
    %58 = vector.shape_cast %57 : vector<16xf32> to vector<16x1xf32>
    %cst_28 = arith.constant 3.200000e+01 : f32
    %59 = vector.broadcast %cst_28 : f32 to vector<16x1xf32>
    %60 = arith.divf %58, %59 : vector<16x1xf32>
    %61 = arith.mulf %55, %55 : vector<16x1xf32>
    %62 = arith.subf %60, %61 : vector<16x1xf32>
    %63 = vector.broadcast %55 : vector<16x1xf32> to vector<16x32xf32>
    %64 = arith.subf %49, %63 : vector<16x32xf32>
    %cst_29 = arith.constant 9.99999974E-6 : f32
    %65 = vector.broadcast %cst_29 : f32 to vector<16x1xf32>
    %66 = arith.addf %62, %65 : vector<16x1xf32>
    %67 = math.rsqrt %66 : vector<16x1xf32>
    %68 = vector.broadcast %67 : vector<16x1xf32> to vector<16x32xf32>
    %69 = arith.mulf %64, %68 : vector<16x32xf32>
    %70 = vector.broadcast %50 : vector<1x32xf32> to vector<16x32xf32>
    %71 = arith.mulf %69, %70 : vector<16x32xf32>
    %72 = vector.broadcast %51 : vector<1x32xf32> to vector<16x32xf32>
    %73 = arith.addf %71, %72 : vector<16x32xf32>
    %74 = arith.truncf %73 : vector<16x32xf32> to vector<16x32xbf16>
    %c304 = arith.constant 304 : index
    %c0_30 = arith.constant 0 : index
    %75 = vector.load %arg2[%c304, %c0_30] : memref<784x128xbf16, #tpu.memory_space<vmem>>, vector<32x64xbf16>
    %cst_31 = arith.constant dense<0.000000e+00> : vector<16x64xf32>
    %76 = tpu.matmul %74, %75, %cst_31 {dimension_numbers = #tpu.dot_dimension_numbers<[1], [0], [0], [1], [0, 0, 1, 1], [], []>} : vector<16x32xbf16>, vector<32x64xbf16>, vector<16x64xf32> -> vector<16x64xf32>
    %c64 = arith.constant 64 : index
    %c0_32 = arith.constant 0 : index
    %77 = vector.load %arg3[%c64, %c0_32] : memref<376x128xf32, #tpu.memory_space<vmem>>, vector<1x64xf32>
    %78 = vector.broadcast %77 : vector<1x64xf32> to vector<16x64xf32>
    %79 = arith.addf %76, %78 : vector<16x64xf32>
    %cst_33 = arith.constant 0.000000e+00 : f32
    %80 = vector.broadcast %cst_33 : f32 to vector<16x64xf32>
    %81 = arith.maximumf %79, %80 : vector<16x64xf32>
    %82 = arith.truncf %81 : vector<16x64xf32> to vector<16x64xbf16>
    %c336 = arith.constant 336 : index
    %c0_34 = arith.constant 0 : index
    %83 = vector.load %arg2[%c336, %c0_34] : memref<784x128xbf16, #tpu.memory_space<vmem>>, vector<64x32xbf16>
    %cst_35 = arith.constant dense<0.000000e+00> : vector<16x32xf32>
    %84 = tpu.matmul %82, %83, %cst_35 {dimension_numbers = #tpu.dot_dimension_numbers<[1], [0], [0], [1], [0, 0, 1, 1], [], []>} : vector<16x64xbf16>, vector<64x32xbf16>, vector<16x32xf32> -> vector<16x32xf32>
    %c72 = arith.constant 72 : index
    %c0_36 = arith.constant 0 : index
    %85 = vector.load %arg3[%c72, %c0_36] : memref<376x128xf32, #tpu.memory_space<vmem>>, vector<1x32xf32>
    %86 = vector.broadcast %85 : vector<1x32xf32> to vector<16x32xf32>
    %87 = arith.addf %84, %86 : vector<16x32xf32>
    %88 = arith.addf %73, %87 : vector<16x32xf32>
    %c80 = arith.constant 80 : index
    %c0_37 = arith.constant 0 : index
    %89 = vector.load %arg3[%c80, %c0_37] : memref<376x128xf32, #tpu.memory_space<vmem>>, vector<1x32xf32>
    %c88 = arith.constant 88 : index
    %c0_38 = arith.constant 0 : index
    %90 = vector.load %arg3[%c88, %c0_38] : memref<376x128xf32, #tpu.memory_space<vmem>>, vector<1x32xf32>
    %cst_39 = arith.constant dense<0.000000e+00> : vector<16xf32>
    %91 = vector.multi_reduction <add>, %88, %cst_39 [1] : vector<16x32xf32> to vector<16xf32>
    %92 = vector.shape_cast %91 : vector<16xf32> to vector<16x1xf32>
    %cst_40 = arith.constant 3.200000e+01 : f32
    %93 = vector.broadcast %cst_40 : f32 to vector<16x1xf32>
    %94 = arith.divf %92, %93 : vector<16x1xf32>
    %95 = arith.mulf %88, %88 : vector<16x32xf32>
    %cst_41 = arith.constant dense<0.000000e+00> : vector<16xf32>
    %96 = vector.multi_reduction <add>, %95, %cst_41 [1] : vector<16x32xf32> to vector<16xf32>
    %97 = vector.shape_cast %96 : vector<16xf32> to vector<16x1xf32>
    %cst_42 = arith.constant 3.200000e+01 : f32
    %98 = vector.broadcast %cst_42 : f32 to vector<16x1xf32>
    %99 = arith.divf %97, %98 : vector<16x1xf32>
    %100 = arith.mulf %94, %94 : vector<16x1xf32>
    %101 = arith.subf %99, %100 : vector<16x1xf32>
    %102 = vector.broadcast %94 : vector<16x1xf32> to vector<16x32xf32>
    %103 = arith.subf %88, %102 : vector<16x32xf32>
    %cst_43 = arith.constant 9.99999974E-6 : f32
    %104 = vector.broadcast %cst_43 : f32 to vector<16x1xf32>
    %105 = arith.addf %101, %104 : vector<16x1xf32>
    %106 = math.rsqrt %105 : vector<16x1xf32>
    %107 = vector.broadcast %106 : vector<16x1xf32> to vector<16x32xf32>
    %108 = arith.mulf %103, %107 : vector<16x32xf32>
    %109 = vector.broadcast %89 : vector<1x32xf32> to vector<16x32xf32>
    %110 = arith.mulf %108, %109 : vector<16x32xf32>
    %111 = vector.broadcast %90 : vector<1x32xf32> to vector<16x32xf32>
    %112 = arith.addf %110, %111 : vector<16x32xf32>
    %cst_44 = arith.constant 0.000000e+00 : f32
    %113 = vector.broadcast %cst_44 : f32 to vector<8x32xf32>
    %114 = arith.truncf %113 : vector<8x32xf32> to vector<8x32xbf16>
    %c400 = arith.constant 400 : index
    %c0_45 = arith.constant 0 : index
    %115 = vector.load %arg2[%c400, %c0_45] : memref<784x128xbf16, #tpu.memory_space<vmem>>, vector<32x96xbf16>
    %cst_46 = arith.constant dense<0.000000e+00> : vector<8x96xf32>
    %116 = tpu.matmul %114, %115, %cst_46 {dimension_numbers = #tpu.dot_dimension_numbers<[1], [0], [0], [1], [0, 0, 1, 1], [], []>} : vector<8x32xbf16>, vector<32x96xbf16>, vector<8x96xf32> -> vector<8x96xf32>
    %c96 = arith.constant 96 : index
    %c0_47 = arith.constant 0 : index
    %117 = vector.load %arg3[%c96, %c0_47] : memref<376x128xf32, #tpu.memory_space<vmem>>, vector<1x96xf32>
    %118 = vector.broadcast %117 : vector<1x96xf32> to vector<8x96xf32>
    %119 = arith.addf %116, %118 : vector<8x96xf32>
    %c104 = arith.constant 104 : index
    %c0_48 = arith.constant 0 : index
    %120 = vector.load %arg3[%c104, %c0_48] : memref<376x128xf32, #tpu.memory_space<vmem>>, vector<8x96xf32>
    %121 = arith.addf %119, %120 : vector<8x96xf32>
    %122 = vector.extract_strided_slice %121 {offsets = [0, 0], sizes = [8, 32], strides = [1, 1]} : vector<8x96xf32> to vector<8x32xf32>
    %123 = vector.extract_strided_slice %121 {offsets = [0, 32], sizes = [8, 32], strides = [1, 1]} : vector<8x96xf32> to vector<8x32xf32>
    %124 = vector.extract_strided_slice %121 {offsets = [0, 64], sizes = [8, 32], strides = [1, 1]} : vector<8x96xf32> to vector<8x32xf32>
    %125 = tpu.concatenate %123, %123, %123, %123 in 0 : vector<8x32xf32>, vector<8x32xf32>, vector<8x32xf32>, vector<8x32xf32> -> vector<32x32xf32>
    %126 = arith.mulf %125, %1 : vector<32x32xf32>
    %127 = tpu.concatenate %124, %124, %124, %124 in 0 : vector<8x32xf32>, vector<8x32xf32>, vector<8x32xf32>, vector<8x32xf32> -> vector<32x32xf32>
    %128 = arith.mulf %127, %1 : vector<32x32xf32>
    %cst_49 = arith.constant dense<0.000000e+00> : vector<8x32xf32>
    %129 = tpu.matmul %122, %126, %cst_49 {dimension_numbers = #tpu.dot_dimension_numbers<[1], [1], [0], [0], [0, 0, 1, 0], [], []>} : vector<8x32xf32>, vector<32x32xf32>, vector<8x32xf32> -> vector<8x32xf32>
    %cst_50 = arith.constant dense<0xFF800000> : vector<8xf32>
    %130 = vector.multi_reduction <maximumf>, %129, %cst_50 [1] : vector<8x32xf32> to vector<8xf32>
    %131 = vector.shape_cast %130 : vector<8xf32> to vector<8x1xf32>
    %132 = vector.broadcast %131 : vector<8x1xf32> to vector<8x32xf32>
    %133 = arith.subf %129, %132 : vector<8x32xf32>
    %134 = math.exp %133 : vector<8x32xf32>
    %cst_51 = arith.constant dense<0.000000e+00> : vector<8x32xf32>
    %135 = tpu.matmul %134, %1, %cst_51 {dimension_numbers = #tpu.dot_dimension_numbers<[1], [0], [0], [1], [0, 0, 1, 1], [], []>} : vector<8x32xf32>, vector<32x32xf32>, vector<8x32xf32> -> vector<8x32xf32>
    %cst_52 = arith.constant dense<0.000000e+00> : vector<8x32xf32>
    %136 = tpu.matmul %134, %128, %cst_52 {dimension_numbers = #tpu.dot_dimension_numbers<[1], [0], [0], [1], [0, 0, 1, 1], [], []>} : vector<8x32xf32>, vector<32x32xf32>, vector<8x32xf32> -> vector<8x32xf32>
    %137 = tpu.reciprocal %135 {approx = true} : vector<8x32xf32> -> vector<8x32xf32>
    %138 = arith.mulf %136, %137 : vector<8x32xf32>
    %139 = arith.truncf %138 : vector<8x32xf32> to vector<8x32xbf16>
    %c432 = arith.constant 432 : index
    %c0_53 = arith.constant 0 : index
    %140 = vector.load %arg2[%c432, %c0_53] : memref<784x128xbf16, #tpu.memory_space<vmem>>, vector<32x32xbf16>
    %cst_54 = arith.constant dense<0.000000e+00> : vector<8x32xf32>
    %141 = tpu.matmul %139, %140, %cst_54 {dimension_numbers = #tpu.dot_dimension_numbers<[1], [0], [0], [1], [0, 0, 1, 1], [], []>} : vector<8x32xbf16>, vector<32x32xbf16>, vector<8x32xf32> -> vector<8x32xf32>
    %c112 = arith.constant 112 : index
    %c0_55 = arith.constant 0 : index
    %142 = vector.load %arg3[%c112, %c0_55] : memref<376x128xf32, #tpu.memory_space<vmem>>, vector<1x32xf32>
    %143 = vector.broadcast %142 : vector<1x32xf32> to vector<8x32xf32>
    %144 = arith.addf %141, %143 : vector<8x32xf32>
    %145 = arith.addf %113, %144 : vector<8x32xf32>
    %c168 = arith.constant 168 : index
    %c0_56 = arith.constant 0 : index
    %146 = vector.load %arg3[%c168, %c0_56] : memref<376x128xf32, #tpu.memory_space<vmem>>, vector<1x32xf32>
    %c176 = arith.constant 176 : index
    %c0_57 = arith.constant 0 : index
    %147 = vector.load %arg3[%c176, %c0_57] : memref<376x128xf32, #tpu.memory_space<vmem>>, vector<1x32xf32>
    %cst_58 = arith.constant dense<0.000000e+00> : vector<8xf32>
    %148 = vector.multi_reduction <add>, %145, %cst_58 [1] : vector<8x32xf32> to vector<8xf32>
    %149 = vector.shape_cast %148 : vector<8xf32> to vector<8x1xf32>
    %cst_59 = arith.constant 3.200000e+01 : f32
    %150 = vector.broadcast %cst_59 : f32 to vector<8x1xf32>
    %151 = arith.divf %149, %150 : vector<8x1xf32>
    %152 = arith.mulf %145, %145 : vector<8x32xf32>
    %cst_60 = arith.constant dense<0.000000e+00> : vector<8xf32>
    %153 = vector.multi_reduction <add>, %152, %cst_60 [1] : vector<8x32xf32> to vector<8xf32>
    %154 = vector.shape_cast %153 : vector<8xf32> to vector<8x1xf32>
    %cst_61 = arith.constant 3.200000e+01 : f32
    %155 = vector.broadcast %cst_61 : f32 to vector<8x1xf32>
    %156 = arith.divf %154, %155 : vector<8x1xf32>
    %157 = arith.mulf %151, %151 : vector<8x1xf32>
    %158 = arith.subf %156, %157 : vector<8x1xf32>
    %159 = vector.broadcast %151 : vector<8x1xf32> to vector<8x32xf32>
    %160 = arith.subf %145, %159 : vector<8x32xf32>
    %cst_62 = arith.constant 9.99999974E-6 : f32
    %161 = vector.broadcast %cst_62 : f32 to vector<8x1xf32>
    %162 = arith.addf %158, %161 : vector<8x1xf32>
    %163 = math.rsqrt %162 : vector<8x1xf32>
    %164 = vector.broadcast %163 : vector<8x1xf32> to vector<8x32xf32>
    %165 = arith.mulf %160, %164 : vector<8x32xf32>
    %166 = vector.broadcast %146 : vector<1x32xf32> to vector<8x32xf32>
    %167 = arith.mulf %165, %166 : vector<8x32xf32>
    %168 = vector.broadcast %147 : vector<1x32xf32> to vector<8x32xf32>
    %169 = arith.addf %167, %168 : vector<8x32xf32>
    %170 = arith.truncf %169 : vector<8x32xf32> to vector<8x32xbf16>
    %c464 = arith.constant 464 : index
    %c0_63 = arith.constant 0 : index
    %171 = vector.load %arg2[%c464, %c0_63] : memref<784x128xbf16, #tpu.memory_space<vmem>>, vector<32x32xbf16>
    %cst_64 = arith.constant dense<0.000000e+00> : vector<8x32xf32>
    %172 = tpu.matmul %170, %171, %cst_64 {dimension_numbers = #tpu.dot_dimension_numbers<[1], [0], [0], [1], [0, 0, 1, 1], [], []>} : vector<8x32xbf16>, vector<32x32xbf16>, vector<8x32xf32> -> vector<8x32xf32>
    %c120 = arith.constant 120 : index
    %c0_65 = arith.constant 0 : index
    %173 = vector.load %arg3[%c120, %c0_65] : memref<376x128xf32, #tpu.memory_space<vmem>>, vector<1x32xf32>
    %174 = vector.broadcast %173 : vector<1x32xf32> to vector<8x32xf32>
    %175 = arith.addf %172, %174 : vector<8x32xf32>
    %c128 = arith.constant 128 : index
    %c0_66 = arith.constant 0 : index
    %176 = vector.load %arg3[%c128, %c0_66] : memref<376x128xf32, #tpu.memory_space<vmem>>, vector<8x32xf32>
    %177 = arith.addf %175, %176 : vector<8x32xf32>
    %178 = arith.truncf %112 : vector<16x32xf32> to vector<16x32xbf16>
    %c496 = arith.constant 496 : index
    %c0_67 = arith.constant 0 : index
    %179 = vector.load %arg2[%c496, %c0_67] : memref<784x128xbf16, #tpu.memory_space<vmem>>, vector<32x64xbf16>
    %cst_68 = arith.constant dense<0.000000e+00> : vector<16x64xf32>
    %180 = tpu.matmul %178, %179, %cst_68 {dimension_numbers = #tpu.dot_dimension_numbers<[1], [0], [0], [1], [0, 0, 1, 1], [], []>} : vector<16x32xbf16>, vector<32x64xbf16>, vector<16x64xf32> -> vector<16x64xf32>
    %c136 = arith.constant 136 : index
    %c0_69 = arith.constant 0 : index
    %181 = vector.load %arg3[%c136, %c0_69] : memref<376x128xf32, #tpu.memory_space<vmem>>, vector<1x64xf32>
    %182 = vector.broadcast %181 : vector<1x64xf32> to vector<16x64xf32>
    %183 = arith.addf %180, %182 : vector<16x64xf32>
    %c144 = arith.constant 144 : index
    %c0_70 = arith.constant 0 : index
    %184 = vector.load %arg3[%c144, %c0_70] : memref<376x128xf32, #tpu.memory_space<vmem>>, vector<16x64xf32>
    %185 = arith.addf %183, %184 : vector<16x64xf32>
    %186 = vector.extract_strided_slice %185 {offsets = [0, 0], sizes = [16, 32], strides = [1, 1]} : vector<16x64xf32> to vector<16x32xf32>
    %187 = vector.extract_strided_slice %185 {offsets = [0, 32], sizes = [16, 32], strides = [1, 1]} : vector<16x64xf32> to vector<16x32xf32>
    %188 = tpu.concatenate %186, %186, %186, %186 in 0 : vector<16x32xf32>, vector<16x32xf32>, vector<16x32xf32>, vector<16x32xf32> -> vector<64x32xf32>
    %189 = arith.mulf %188, %0 : vector<64x32xf32>
    %190 = tpu.concatenate %187, %187, %187, %187 in 0 : vector<16x32xf32>, vector<16x32xf32>, vector<16x32xf32>, vector<16x32xf32> -> vector<64x32xf32>
    %191 = arith.mulf %190, %0 : vector<64x32xf32>
    %cst_71 = arith.constant dense<0.000000e+00> : vector<8x64xf32>
    %192 = tpu.matmul %177, %189, %cst_71 {dimension_numbers = #tpu.dot_dimension_numbers<[1], [1], [0], [0], [0, 0, 1, 0], [], []>} : vector<8x32xf32>, vector<64x32xf32>, vector<8x64xf32> -> vector<8x64xf32>
    %cst_72 = arith.constant dense<0xFF800000> : vector<8xf32>
    %193 = vector.multi_reduction <maximumf>, %192, %cst_72 [1] : vector<8x64xf32> to vector<8xf32>
    %194 = vector.shape_cast %193 : vector<8xf32> to vector<8x1xf32>
    %195 = vector.broadcast %194 : vector<8x1xf32> to vector<8x64xf32>
    %196 = arith.subf %192, %195 : vector<8x64xf32>
    %197 = math.exp %196 : vector<8x64xf32>
    %cst_73 = arith.constant dense<0.000000e+00> : vector<8x32xf32>
    %198 = tpu.matmul %197, %0, %cst_73 {dimension_numbers = #tpu.dot_dimension_numbers<[1], [0], [0], [1], [0, 0, 1, 1], [], []>} : vector<8x64xf32>, vector<64x32xf32>, vector<8x32xf32> -> vector<8x32xf32>
    %cst_74 = arith.constant dense<0.000000e+00> : vector<8x32xf32>
    %199 = tpu.matmul %197, %191, %cst_74 {dimension_numbers = #tpu.dot_dimension_numbers<[1], [0], [0], [1], [0, 0, 1, 1], [], []>} : vector<8x64xf32>, vector<64x32xf32>, vector<8x32xf32> -> vector<8x32xf32>
    %200 = tpu.reciprocal %198 {approx = true} : vector<8x32xf32> -> vector<8x32xf32>
    %201 = arith.mulf %199, %200 : vector<8x32xf32>
    %202 = arith.truncf %201 : vector<8x32xf32> to vector<8x32xbf16>
    %c528 = arith.constant 528 : index
    %c0_75 = arith.constant 0 : index
    %203 = vector.load %arg2[%c528, %c0_75] : memref<784x128xbf16, #tpu.memory_space<vmem>>, vector<32x32xbf16>
    %cst_76 = arith.constant dense<0.000000e+00> : vector<8x32xf32>
    %204 = tpu.matmul %202, %203, %cst_76 {dimension_numbers = #tpu.dot_dimension_numbers<[1], [0], [0], [1], [0, 0, 1, 1], [], []>} : vector<8x32xbf16>, vector<32x32xbf16>, vector<8x32xf32> -> vector<8x32xf32>
    %c160 = arith.constant 160 : index
    %c0_77 = arith.constant 0 : index
    %205 = vector.load %arg3[%c160, %c0_77] : memref<376x128xf32, #tpu.memory_space<vmem>>, vector<1x32xf32>
    %206 = vector.broadcast %205 : vector<1x32xf32> to vector<8x32xf32>
    %207 = arith.addf %204, %206 : vector<8x32xf32>
    %208 = arith.addf %169, %207 : vector<8x32xf32>
    %c184 = arith.constant 184 : index
    %c0_78 = arith.constant 0 : index
    %209 = vector.load %arg3[%c184, %c0_78] : memref<376x128xf32, #tpu.memory_space<vmem>>, vector<1x32xf32>
    %c192_79 = arith.constant 192 : index
    %c0_80 = arith.constant 0 : index
    %210 = vector.load %arg3[%c192_79, %c0_80] : memref<376x128xf32, #tpu.memory_space<vmem>>, vector<1x32xf32>
    %cst_81 = arith.constant dense<0.000000e+00> : vector<8xf32>
    %211 = vector.multi_reduction <add>, %208, %cst_81 [1] : vector<8x32xf32> to vector<8xf32>
    %212 = vector.shape_cast %211 : vector<8xf32> to vector<8x1xf32>
    %cst_82 = arith.constant 3.200000e+01 : f32
    %213 = vector.broadcast %cst_82 : f32 to vector<8x1xf32>
    %214 = arith.divf %212, %213 : vector<8x1xf32>
    %215 = arith.mulf %208, %208 : vector<8x32xf32>
    %cst_83 = arith.constant dense<0.000000e+00> : vector<8xf32>
    %216 = vector.multi_reduction <add>, %215, %cst_83 [1] : vector<8x32xf32> to vector<8xf32>
    %217 = vector.shape_cast %216 : vector<8xf32> to vector<8x1xf32>
    %cst_84 = arith.constant 3.200000e+01 : f32
    %218 = vector.broadcast %cst_84 : f32 to vector<8x1xf32>
    %219 = arith.divf %217, %218 : vector<8x1xf32>
    %220 = arith.mulf %214, %214 : vector<8x1xf32>
    %221 = arith.subf %219, %220 : vector<8x1xf32>
    %222 = vector.broadcast %214 : vector<8x1xf32> to vector<8x32xf32>
    %223 = arith.subf %208, %222 : vector<8x32xf32>
    %cst_85 = arith.constant 9.99999974E-6 : f32
    %224 = vector.broadcast %cst_85 : f32 to vector<8x1xf32>
    %225 = arith.addf %221, %224 : vector<8x1xf32>
    %226 = math.rsqrt %225 : vector<8x1xf32>
    %227 = vector.broadcast %226 : vector<8x1xf32> to vector<8x32xf32>
    %228 = arith.mulf %223, %227 : vector<8x32xf32>
    %229 = vector.broadcast %209 : vector<1x32xf32> to vector<8x32xf32>
    %230 = arith.mulf %228, %229 : vector<8x32xf32>
    %231 = vector.broadcast %210 : vector<1x32xf32> to vector<8x32xf32>
    %232 = arith.addf %230, %231 : vector<8x32xf32>
    %233 = arith.truncf %232 : vector<8x32xf32> to vector<8x32xbf16>
    %c560 = arith.constant 560 : index
    %c0_86 = arith.constant 0 : index
    %234 = vector.load %arg2[%c560, %c0_86] : memref<784x128xbf16, #tpu.memory_space<vmem>>, vector<32x64xbf16>
    %cst_87 = arith.constant dense<0.000000e+00> : vector<8x64xf32>
    %235 = tpu.matmul %233, %234, %cst_87 {dimension_numbers = #tpu.dot_dimension_numbers<[1], [0], [0], [1], [0, 0, 1, 1], [], []>} : vector<8x32xbf16>, vector<32x64xbf16>, vector<8x64xf32> -> vector<8x64xf32>
    %c200 = arith.constant 200 : index
    %c0_88 = arith.constant 0 : index
    %236 = vector.load %arg3[%c200, %c0_88] : memref<376x128xf32, #tpu.memory_space<vmem>>, vector<1x64xf32>
    %237 = vector.broadcast %236 : vector<1x64xf32> to vector<8x64xf32>
    %238 = arith.addf %235, %237 : vector<8x64xf32>
    %cst_89 = arith.constant 0.000000e+00 : f32
    %239 = vector.broadcast %cst_89 : f32 to vector<8x64xf32>
    %240 = arith.maximumf %238, %239 : vector<8x64xf32>
    %241 = arith.truncf %240 : vector<8x64xf32> to vector<8x64xbf16>
    %c592 = arith.constant 592 : index
    %c0_90 = arith.constant 0 : index
    %242 = vector.load %arg2[%c592, %c0_90] : memref<784x128xbf16, #tpu.memory_space<vmem>>, vector<64x32xbf16>
    %cst_91 = arith.constant dense<0.000000e+00> : vector<8x32xf32>
    %243 = tpu.matmul %241, %242, %cst_91 {dimension_numbers = #tpu.dot_dimension_numbers<[1], [0], [0], [1], [0, 0, 1, 1], [], []>} : vector<8x64xbf16>, vector<64x32xbf16>, vector<8x32xf32> -> vector<8x32xf32>
    %c208 = arith.constant 208 : index
    %c0_92 = arith.constant 0 : index
    %244 = vector.load %arg3[%c208, %c0_92] : memref<376x128xf32, #tpu.memory_space<vmem>>, vector<1x32xf32>
    %245 = vector.broadcast %244 : vector<1x32xf32> to vector<8x32xf32>
    %246 = arith.addf %243, %245 : vector<8x32xf32>
    %247 = arith.addf %232, %246 : vector<8x32xf32>
    %c216 = arith.constant 216 : index
    %c0_93 = arith.constant 0 : index
    %248 = vector.load %arg3[%c216, %c0_93] : memref<376x128xf32, #tpu.memory_space<vmem>>, vector<1x32xf32>
    %c224 = arith.constant 224 : index
    %c0_94 = arith.constant 0 : index
    %249 = vector.load %arg3[%c224, %c0_94] : memref<376x128xf32, #tpu.memory_space<vmem>>, vector<1x32xf32>
    %cst_95 = arith.constant dense<0.000000e+00> : vector<8xf32>
    %250 = vector.multi_reduction <add>, %247, %cst_95 [1] : vector<8x32xf32> to vector<8xf32>
    %251 = vector.shape_cast %250 : vector<8xf32> to vector<8x1xf32>
    %cst_96 = arith.constant 3.200000e+01 : f32
    %252 = vector.broadcast %cst_96 : f32 to vector<8x1xf32>
    %253 = arith.divf %251, %252 : vector<8x1xf32>
    %254 = arith.mulf %247, %247 : vector<8x32xf32>
    %cst_97 = arith.constant dense<0.000000e+00> : vector<8xf32>
    %255 = vector.multi_reduction <add>, %254, %cst_97 [1] : vector<8x32xf32> to vector<8xf32>
    %256 = vector.shape_cast %255 : vector<8xf32> to vector<8x1xf32>
    %cst_98 = arith.constant 3.200000e+01 : f32
    %257 = vector.broadcast %cst_98 : f32 to vector<8x1xf32>
    %258 = arith.divf %256, %257 : vector<8x1xf32>
    %259 = arith.mulf %253, %253 : vector<8x1xf32>
    %260 = arith.subf %258, %259 : vector<8x1xf32>
    %261 = vector.broadcast %253 : vector<8x1xf32> to vector<8x32xf32>
    %262 = arith.subf %247, %261 : vector<8x32xf32>
    %cst_99 = arith.constant 9.99999974E-6 : f32
    %263 = vector.broadcast %cst_99 : f32 to vector<8x1xf32>
    %264 = arith.addf %260, %263 : vector<8x1xf32>
    %265 = math.rsqrt %264 : vector<8x1xf32>
    %266 = vector.broadcast %265 : vector<8x1xf32> to vector<8x32xf32>
    %267 = arith.mulf %262, %266 : vector<8x32xf32>
    %268 = vector.broadcast %248 : vector<1x32xf32> to vector<8x32xf32>
    %269 = arith.mulf %267, %268 : vector<8x32xf32>
    %270 = vector.broadcast %249 : vector<1x32xf32> to vector<8x32xf32>
    %271 = arith.addf %269, %270 : vector<8x32xf32>
    %c232 = arith.constant 232 : index
    %c0_100 = arith.constant 0 : index
    %272 = vector.load %arg3[%c232, %c0_100] : memref<376x128xf32, #tpu.memory_space<vmem>>, vector<1x32xf32>
    %c240_101 = arith.constant 240 : index
    %c0_102 = arith.constant 0 : index
    %273 = vector.load %arg3[%c240_101, %c0_102] : memref<376x128xf32, #tpu.memory_space<vmem>>, vector<1x32xf32>
    %cst_103 = arith.constant dense<0.000000e+00> : vector<8xf32>
    %274 = vector.multi_reduction <add>, %271, %cst_103 [1] : vector<8x32xf32> to vector<8xf32>
    %275 = vector.shape_cast %274 : vector<8xf32> to vector<8x1xf32>
    %cst_104 = arith.constant 3.200000e+01 : f32
    %276 = vector.broadcast %cst_104 : f32 to vector<8x1xf32>
    %277 = arith.divf %275, %276 : vector<8x1xf32>
    %278 = arith.mulf %271, %271 : vector<8x32xf32>
    %cst_105 = arith.constant dense<0.000000e+00> : vector<8xf32>
    %279 = vector.multi_reduction <add>, %278, %cst_105 [1] : vector<8x32xf32> to vector<8xf32>
    %280 = vector.shape_cast %279 : vector<8xf32> to vector<8x1xf32>
    %cst_106 = arith.constant 3.200000e+01 : f32
    %281 = vector.broadcast %cst_106 : f32 to vector<8x1xf32>
    %282 = arith.divf %280, %281 : vector<8x1xf32>
    %283 = arith.mulf %277, %277 : vector<8x1xf32>
    %284 = arith.subf %282, %283 : vector<8x1xf32>
    %285 = vector.broadcast %277 : vector<8x1xf32> to vector<8x32xf32>
    %286 = arith.subf %271, %285 : vector<8x32xf32>
    %cst_107 = arith.constant 9.99999974E-6 : f32
    %287 = vector.broadcast %cst_107 : f32 to vector<8x1xf32>
    %288 = arith.addf %284, %287 : vector<8x1xf32>
    %289 = math.rsqrt %288 : vector<8x1xf32>
    %290 = vector.broadcast %289 : vector<8x1xf32> to vector<8x32xf32>
    %291 = arith.mulf %286, %290 : vector<8x32xf32>
    %292 = vector.broadcast %272 : vector<1x32xf32> to vector<8x32xf32>
    %293 = arith.mulf %291, %292 : vector<8x32xf32>
    %294 = vector.broadcast %273 : vector<1x32xf32> to vector<8x32xf32>
    %295 = arith.addf %293, %294 : vector<8x32xf32>
    %296 = arith.truncf %295 : vector<8x32xf32> to vector<8x32xbf16>
    %c656 = arith.constant 656 : index
    %c0_108 = arith.constant 0 : index
    %297 = vector.load %arg2[%c656, %c0_108] : memref<784x128xbf16, #tpu.memory_space<vmem>>, vector<32x128xbf16>
    %cst_109 = arith.constant dense<0.000000e+00> : vector<8x128xf32>
    %298 = tpu.matmul %296, %297, %cst_109 {dimension_numbers = #tpu.dot_dimension_numbers<[1], [0], [0], [1], [0, 0, 1, 1], [], []>} : vector<8x32xbf16>, vector<32x128xbf16>, vector<8x128xf32> -> vector<8x128xf32>
    %c248 = arith.constant 248 : index
    %c0_110 = arith.constant 0 : index
    %299 = vector.load %arg3[%c248, %c0_110] : memref<376x128xf32, #tpu.memory_space<vmem>>, vector<1x128xf32>
    %300 = vector.broadcast %299 : vector<1x128xf32> to vector<8x128xf32>
    %301 = arith.addf %298, %300 : vector<8x128xf32>
    %c0_111 = arith.constant 0 : index
    %c0_112 = arith.constant 0 : index
    %c0_113 = arith.constant 0 : index
    %302 = vector.load %arg4[%c0_111, %c0_112, %c0_113] : memref<1x8x128xf32, #tpu.memory_space<vmem>>, vector<1x8x128xf32>
    %303 = vector.shape_cast %302 : vector<1x8x128xf32> to vector<8x128xf32>
    %304 = vector.shape_cast %301 : vector<8x128xf32> to vector<1x8x128xf32>
    tpu.vector_store %arg4[%c0_111, %c0_112, %c0_113], %304 {strides = array<i32>} : memref<1x8x128xf32, #tpu.memory_space<vmem>>, vector<1x8x128xf32>,
    %305 = arith.truncf %295 : vector<8x32xf32> to vector<8x32xbf16>
    %c688 = arith.constant 688 : index
    %c0_114 = arith.constant 0 : index
    %306 = vector.load %arg2[%c688, %c0_114] : memref<784x128xbf16, #tpu.memory_space<vmem>>, vector<32x32xbf16>
    %cst_115 = arith.constant dense<0.000000e+00> : vector<8x32xf32>
    %307 = tpu.matmul %305, %306, %cst_115 {dimension_numbers = #tpu.dot_dimension_numbers<[1], [0], [0], [1], [0, 0, 1, 1], [], []>} : vector<8x32xbf16>, vector<32x32xbf16>, vector<8x32xf32> -> vector<8x32xf32>
    %c256 = arith.constant 256 : index
    %c0_116 = arith.constant 0 : index
    %308 = vector.load %arg3[%c256, %c0_116] : memref<376x128xf32, #tpu.memory_space<vmem>>, vector<1x32xf32>
    %309 = vector.broadcast %308 : vector<1x32xf32> to vector<8x32xf32>
    %310 = arith.addf %307, %309 : vector<8x32xf32>
    %cst_117 = arith.constant 0.000000e+00 : f32
    %311 = vector.broadcast %cst_117 : f32 to vector<8x32xf32>
    %312 = arith.maximumf %310, %311 : vector<8x32xf32>
    %313 = arith.truncf %312 : vector<8x32xf32> to vector<8x32xbf16>
    %c720 = arith.constant 720 : index
    %c0_118 = arith.constant 0 : index
    %314 = vector.load %arg2[%c720, %c0_118] : memref<784x128xbf16, #tpu.memory_space<vmem>>, vector<32x32xbf16>
    %cst_119 = arith.constant dense<0.000000e+00> : vector<8x32xf32>
    %315 = tpu.matmul %313, %314, %cst_119 {dimension_numbers = #tpu.dot_dimension_numbers<[1], [0], [0], [1], [0, 0, 1, 1], [], []>} : vector<8x32xbf16>, vector<32x32xbf16>, vector<8x32xf32> -> vector<8x32xf32>
    %c264 = arith.constant 264 : index
    %c0_120 = arith.constant 0 : index
    %316 = vector.load %arg3[%c264, %c0_120] : memref<376x128xf32, #tpu.memory_space<vmem>>, vector<1x32xf32>
    %317 = vector.broadcast %316 : vector<1x32xf32> to vector<8x32xf32>
    %318 = arith.addf %315, %317 : vector<8x32xf32>
    %cst_121 = arith.constant 0.000000e+00 : f32
    %319 = vector.broadcast %cst_121 : f32 to vector<8x32xf32>
    %320 = arith.maximumf %318, %319 : vector<8x32xf32>
    %321 = arith.truncf %320 : vector<8x32xf32> to vector<8x32xbf16>
    %c752 = arith.constant 752 : index
    %c0_122 = arith.constant 0 : index
    %322 = vector.load %arg2[%c752, %c0_122] : memref<784x128xbf16, #tpu.memory_space<vmem>>, vector<32x128xbf16>
    %cst_123 = arith.constant dense<0.000000e+00> : vector<8x128xf32>
    %323 = tpu.matmul %321, %322, %cst_123 {dimension_numbers = #tpu.dot_dimension_numbers<[1], [0], [0], [1], [0, 0, 1, 1], [], []>} : vector<8x32xbf16>, vector<32x128xbf16>, vector<8x128xf32> -> vector<8x128xf32>
    %c272_124 = arith.constant 272 : index
    %c0_125 = arith.constant 0 : index
    %324 = vector.load %arg3[%c272_124, %c0_125] : memref<376x128xf32, #tpu.memory_space<vmem>>, vector<1x128xf32>
    %325 = vector.broadcast %324 : vector<1x128xf32> to vector<8x128xf32>
    %326 = arith.addf %323, %325 : vector<8x128xf32>
    %327 = arith.negf %326 : vector<8x128xf32>
    %328 = math.exp %327 : vector<8x128xf32>
    %cst_126 = arith.constant 1.000000e+00 : f32
    %329 = vector.broadcast %cst_126 : f32 to vector<8x128xf32>
    %330 = arith.addf %329, %328 : vector<8x128xf32>
    %331 = arith.divf %329, %330 : vector<8x128xf32>
    %c0_127 = arith.constant 0 : index
    %c0_128 = arith.constant 0 : index
    %c0_129 = arith.constant 0 : index
    %332 = vector.load %arg5[%c0_127, %c0_128, %c0_129] : memref<1x8x128xf32, #tpu.memory_space<vmem>>, vector<1x8x128xf32>
    %333 = vector.shape_cast %332 : vector<1x8x128xf32> to vector<8x128xf32>
    %334 = vector.shape_cast %331 : vector<8x128xf32> to vector<1x8x128xf32>
    tpu.vector_store %arg5[%c0_127, %c0_128, %c0_129], %334 {strides = array<i32>} : memref<1x8x128xf32, #tpu.memory_space<vmem>>, vector<1x8x128xf32>,
    return
  }
  func.func @transform_0(%arg0: i32) -> (i32, i32, i32) {
    %c0_i32 = arith.constant 0 : i32
    %c0_i32_0 = arith.constant 0 : i32
    %c0_i32_1 = arith.constant 0 : i32
    return %arg0, %c0_i32, %c0_i32_0 : i32, i32, i32
  }
  func.func @transform_1(%arg0: i32) -> (i32, i32) {
    %c0_i32 = arith.constant 0 : i32
    %c0_i32_0 = arith.constant 0 : i32
    %c0_i32_1 = arith.constant 0 : i32
    return %c0_i32, %c0_i32_0 : i32, i32
  }
  func.func @transform_2(%arg0: i32) -> (i32, i32) {
    %c0_i32 = arith.constant 0 : i32
    %c0_i32_0 = arith.constant 0 : i32
    %c0_i32_1 = arith.constant 0 : i32
    return %c0_i32, %c0_i32_0 : i32, i32
  }
  func.func @transform_3(%arg0: i32) -> (i32, i32, i32) {
    %c0_i32 = arith.constant 0 : i32
    %c0_i32_0 = arith.constant 0 : i32
    %c0_i32_1 = arith.constant 0 : i32
    return %arg0, %c0_i32, %c0_i32_0 : i32, i32, i32
  }
  func.func @transform_4(%arg0: i32) -> (i32, i32, i32) {
    %c0_i32 = arith.constant 0 : i32
    %c0_i32_0 = arith.constant 0 : i32
    %c0_i32_1 = arith.constant 0 : i32
    return %arg0, %c0_i32, %c0_i32_0 : i32, i32, i32
  }
}

</mosaic_0001>

<llo_original>
// kernel: fwd.1
$region0: #{fwd.1}
  #allocation0 [shape = 'u32[]', space=smem, size = 0x4, offset = 0x4, fixed_abs, tag = 'smem constant byte address 0x4 - core index']
  #allocation1 [shape = 'u32[144,128]{1,0:T(1,128)}', space=vmem, size = 0x12000, scoped, tag = 'internal scratch']
  %s0 = inlined_call_operand.vmem [shape: f32[2,16,192], index: 0, kind: input, shape index: {}]
  %s1 = inlined_call_operand.vmem [shape: bf16[784,128], index: 1, kind: input, shape index: {}]
  %s2 = inlined_call_operand.vmem [shape: f32[376,128], index: 2, kind: input, shape index: {}]
  %s3 = inlined_call_operand.hbm [shape: f32[2,8,128], index: 3, kind: output, shape index: {0}]
  %s4 = inlined_call_operand.vmem [shape: f32[2,8,128], index: 4, kind: output, shape index: {1}]
  %5 = xla_tuple %s3, %s4
  %s6 = sld [smem:[#allocation0]]
  $region53: #{fwd.1} parent=0
    _
  %s8 = ssub.s32 1, %s6
  %s9 = scalar_select 0, %s8, %s6
  $region1: #{fwd.1} parent=0
    #allocation2 [shape = 'u8[8192]{0}', space=vmem, size = 0x2000, scoped, tag = 'output window, operand 0']
    #allocation3 [shape = 's32[2]{0}', space=sflag, size = 0x8, scoped, tag = 'scoped memory for fwd.1']
    %10 = vsyncpa [#allocation3], 0
    %s11 = scalar_lea.sflag [#allocation3], 1
    %12 = vsyncpa %s11, 0
    loop: start=0, step=1, limit=4
    $region2: #{fwd.1} parent=1 // loop_pre_header
      _
    $region3: #{fwd.1} parent=1 // loop_header
      %s14 = sphi 0, %s18
      %p15 = scmp.ge.s32.totalorder %s14, 4
      %s24 = sphi 0, %s26
      %s27 = sphi 0, %s24
      %s28 = sphi 0, %s27
      %s44 = sphi 0, %s28
      %s48 = sphi 0, %s48
      %s50 = sphi 0, %s48
      %s51 = sphi 0, %s50
      %s65 = sphi 0, %s51
      %s69 = sphi 0, %s69
      %s71 = sphi 0, %s69
      %s72 = sphi 0, %s71
      %s86 = sphi 0, %s72
      %s92 = sphi 0, %s94
      %s95 = sphi 0, %s92
      %s96 = sphi 0, %s95
      %s112 = sphi 0, %s96
      %s118 = sphi 0, %s120
      %s121 = sphi 0, %s118
      %s122 = sphi 0, %s121
      %s138 = sphi 0, %s122
    $region4: #{fwd.1} parent=1 // loop_header_branch
      %17 = sbr.rel (%p15) target = $region8
    $region5: #{fwd.1} parent=1 // loop_body
      %s19 = ssub.s32 %s14, 1
      %s20 = ssub.s32 %s14, 2
      %s21 = sadd.s32 %s14, 1
      %s22 = ssub.s32 %s14, %s21
      %p23 = scmp.eq.s32.totalorder %s22, 0
      %s25 = sadd.s32 %s24, 1
      %s26 = scalar_select %p23, %s24, %s25
      %p29 = pneg %p23
      %p30 = scmp.eq.s32.totalorder %s14, 1
      %p31 = por %p29, %p30
      %p32 = scmp.ne.s32.totalorder %s24, %s27
      %p33 = scmp.eq.s32.totalorder %s14, 0
      %p34 = por %p32, %p33
      %p35 = scmp.ne.s32.totalorder %s24, %s27
      %p36 = scmp.eq.s32.totalorder %s19, 1
      %p37 = por %p35, %p36
      %p38 = scmp.ne.s32.totalorder %s27, %s28
      %p39 = scmp.eq.s32.totalorder %s19, 0
      %p40 = por %p38, %p39
      %p41 = scmp.ne.s32.totalorder %s27, %s28
      %p42 = scmp.eq.s32.totalorder %s20, 1
      %p43 = por %p41, %p42
      %p45 = scmp.ne.s32.totalorder %s28, %s44
      %p46 = scmp.eq.s32.totalorder %s20, 0
      %p47 = por %p45, %p46
      %s49 = sadd.s32 %s48, 1
      %p52 = scmp.eq.s32.totalorder %s14, 1
      %p53 = scmp.ne.s32.totalorder %s48, %s50
      %p54 = scmp.eq.s32.totalorder %s14, 0
      %p55 = por %p53, %p54
      %p56 = scmp.ne.s32.totalorder %s48, %s50
      %p57 = scmp.eq.s32.totalorder %s19, 1
      %p58 = por %p56, %p57
      %p59 = scmp.ne.s32.totalorder %s50, %s51
      %p60 = scmp.eq.s32.totalorder %s19, 0
      %p61 = por %p59, %p60
      %p62 = scmp.ne.s32.totalorder %s50, %s51
      %p63 = scmp.eq.s32.totalorder %s20, 1
      %p64 = por %p62, %p63
      %p66 = scmp.ne.s32.totalorder %s51, %s65
      %p67 = scmp.eq.s32.totalorder %s20, 0
      %p68 = por %p66, %p67
      %s70 = sadd.s32 %s69, 1
      %p73 = scmp.eq.s32.totalorder %s14, 1
      %p74 = scmp.ne.s32.totalorder %s69, %s71
      %p75 = scmp.eq.s32.totalorder %s14, 0
      %p76 = por %p74, %p75
      %p77 = scmp.ne.s32.totalorder %s69, %s71
      %p78 = scmp.eq.s32.totalorder %s19, 1
      %p79 = por %p77, %p78
      %p80 = scmp.ne.s32.totalorder %s71, %s72
      %p81 = scmp.eq.s32.totalorder %s19, 0
      %p82 = por %p80, %p81
      %p83 = scmp.ne.s32.totalorder %s71, %s72
      %p84 = scmp.eq.s32.totalorder %s20, 1
      %p85 = por %p83, %p84
      %p87 = scmp.ne.s32.totalorder %s72, %s86
      %p88 = scmp.eq.s32.totalorder %s20, 0
      %p89 = por %p87, %p88
      %s90 = ssub.s32 %s14, %s21
      %p91 = scmp.eq.s32.totalorder %s90, 0
      %s93 = sadd.s32 %s92, 1
      %s94 = scalar_select %p91, %s92, %s93
      %p97 = pneg %p91
      %p98 = scmp.eq.s32.totalorder %s14, 1
      %p99 = por %p97, %p98
      %p100 = scmp.ne.s32.totalorder %s92, %s95
      %p101 = scmp.eq.s32.totalorder %s14, 0
      %p102 = por %p100, %p101
      %p103 = scmp.ne.s32.totalorder %s92, %s95
      %p104 = scmp.eq.s32.totalorder %s19, 1
      %p105 = por %p103, %p104
      %p106 = scmp.ne.s32.totalorder %s95, %s96
      %p107 = scmp.eq.s32.totalorder %s19, 0
      %p108 = por %p106, %p107
      %p109 = scmp.ne.s32.totalorder %s95, %s96
      %p110 = scmp.eq.s32.totalorder %s20, 1
      %p111 = por %p109, %p110
      %p113 = scmp.ne.s32.totalorder %s96, %s112
      %p114 = scmp.eq.s32.totalorder %s20, 0
      %p115 = por %p113, %p114
      %s116 = ssub.s32 %s14, %s21
      %p117 = scmp.eq.s32.totalorder %s116, 0
      %s119 = sadd.s32 %s118, 1
      %s120 = scalar_select %p117, %s118, %s119
      %p123 = pneg %p117
      %p124 = scmp.eq.s32.totalorder %s14, 1
      %p125 = por %p123, %p124
      %p126 = scmp.ne.s32.totalorder %s118, %s121
      %p127 = scmp.eq.s32.totalorder %s14, 0
      %p128 = por %p126, %p127
      %p129 = scmp.ne.s32.totalorder %s118, %s121
      %p130 = scmp.eq.s32.totalorder %s19, 1
      %p131 = por %p129, %p130
      %p132 = scmp.ne.s32.totalorder %s121, %s122
      %p133 = scmp.eq.s32.totalorder %s19, 0
      %p134 = por %p132, %p133
      %p135 = scmp.ne.s32.totalorder %s121, %s122
      %p136 = scmp.eq.s32.totalorder %s20, 1
      %p137 = por %p135, %p136
      %p139 = scmp.ne.s32.totalorder %s122, %s138
      %p140 = scmp.eq.s32.totalorder %s20, 0
      %p141 = por %p139, %p140
      %p142 = scmp.le.s32.totalorder 1, %s14
      %p143 = scmp.lt.s32.totalorder %s14, 3
      %p144 = pnand %p142, %p143
      %p145 = pneg %p144
      // Predicated region
      $region9: #{fwd.1} parent=5 // pred_check
        _
      $region10: #{fwd.1} parent=5 // pred_check_branch
        %147 = sbr.rel (%p144) target = $region12
      $region11: #{fwd.1} parent=5 // pred_region
        %s148 = ssub.s32 %s14, 1
        // Predicated region
        $region13: #{fwd.1} parent=11 // pred_check
          %p149 = pneg %p61
        $region14: #{fwd.1} parent=11 // pred_check_branch
          %151 = sbr.rel (%p149) target = $region16
        $region15: #{fwd.1} parent=11 // pred_region
          _
        $region16: #{fwd.1} parent=11 // pred_fallthru
          _
        // Predicated region
        $region17: #{fwd.1} parent=11 // pred_check
          %p152 = pneg %p82
        $region18: #{fwd.1} parent=11 // pred_check_branch
          %154 = sbr.rel (%p152) target = $region20
        $region19: #{fwd.1} parent=11 // pred_region
          _
        $region20: #{fwd.1} parent=11 // pred_fallthru
          _
      $region12: #{fwd.1} parent=5 // pred_fallthru
        _
      %p155 = scmp.lt.s32.totalorder %s14, 2
      // Predicated region
      $region21: #{fwd.1} parent=5 // pred_check
        %p156 = pneg %p155
      $region22: #{fwd.1} parent=5 // pred_check_branch
        %158 = sbr.rel (%p156) target = $region24
      $region23: #{fwd.1} parent=5 // pred_region
        // Predicated region
        $region25: #{fwd.1} parent=23 // pred_check
          %p159 = pneg %p34
        $region26: #{fwd.1} parent=23 // pred_check_branch
          %161 = sbr.rel (%p159) target = $region28
        $region27: #{fwd.1} parent=23 // pred_region
          %p162 = scmp.lt.s32.totalorder %s14, 1
          %s163 = scalar_select %p162, %s14, 1
          %s164 = smul.addr %s163, 4
          %s165 = smul.addr %s164, 8
          %s166 = scalar_lea.vmem %s0, %s165
        $region28: #{fwd.1} parent=23 // pred_fallthru
          _
      $region24: #{fwd.1} parent=5 // pred_fallthru
        _
      %p167 = scmp.le.s32.totalorder 1, %s14
      %p168 = scmp.lt.s32.totalorder %s14, 3
      %p169 = pnand %p167, %p168
      %p170 = pneg %p169
      // Predicated region
      $region29: #{fwd.1} parent=5 // pred_check
        _
      $region30: #{fwd.1} parent=5 // pred_check_branch
        %172 = sbr.rel (%p169) target = $region32
      $region31: #{fwd.1} parent=5 // pred_region
        %s173 = ssub.s32 %s14, 1
        %p174 = scmp.lt.s32.totalorder %s19, 1
        %s175 = scalar_select %p174, %s19, 1
        %s176 = smul.addr %s175, 4
        %s177 = smul.addr %s176, 8
        %s178 = scalar_lea.vmem %s0, %s177
        %p179 = pneg %p40
        %p180 = pneg %p37
        %p181 = pneg %p61
        %p182 = pneg %p58
        %p183 = pneg %p82
        %p184 = pneg %p79
        %p185 = pneg %p108
        %p186 = pneg %p105
        %s187 = sand.u32 %s95, 1
        %s188 = scalar_lea.sflag [#allocation3], %s187
        %s189 = sand.u32 %s95, 1
        %s190 = smul.addr %s189, 8
        %s191 = scalar_lea.vmem [#allocation2], %s190
        %p192 = pneg %p134
        %p193 = pneg %p131
        %p194 = scmp.lt.s32.totalorder %s19, 1
        %s195 = scalar_select %p194, %s19, 1
        %s196 = smul.addr %s195, 8
        %s197 = scalar_lea.vmem %s4, %s196
        %p198 = scmp.lt.s32.totalorder %s19, 1
        %s199 = scalar_select %p198, %s19, 1
        %s200 = smul.addr %s199, 4
        %s201 = smul.addr %s200, 8
        %s202 = scalar_lea.vmem %s0, %s201
        %p203 = scmp.lt.s32.totalorder %s19, 1
        %s204 = scalar_select %p203, %s19, 1
        %s205 = smul.addr %s204, 8
        %s206 = scalar_lea.vmem %s4, %s205
        %v208 = vld [vmem:[%s2 + $0x118] sm:$0xff]
        %v209 = vld [vmem:[%s2 + $0x120] sm:$0xff]
        %v210 = vld [vmem:[%s2 + $0x128] sm:$0xff]
        %v211 = vld [vmem:[%s2 + $0x130] sm:$0xff]
        %v212 = vld [vmem:[%s2 + $0x138] sm:$0xff]
        %v213 = vld [vmem:[%s2 + $0x140] sm:$0xff]
        %v214 = vld [vmem:[%s2 + $0x148] sm:$0xff]
        %v215 = vld [vmem:[%s2 + $0x150] sm:$0xff]
        %v216 = vld [vmem:[%s2 + $0x158] sm:$0xff]
        %v217 = vld [vmem:[%s2 + $0x160] sm:$0xff]
        %v218 = vld [vmem:[%s2 + $0x168] sm:$0xff]
        %v219 = vld [vmem:[%s2 + $0x170] sm:$0xff]
        %v220 = vld [vmem:[%s202] sm:$0xff]
        %v221 = vld [vmem:[%s202 + $0x8] sm:$0xff]
        %v222 = vld [vmem:[%s202 + $0x10] sm:$0xff]
        %v223 = vld [vmem:[%s202 + $0x18] sm:$0xff]
        %v224 = vpack.c.bf16 %v222, %v220
        %v225 = vpack.c.bf16 %v223, %v221
        %v226 = vld [vmem:[%s1] sm:$0xf]
        %v227 = vld [vmem:[%s1 + $0x4] sm:$0xf]
        %v228 = vld [vmem:[%s1 + $0x8] sm:$0xf]
        %v229 = vld [vmem:[%s1 + $0xc] sm:$0xf]
        %v230 = vld [vmem:[%s1 + $0x10] sm:$0xf]
        %v231 = vld [vmem:[%s1 + $0x14] sm:$0xf]
        %v232 = vld [vmem:[%s1 + $0x18] sm:$0xf]
        %v233 = vld [vmem:[%s1 + $0x1c] sm:$0xf]
        %v234 = vld [vmem:[%s1 + $0x20] sm:$0xf]
        %v235 = vld [vmem:[%s1 + $0x24] sm:$0xf]
        %v236 = vld [vmem:[%s1 + $0x28] sm:$0xf]
        %v237 = vld [vmem:[%s1 + $0x2c] sm:$0xf]
        %v238 = vld [vmem:[%s1 + $0x30] sm:$0xf]
        %v239 = vld [vmem:[%s1 + $0x34] sm:$0xf]
        %v240 = vld [vmem:[%s1 + $0x38] sm:$0xf]
        %v241 = vld [vmem:[%s1 + $0x3c] sm:$0xf]
        %v242 = vld [vmem:[%s1 + $0x40] sm:$0xf]
        %v243 = vld [vmem:[%s1 + $0x44] sm:$0xf]
        %v244 = vld [vmem:[%s1 + $0x48] sm:$0xf]
        %v245 = vld [vmem:[%s1 + $0x4c] sm:$0xf]
        %v246 = vld [vmem:[%s1 + $0x50] sm:$0xf]
        %v247 = vld [vmem:[%s1 + $0x54] sm:$0xf]
        %v248 = vld [vmem:[%s1 + $0x58] sm:$0xf]
        %v249 = vld [vmem:[%s1 + $0x5c] sm:$0xf]
        %v250 = vld [vmem:[%s2] sm:$0x1]
        %v251 = vlaneseq
        %v252 = vshrl.u32 %v251, 7
        %v253 = vsub.s32 0, %v252
        %v254 = vrot.slane %v250, %v253
        %v279 = vunpack.c.l.b16 %v226
        %v280 = vunpack.c.l.b16 %v227
        %v281 = vunpack.c.l.b16 %v228
        %v282 = vunpack.c.l.b16 %v229
        %v283 = vunpack.c.l.b16 %v230
        %v284 = vunpack.c.l.b16 %v231
        %v285 = vunpack.c.l.b16 %v232
        %v286 = vunpack.c.l.b16 %v233
        %v287 = vunpack.c.l.b16 %v234
        %v288 = vunpack.c.l.b16 %v235
        %v289 = vunpack.c.l.b16 %v236
        %v290 = vunpack.c.l.b16 %v237
        %v291 = vunpack.c.l.b16 %v238
        %v292 = vunpack.c.l.b16 %v239
        %v293 = vunpack.c.l.b16 %v240
        %v294 = vunpack.c.l.b16 %v241
        %v295 = vunpack.c.l.b16 %v242
        %v296 = vunpack.c.l.b16 %v243
        %v297 = vunpack.c.l.b16 %v244
        %v298 = vunpack.c.l.b16 %v245
        %v299 = vunpack.c.l.b16 %v246
        %v300 = vunpack.c.l.b16 %v247
        %v301 = vunpack.c.l.b16 %v248
        %v302 = vunpack.c.l.b16 %v249
        %v303 = vpack.c.b16 %v280, %v279
        %v304 = vpack.c.b16 %v282, %v281
        %v305 = vpack.c.b16 %v284, %v283
        %v306 = vpack.c.b16 %v286, %v285
        %v307 = vpack.c.b16 %v288, %v287
        %v308 = vpack.c.b16 %v290, %v289
        %v309 = vpack.c.b16 %v292, %v291
        %v310 = vpack.c.b16 %v294, %v293
        %v311 = vpack.c.b16 %v296, %v295
        %v312 = vpack.c.b16 %v298, %v297
        %v313 = vpack.c.b16 %v300, %v299
        %v314 = vpack.c.b16 %v302, %v301
        %vm327 = vcmask 523264
        %v329 = vsel %vm327, %v225, 0
        %331 = vmatprep.subr.bf16.mxu0 0
        %332 = vmatpush1.bf16.msra.mxu0 %v303
        %333 = vmatprep.subr.bf16.mxu0 0
        %334 = vmatpush1.bf16.msra.mxu0 %v304
        %335 = vmatprep.subr.bf16.mxu0 0
        %336 = vmatpush1.bf16.msra.mxu0 %v305
        %337 = vmatprep.subr.bf16.mxu0 0
        %338 = vmatpush1.bf16.msra.mxu0 %v306
        %339 = vmatprep.subr.bf16.mxu0 0
        %340 = vmatpush1.bf16.msra.mxu0 %v307
        %341 = vmatprep.subr.bf16.mxu0 0
        %342 = vmatpush1.bf16.msra.mxu0 %v308
        %343 = vmatprep.subr.bf16.mxu0 0
        %344 = vmatpush1.bf16.msra.mxu0 %v309
        %345 = vmatprep.subr.bf16.mxu0 0
        %346 = vmatpush1.bf16.msra.mxu0 %v310
        %347 = vmatprep.subr.bf16.mxu0 0
        %348 = vmatpush1.bf16.msra.mxu0 %v311
        %349 = vmatprep.subr.bf16.mxu0 0
        %350 = vmatpush1.bf16.msra.mxu0 %v312
        %351 = vmatprep.subr.bf16.mxu0 0
        %352 = vmatpush1.bf16.msra.mxu0 %v313
        %353 = vmatprep.subr.bf16.mxu0 0
        %354 = vmatpush1.bf16.msra.mxu0 %v314
        %355 = vmatprep.subr.bf16.mxu0 0
        %356 = vmatpush1.bf16.msra.mxu0 0
        %357 = vmatprep.subr.bf16.mxu0 0
        %358 = vmatpush1.bf16.msra.mxu0 0
        %359 = vmatprep.subr.bf16.mxu0 0
        %360 = vmatpush1.bf16.msra.mxu0 0
        %361 = vmatprep.subr.bf16.mxu0 0
        %362 = vmatpush1.bf16.msra.mxu0 0
        %363 = vmatprep.mubr.bf16.mxu0 %v329
        %364 = vmatmul.mubr.bf16.gmra.mrb[0].mxu0 %v224
        %v365 = vpop.f32.mrb[0].mxu0
        %v366 = vadd.f32 %v254, %v365
        %v367 = vpop.f32.mrb[0].mxu0
        %v368 = vpop.f32.mrb[0].mxu0
        %v369 = vadd.f32 %v254, %v368
        %v370 = vpop.f32.mrb[0].mxu0
        %371 = vdwg.mxu0
        %v372 = vmax.f32 %v366, 0.0
        %v373 = vmax.f32 %v369, 0.0
        %v374 = vpack.c.bf16 %v373, %v372
        %v375 = vld [vmem:[%s1 + $0x60] sm:$0xf]
        %v376 = vld [vmem:[%s1 + $0x64] sm:$0xf]
        %v377 = vld [vmem:[%s1 + $0x68] sm:$0xf]
        %v378 = vld [vmem:[%s1 + $0x6c] sm:$0xf]
        %v379 = vld [vmem:[%s1 + $0x70] sm:$0xf]
        %v380 = vld [vmem:[%s1 + $0x74] sm:$0xf]
        %v381 = vld [vmem:[%s2 + $0x8] sm:$0x1]
        %v382 = vlaneseq
        %v383 = vshrl.u32 %v382, 7
        %v384 = vsub.s32 0, %v383
        %v385 = vrot.slane %v381, %v384
        %v392 = vunpack.c.l.b16 %v375
        %v393 = vunpack.c.l.b16 %v376
        %v394 = vunpack.c.l.b16 %v377
        %v395 = vunpack.c.l.b16 %v378
        %v396 = vunpack.c.l.b16 %v379
        %v397 = vunpack.c.l.b16 %v380
        %v398 = vpack.c.b16 %v393, %v392
        %v399 = vpack.c.b16 %v395, %v394
        %v400 = vpack.c.b16 %v397, %v396
        %vm404 = vcmask 392192
        %v406 = vsel %vm404, %v374, 0
        %408 = vmatprep.subr.bf16.mxu0 0
        %409 = vmatpush1.bf16.msra.mxu0 %v398
        %410 = vmatprep.subr.bf16.mxu0 0
        %411 = vmatpush1.bf16.msra.mxu0 %v399
        %412 = vmatprep.subr.bf16.mxu0 0
        %413 = vmatpush1.bf16.msra.mxu0 %v400
        %414 = vmatprep.subr.bf16.mxu0 0
        %415 = vmatpush1.bf16.msra.mxu0 0
        %416 = vmatprep.subr.bf16.mxu0 0
        %417 = vmatpush1.bf16.msra.mxu0 0
        %418 = vmatprep.subr.bf16.mxu0 0
        %419 = vmatpush1.bf16.msra.mxu0 0
        %420 = vmatprep.subr.bf16.mxu0 0
        %421 = vmatpush1.bf16.msra.mxu0 0
        %422 = vmatprep.subr.bf16.mxu0 0
        %423 = vmatpush1.bf16.msra.mxu0 0
        %424 = vmatprep.subr.bf16.mxu0 0
        %425 = vmatpush1.bf16.msra.mxu0 0
        %426 = vmatprep.subr.bf16.mxu0 0
        %427 = vmatpush1.bf16.msra.mxu0 0
        %428 = vmatprep.subr.bf16.mxu0 0
        %429 = vmatpush1.bf16.msra.mxu0 0
        %430 = vmatprep.subr.bf16.mxu0 0
        %431 = vmatpush1.bf16.msra.mxu0 0
        %432 = vmatprep.subr.bf16.mxu0 0
        %433 = vmatpush1.bf16.msra.mxu0 0
        %434 = vmatprep.subr.bf16.mxu0 0
        %435 = vmatpush1.bf16.msra.mxu0 0
        %436 = vmatprep.subr.bf16.mxu0 0
        %437 = vmatpush1.bf16.msra.mxu0 0
        %438 = vmatprep.subr.bf16.mxu0 0
        %439 = vmatpush1.bf16.msra.mxu0 0
        %440 = vmatprep.mubr.bf16.mxu0 0
        %441 = vmatmul.mubr.bf16.gmra.mrb[0].mxu0 %v406
        %v442 = vpop.f32.mrb[0].mxu0
        %v443 = vadd.f32 %v385, %v442
        %v444 = vpop.f32.mrb[0].mxu0
        %v445 = vpop.f32.mrb[0].mxu0
        %v446 = vadd.f32 %v385, %v445
        %v447 = vpop.f32.mrb[0].mxu0
        %448 = vdwg.mxu0
        %v449 = vpack.c.bf16 %v446, %v443
        %v450 = vld [vmem:[%s1 + $0x78] sm:$0xf]
        %v451 = vld [vmem:[%s1 + $0x7c] sm:$0xf]
        %v452 = vld [vmem:[%s1 + $0x80] sm:$0xf]
        %v453 = vld [vmem:[%s1 + $0x84] sm:$0xf]
        %v454 = vld [vmem:[%s2 + $0x10] sm:$0x1]
        %v455 = vlaneseq
        %v456 = vshrl.u32 %v455, 7
        %v457 = vsub.s32 0, %v456
        %v458 = vrot.slane %v454, %v457
        %v463 = vunpack.c.l.b16 %v450
        %v464 = vunpack.c.l.b16 %v451
        %v465 = vunpack.c.l.b16 %v452
        %v466 = vunpack.c.l.b16 %v453
        %v467 = vpack.c.b16 %v464, %v463
        %v468 = vpack.c.b16 %v466, %v465
        %vm471 = vcmask 261120
        %v473 = vsel %vm471, %v449, 0
        %475 = vmatprep.subr.bf16.mxu0 0
        %476 = vmatpush1.bf16.msra.mxu0 %v467
        %477 = vmatprep.subr.bf16.mxu0 0
        %478 = vmatpush1.bf16.msra.mxu0 %v468
        %479 = vmatprep.subr.bf16.mxu0 0
        %480 = vmatpush1.bf16.msra.mxu0 0
        %481 = vmatprep.subr.bf16.mxu0 0
        %482 = vmatpush1.bf16.msra.mxu0 0
        %483 = vmatprep.subr.bf16.mxu0 0
        %484 = vmatpush1.bf16.msra.mxu0 0
        %485 = vmatprep.subr.bf16.mxu0 0
        %486 = vmatpush1.bf16.msra.mxu0 0
        %487 = vmatprep.subr.bf16.mxu0 0
        %488 = vmatpush1.bf16.msra.mxu0 0
        %489 = vmatprep.subr.bf16.mxu0 0
        %490 = vmatpush1.bf16.msra.mxu0 0
        %491 = vmatprep.subr.bf16.mxu0 0
        %492 = vmatpush1.bf16.msra.mxu0 0
        %493 = vmatprep.subr.bf16.mxu0 0
        %494 = vmatpush1.bf16.msra.mxu0 0
        %495 = vmatprep.subr.bf16.mxu0 0
        %496 = vmatpush1.bf16.msra.mxu0 0
        %497 = vmatprep.subr.bf16.mxu0 0
        %498 = vmatpush1.bf16.msra.mxu0 0
        %499 = vmatprep.subr.bf16.mxu0 0
        %500 = vmatpush1.bf16.msra.mxu0 0
        %501 = vmatprep.subr.bf16.mxu0 0
        %502 = vmatpush1.bf16.msra.mxu0 0
        %503 = vmatprep.subr.bf16.mxu0 0
        %504 = vmatpush1.bf16.msra.mxu0 0
        %505 = vmatprep.subr.bf16.mxu0 0
        %506 = vmatpush1.bf16.msra.mxu0 0
        %507 = vmatprep.mubr.bf16.mxu0 0
        %508 = vmatmul.mubr.bf16.gmra.mrb[0].mxu0 %v473
        %v509 = vpop.f32.mrb[0].mxu0
        %v510 = vadd.f32 %v458, %v509
        %v511 = vpop.f32.mrb[0].mxu0
        %v512 = vpop.f32.mrb[0].mxu0
        %v513 = vadd.f32 %v458, %v512
        %v514 = vpop.f32.mrb[0].mxu0
        %515 = vdwg.mxu0
        %v516 = vld [vmem:[%s2 + $0x18] sm:$0xff]
        %v517 = vld [vmem:[%s2 + $0x20] sm:$0xff]
        %v518 = vadd.f32 %v510, %v516
        %v519 = vadd.f32 %v513, %v517
        %528 = vrot.lane.b32.xlu0 %v208, 32
        %v529 = vpop.permute.xlu0 %528
        %530 = vrot.lane.b32.xlu0 %v209, 32
        %v531 = vpop.permute.xlu0 %530
        %532 = vrot.lane.b32.xlu0 %v210, 32
        %v533 = vpop.permute.xlu0 %532
        %534 = vrot.lane.b32.xlu0 %v211, 32
        %v535 = vpop.permute.xlu0 %534
        %536 = vrot.lane.b32.xlu0 %v212, 32
        %v537 = vpop.permute.xlu0 %536
        %538 = vrot.lane.b32.xlu0 %v213, 32
        %v539 = vpop.permute.xlu0 %538
        %540 = vrot.lane.b32.xlu0 %v214, 32
        %v541 = vpop.permute.xlu0 %540
        %542 = vrot.lane.b32.xlu0 %v215, 32
        %v543 = vpop.permute.xlu0 %542
        %v552 = vmul.f32 %v518, %v529
        %v553 = vmul.f32 %v519, %v531
        %v554 = vmul.f32 %v518, %v533
        %v555 = vmul.f32 %v519, %v535
        %v556 = vmul.f32 %v518, %v537
        %v557 = vmul.f32 %v519, %v539
        %v558 = vmul.f32 %v518, %v541
        %v559 = vmul.f32 %v519, %v543
        %560 = vrot.lane.b32.xlu0 %v208, 64
        %v561 = vpop.permute.xlu0 %560
        %562 = vrot.lane.b32.xlu0 %v209, 64
        %v563 = vpop.permute.xlu0 %562
        %564 = vrot.lane.b32.xlu0 %v210, 64
        %v565 = vpop.permute.xlu0 %564
        %566 = vrot.lane.b32.xlu0 %v211, 64
        %v567 = vpop.permute.xlu0 %566
        %568 = vrot.lane.b32.xlu0 %v212, 64
        %v569 = vpop.permute.xlu0 %568
        %570 = vrot.lane.b32.xlu0 %v213, 64
        %v571 = vpop.permute.xlu0 %570
        %572 = vrot.lane.b32.xlu0 %v214, 64
        %v573 = vpop.permute.xlu0 %572
        %574 = vrot.lane.b32.xlu0 %v215, 64
        %v575 = vpop.permute.xlu0 %574
        %v584 = vmul.f32 %v518, %v561
        %v585 = vmul.f32 %v519, %v563
        %v586 = vmul.f32 %v518, %v565
        %v587 = vmul.f32 %v519, %v567
        %v588 = vmul.f32 %v518, %v569
        %v589 = vmul.f32 %v519, %v571
        %v590 = vmul.f32 %v518, %v573
        %v591 = vmul.f32 %v519, %v575
        %600 = vrot.lane.b32.xlu0 %v552, 96
        %v601 = vpop.permute.xlu0 %600
        %602 = vrot.lane.b32.xlu0 %v553, 96
        %v603 = vpop.permute.xlu0 %602
        %604 = vrot.lane.b32.xlu0 %v554, 96
        %v605 = vpop.permute.xlu0 %604
        %606 = vrot.lane.b32.xlu0 %v555, 96
        %v607 = vpop.permute.xlu0 %606
        %608 = vrot.lane.b32.xlu0 %v556, 96
        %v609 = vpop.permute.xlu0 %608
        %610 = vrot.lane.b32.xlu0 %v557, 96
        %v611 = vpop.permute.xlu0 %610
        %612 = vrot.lane.b32.xlu0 %v558, 96
        %v613 = vpop.permute.xlu0 %612
        %614 = vrot.lane.b32.xlu0 %v559, 96
        %v615 = vpop.permute.xlu0 %614
        %v617 = vsel %vm471, %v518, 0
        %v620 = vsel %vm471, %v519, 0
        %v622 = vsel %vm471, %v601, 0
        %v624 = vsel %vm471, %v603, 0
        %v626 = vsel %vm471, %v605, 0
        %v628 = vsel %vm471, %v607, 0
        %v630 = vsel %vm471, %v609, 0
        %v632 = vsel %vm471, %v611, 0
        %v634 = vsel %vm471, %v613, 0
        %v636 = vsel %vm471, %v615, 0
        %638 = vmatprep.subr.mxu0 0.0
        %639 = vmatpush1.xpose.msra.mxu0 %v622
        %640 = vmatprep.subr.mxu0 0.0
        %641 = vmatpush1.xpose.msra.mxu0 %v624
        %642 = vmatprep.subr.mxu0 0.0
        %643 = vmatpush1.xpose.msra.mxu0 %v626
        %644 = vmatprep.subr.mxu0 0.0
        %645 = vmatpush1.xpose.msra.mxu0 %v628
        %646 = vmatprep.subr.mxu0 0.0
        %647 = vmatpush1.xpose.msra.mxu0 %v630
        %648 = vmatprep.subr.mxu0 0.0
        %649 = vmatpush1.xpose.msra.mxu0 %v632
        %650 = vmatprep.subr.mxu0 0.0
        %651 = vmatpush1.xpose.msra.mxu0 %v634
        %652 = vmatprep.subr.mxu0 0.0
        %653 = vmatpush1.xpose.msra.mxu0 %v636
        %654 = vmatprep.subr.mxu0 0.0
        %655 = vmatpush1.xpose.msra.mxu0 0.0
        %656 = vmatprep.subr.mxu0 0.0
        %657 = vmatpush1.xpose.msra.mxu0 0.0
        %658 = vmatprep.subr.mxu0 0.0
        %659 = vmatpush1.xpose.msra.mxu0 0.0
        %660 = vmatprep.subr.mxu0 0.0
        %661 = vmatpush1.xpose.msra.mxu0 0.0
        %662 = vmatprep.subr.mxu0 0.0
        %663 = vmatpush1.xpose.msra.mxu0 0.0
        %664 = vmatprep.subr.mxu0 0.0
        %665 = vmatpush1.xpose.msra.mxu0 0.0
        %666 = vmatprep.subr.mxu0 0.0
        %667 = vmatpush1.xpose.msra.mxu0 0.0
        %668 = vmatprep.subr.mxu0 0.0
        %669 = vmatpush1.xpose.msra.mxu0 0.0
        %670 = vmatprep.subr.mxu0 0.0
        %671 = vmatpush1.xpose.msra.mxu0 0.0
        %672 = vmatprep.subr.mxu0 0.0
        %673 = vmatpush1.xpose.msra.mxu0 0.0
        %674 = vmatprep.subr.mxu0 0.0
        %675 = vmatpush1.xpose.msra.mxu0 0.0
        %676 = vmatprep.subr.mxu0 0.0
        %677 = vmatpush1.xpose.msra.mxu0 0.0
        %678 = vmatprep.subr.mxu0 0.0
        %679 = vmatpush1.xpose.msra.mxu0 0.0
        %680 = vmatprep.subr.mxu0 0.0
        %681 = vmatpush1.xpose.msra.mxu0 0.0
        %682 = vmatprep.subr.mxu0 0.0
        %683 = vmatpush1.xpose.msra.mxu0 0.0
        %684 = vmatprep.subr.mxu0 0.0
        %685 = vmatpush1.xpose.msra.mxu0 0.0
        %686 = vmatprep.subr.mxu0 0.0
        %687 = vmatpush1.xpose.msra.mxu0 0.0
        %688 = vmatprep.subr.mxu0 0.0
        %689 = vmatpush1.xpose.msra.mxu0 0.0
        %690 = vmatprep.subr.mxu0 0.0
        %691 = vmatpush1.xpose.msra.mxu0 0.0
        %692 = vmatprep.subr.mxu0 0.0
        %693 = vmatpush1.xpose.msra.mxu0 0.0
        %694 = vmatprep.subr.mxu0 0.0
        %695 = vmatpush1.xpose.msra.mxu0 0.0
        %696 = vmatprep.subr.mxu0 0.0
        %697 = vmatpush1.xpose.msra.mxu0 0.0
        %698 = vmatprep.subr.mxu0 0.0
        %699 = vmatpush1.xpose.msra.mxu0 0.0
        %700 = vmatprep.subr.mxu0 0.0
        %701 = vmatpush1.xpose.msra.mxu0 0.0
        %702 = vmatprep.mubr.f32.mxu0 0.0
        %703 = vmatmul.mubr.f32.gmra.mrb[0].mxu0 %v617
        %v704 = vpop.f32.mrb[0].mxu0
        %v705 = vadd.f32 0.0, %v704
        %v706 = vpop.f32.mrb[0].mxu0
        %707 = vmatprep.mubr.f32.mxu0 0.0
        %708 = vmatmul.mubr.f32.gmra.mrb[0].mxu0 %v620
        %v709 = vpop.f32.mrb[0].mxu0
        %v710 = vadd.f32 0.0, %v709
        %v711 = vpop.f32.mrb[0].mxu0
        %712 = vdwg.mxu0
        %v713 = vsel %vm327, %v705, -inf
        %714 = vmax.xlane.f32.xlu0 %v713
        %v715 = vpop.xlane.xlu0 %714
        %v716 = vsel %vm327, %v710, -inf
        %717 = vmax.xlane.f32.xlu0 %v716
        %v718 = vpop.xlane.xlu0 %717
        %v719 = vsub.f32 %v705, %v715
        %v720 = vsub.f32 %v710, %v718
        %v721 = vmul.f32 %v719, 1.442695
        %v722 = vpow.pop %v721
        %v723 = vmul.f32 %v720, 1.442695
        %v724 = vpow.pop %v723
        %v726 = vsel %vm327, %v722, 0
        %v729 = vsel %vm327, %v724, 0
        %731 = vmatprep.subr.mxu0 0.0
        %732 = vmatpush1.msra.mxu0 %v208
        %733 = vmatprep.subr.mxu0 0.0
        %734 = vmatpush1.msra.mxu0 %v209
        %735 = vmatprep.subr.mxu0 0.0
        %736 = vmatpush1.msra.mxu0 %v210
        %737 = vmatprep.subr.mxu0 0.0
        %738 = vmatpush1.msra.mxu0 %v211
        %739 = vmatprep.subr.mxu0 0.0
        %740 = vmatpush1.msra.mxu0 %v212
        %741 = vmatprep.subr.mxu0 0.0
        %742 = vmatpush1.msra.mxu0 %v213
        %743 = vmatprep.subr.mxu0 0.0
        %744 = vmatpush1.msra.mxu0 %v214
        %745 = vmatprep.subr.mxu0 0.0
        %746 = vmatpush1.msra.mxu0 %v215
        %747 = vmatprep.subr.mxu0 0.0
        %748 = vmatpush1.msra.mxu0 0.0
        %749 = vmatprep.subr.mxu0 0.0
        %750 = vmatpush1.msra.mxu0 0.0
        %751 = vmatprep.subr.mxu0 0.0
        %752 = vmatpush1.msra.mxu0 0.0
        %753 = vmatprep.subr.mxu0 0.0
        %754 = vmatpush1.msra.mxu0 0.0
        %755 = vmatprep.subr.mxu0 0.0
        %756 = vmatpush1.msra.mxu0 0.0
        %757 = vmatprep.subr.mxu0 0.0
        %758 = vmatpush1.msra.mxu0 0.0
        %759 = vmatprep.subr.mxu0 0.0
        %760 = vmatpush1.msra.mxu0 0.0
        %761 = vmatprep.subr.mxu0 0.0
        %762 = vmatpush1.msra.mxu0 0.0
        %763 = vmatprep.subr.mxu0 0.0
        %764 = vmatpush1.msra.mxu0 0.0
        %765 = vmatprep.subr.mxu0 0.0
        %766 = vmatpush1.msra.mxu0 0.0
        %767 = vmatprep.subr.mxu0 0.0
        %768 = vmatpush1.msra.mxu0 0.0
        %769 = vmatprep.subr.mxu0 0.0
        %770 = vmatpush1.msra.mxu0 0.0
        %771 = vmatprep.subr.mxu0 0.0
        %772 = vmatpush1.msra.mxu0 0.0
        %773 = vmatprep.subr.mxu0 0.0
        %774 = vmatpush1.msra.mxu0 0.0
        %775 = vmatprep.subr.mxu0 0.0
        %776 = vmatpush1.msra.mxu0 0.0
        %777 = vmatprep.subr.mxu0 0.0
        %778 = vmatpush1.msra.mxu0 0.0
        %779 = vmatprep.subr.mxu0 0.0
        %780 = vmatpush1.msra.mxu0 0.0
        %781 = vmatprep.subr.mxu0 0.0
        %782 = vmatpush1.msra.mxu0 0.0
        %783 = vmatprep.subr.mxu0 0.0
        %784 = vmatpush1.msra.mxu0 0.0
        %785 = vmatprep.subr.mxu0 0.0
        %786 = vmatpush1.msra.mxu0 0.0
        %787 = vmatprep.subr.mxu0 0.0
        %788 = vmatpush1.msra.mxu0 0.0
        %789 = vmatprep.subr.mxu0 0.0
        %790 = vmatpush1.msra.mxu0 0.0
        %791 = vmatprep.subr.mxu0 0.0
        %792 = vmatpush1.msra.mxu0 0.0
        %793 = vmatprep.subr.mxu0 0.0
        %794 = vmatpush1.msra.mxu0 0.0
        %795 = vmatprep.mubr.f32.mxu0 0.0
        %796 = vmatmul.mubr.f32.gmra.mrb[0].mxu0 %v726
        %v797 = vpop.f32.mrb[0].mxu0
        %v798 = vadd.f32 0.0, %v797
        %v799 = vpop.f32.mrb[0].mxu0
        %800 = vmatprep.mubr.f32.mxu0 0.0
        %801 = vmatmul.mubr.f32.gmra.mrb[0].mxu0 %v729
        %v802 = vpop.f32.mrb[0].mxu0
        %v803 = vadd.f32 0.0, %v802
        %v804 = vpop.f32.mrb[0].mxu0
        %805 = vdwg.mxu0
        %814 = vrot.lane.b32.xlu0 %v584, 64
        %v815 = vpop.permute.xlu0 %814
        %816 = vrot.lane.b32.xlu0 %v585, 64
        %v817 = vpop.permute.xlu0 %816
        %818 = vrot.lane.b32.xlu0 %v586, 64
        %v819 = vpop.permute.xlu0 %818
        %820 = vrot.lane.b32.xlu0 %v587, 64
        %v821 = vpop.permute.xlu0 %820
        %822 = vrot.lane.b32.xlu0 %v588, 64
        %v823 = vpop.permute.xlu0 %822
        %824 = vrot.lane.b32.xlu0 %v589, 64
        %v825 = vpop.permute.xlu0 %824
        %826 = vrot.lane.b32.xlu0 %v590, 64
        %v827 = vpop.permute.xlu0 %826
        %828 = vrot.lane.b32.xlu0 %v591, 64
        %v829 = vpop.permute.xlu0 %828
        %838 = vmatprep.subr.mxu0 0.0
        %839 = vmatpush1.msra.mxu0 %v815
        %840 = vmatprep.subr.mxu0 0.0
        %841 = vmatpush1.msra.mxu0 %v817
        %842 = vmatprep.subr.mxu0 0.0
        %843 = vmatpush1.msra.mxu0 %v819
        %844 = vmatprep.subr.mxu0 0.0
        %845 = vmatpush1.msra.mxu0 %v821
        %846 = vmatprep.subr.mxu0 0.0
        %847 = vmatpush1.msra.mxu0 %v823
        %848 = vmatprep.subr.mxu0 0.0
        %849 = vmatpush1.msra.mxu0 %v825
        %850 = vmatprep.subr.mxu0 0.0
        %851 = vmatpush1.msra.mxu0 %v827
        %852 = vmatprep.subr.mxu0 0.0
        %853 = vmatpush1.msra.mxu0 %v829
        %854 = vmatprep.subr.mxu0 0.0
        %855 = vmatpush1.msra.mxu0 0.0
        %856 = vmatprep.subr.mxu0 0.0
        %857 = vmatpush1.msra.mxu0 0.0
        %858 = vmatprep.subr.mxu0 0.0
        %859 = vmatpush1.msra.mxu0 0.0
        %860 = vmatprep.subr.mxu0 0.0
        %861 = vmatpush1.msra.mxu0 0.0
        %862 = vmatprep.subr.mxu0 0.0
        %863 = vmatpush1.msra.mxu0 0.0
        %864 = vmatprep.subr.mxu0 0.0
        %865 = vmatpush1.msra.mxu0 0.0
        %866 = vmatprep.subr.mxu0 0.0
        %867 = vmatpush1.msra.mxu0 0.0
        %868 = vmatprep.subr.mxu0 0.0
        %869 = vmatpush1.msra.mxu0 0.0
        %870 = vmatprep.subr.mxu0 0.0
        %871 = vmatpush1.msra.mxu0 0.0
        %872 = vmatprep.subr.mxu0 0.0
        %873 = vmatpush1.msra.mxu0 0.0
        %874 = vmatprep.subr.mxu0 0.0
        %875 = vmatpush1.msra.mxu0 0.0
        %876 = vmatprep.subr.mxu0 0.0
        %877 = vmatpush1.msra.mxu0 0.0
        %878 = vmatprep.subr.mxu0 0.0
        %879 = vmatpush1.msra.mxu0 0.0
        %880 = vmatprep.subr.mxu0 0.0
        %881 = vmatpush1.msra.mxu0 0.0
        %882 = vmatprep.subr.mxu0 0.0
        %883 = vmatpush1.msra.mxu0 0.0
        %884 = vmatprep.subr.mxu0 0.0
        %885 = vmatpush1.msra.mxu0 0.0
        %886 = vmatprep.subr.mxu0 0.0
        %887 = vmatpush1.msra.mxu0 0.0
        %888 = vmatprep.subr.mxu0 0.0
        %889 = vmatpush1.msra.mxu0 0.0
        %890 = vmatprep.subr.mxu0 0.0
        %891 = vmatpush1.msra.mxu0 0.0
        %892 = vmatprep.subr.mxu0 0.0
        %893 = vmatpush1.msra.mxu0 0.0
        %894 = vmatprep.subr.mxu0 0.0
        %895 = vmatpush1.msra.mxu0 0.0
        %896 = vmatprep.subr.mxu0 0.0
        %897 = vmatpush1.msra.mxu0 0.0
        %898 = vmatprep.subr.mxu0 0.0
        %899 = vmatpush1.msra.mxu0 0.0
        %900 = vmatprep.subr.mxu0 0.0
        %901 = vmatpush1.msra.mxu0 0.0
        %902 = vmatprep.mubr.f32.mxu0 0.0
        %903 = vmatmul.mubr.f32.gmra.mrb[0].mxu0 %v726
        %v904 = vpop.f32.mrb[0].mxu0
        %v905 = vadd.f32 0.0, %v904
        %v906 = vpop.f32.mrb[0].mxu0
        %907 = vmatprep.mubr.f32.mxu0 0.0
        %908 = vmatmul.mubr.f32.gmra.mrb[0].mxu0 %v729
        %v909 = vpop.f32.mrb[0].mxu0
        %v910 = vadd.f32 0.0, %v909
        %v911 = vpop.f32.mrb[0].mxu0
        %912 = vdwg.mxu0
        %v913 = vrcp.pop %v798
        %v914 = vrcp.pop %v803
        %v915 = vmul.f32 %v905, %v913
        %v916 = vmul.f32 %v910, %v914
        %v917 = vpack.c.bf16 %v916, %v915
        %v918 = vld [vmem:[%s1 + $0x88] sm:$0xf]
        %v919 = vld [vmem:[%s1 + $0x8c] sm:$0xf]
        %v920 = vld [vmem:[%s1 + $0x90] sm:$0xf]
        %v921 = vld [vmem:[%s1 + $0x94] sm:$0xf]
        %v922 = vld [vmem:[%s2 + $0x28] sm:$0x1]
        %v923 = vlaneseq
        %v924 = vshrl.u32 %v923, 7
        %v925 = vsub.s32 0, %v924
        %v926 = vrot.slane %v922, %v925
        %v931 = vunpack.c.l.b16 %v918
        %v932 = vunpack.c.l.b16 %v919
        %v933 = vunpack.c.l.b16 %v920
        %v934 = vunpack.c.l.b16 %v921
        %v935 = vpack.c.b16 %v932, %v931
        %v936 = vpack.c.b16 %v934, %v933
        %v940 = vsel %vm471, %v917, 0
        %942 = vmatprep.subr.bf16.mxu0 0
        %943 = vmatpush1.bf16.msra.mxu0 %v935
        %944 = vmatprep.subr.bf16.mxu0 0
        %945 = vmatpush1.bf16.msra.mxu0 %v936
        %946 = vmatprep.subr.bf16.mxu0 0
        %947 = vmatpush1.bf16.msra.mxu0 0
        %948 = vmatprep.subr.bf16.mxu0 0
        %949 = vmatpush1.bf16.msra.mxu0 0
        %950 = vmatprep.subr.bf16.mxu0 0
        %951 = vmatpush1.bf16.msra.mxu0 0
        %952 = vmatprep.subr.bf16.mxu0 0
        %953 = vmatpush1.bf16.msra.mxu0 0
        %954 = vmatprep.subr.bf16.mxu0 0
        %955 = vmatpush1.bf16.msra.mxu0 0
        %956 = vmatprep.subr.bf16.mxu0 0
        %957 = vmatpush1.bf16.msra.mxu0 0
        %958 = vmatprep.subr.bf16.mxu0 0
        %959 = vmatpush1.bf16.msra.mxu0 0
        %960 = vmatprep.subr.bf16.mxu0 0
        %961 = vmatpush1.bf16.msra.mxu0 0
        %962 = vmatprep.subr.bf16.mxu0 0
        %963 = vmatpush1.bf16.msra.mxu0 0
        %964 = vmatprep.subr.bf16.mxu0 0
        %965 = vmatpush1.bf16.msra.mxu0 0
        %966 = vmatprep.subr.bf16.mxu0 0
        %967 = vmatpush1.bf16.msra.mxu0 0
        %968 = vmatprep.subr.bf16.mxu0 0
        %969 = vmatpush1.bf16.msra.mxu0 0
        %970 = vmatprep.subr.bf16.mxu0 0
        %971 = vmatpush1.bf16.msra.mxu0 0
        %972 = vmatprep.subr.bf16.mxu0 0
        %973 = vmatpush1.bf16.msra.mxu0 0
        %974 = vmatprep.mubr.bf16.mxu0 0
        %975 = vmatmul.mubr.bf16.gmra.mrb[0].mxu0 %v940
        %v976 = vpop.f32.mrb[0].mxu0
        %v977 = vadd.f32 %v926, %v976
        %v978 = vpop.f32.mrb[0].mxu0
        %v979 = vpop.f32.mrb[0].mxu0
        %v980 = vadd.f32 %v926, %v979
        %v981 = vpop.f32.mrb[0].mxu0
        %982 = vdwg.mxu0
        %v983 = vadd.f32 %v443, %v977
        %v984 = vadd.f32 %v446, %v980
        %v985 = vld [vmem:[%s2 + $0x30] sm:$0x1]
        %v986 = vld [vmem:[%s2 + $0x38] sm:$0x1]
        %v987 = vsel %vm471, %v983, 0.0
        %988 = vadd.xlane.f32.xlu0 %v987
        %v989 = vpop.xlane.xlu0 %988
        %v990 = vsel %vm471, %v984, 0.0
        %991 = vadd.xlane.f32.xlu0 %v990
        %v992 = vpop.xlane.xlu0 %991
        %v993 = vrcp.pop 32.0
        %v994 = vmul.f32 %v989, %v993
        %v995 = vmul.f32 %v992, %v993
        %v996 = vmul.f32 %v983, %v983
        %v997 = vmul.f32 %v984, %v984
        %v998 = vsel %vm471, %v996, 0.0
        %999 = vadd.xlane.f32.xlu0 %v998
        %v1000 = vpop.xlane.xlu0 %999
        %v1001 = vsel %vm471, %v997, 0.0
        %1002 = vadd.xlane.f32.xlu0 %v1001
        %v1003 = vpop.xlane.xlu0 %1002
        %v1004 = vmul.f32 %v1000, %v993
        %v1005 = vmul.f32 %v1003, %v993
        %v1006 = vmul.f32 %v994, %v994
        %v1007 = vmul.f32 %v995, %v995
        %v1008 = vsub.f32 %v1004, %v1006
        %v1009 = vsub.f32 %v1005, %v1007
        %v1010 = vsub.f32 %v983, %v994
        %v1011 = vsub.f32 %v984, %v995
        %v1012 = vadd.f32 %v1008, 1e-05
        %v1013 = vadd.f32 %v1009, 1e-05
        %v1014 = vrsqrt.pop %v1012
        %v1015 = vrsqrt.pop %v1013
        %v1016 = vmul.f32 %v1010, %v1014
        %v1017 = vmul.f32 %v1011, %v1015
        %v1018 = vlaneseq
        %v1019 = vshrl.u32 %v1018, 7
        %v1020 = vsub.s32 0, %v1019
        %v1021 = vrot.slane %v985, %v1020
        %v1022 = vmul.f32 %v1016, %v1021
        %v1023 = vmul.f32 %v1017, %v1021
        %v1024 = vlaneseq
        %v1025 = vshrl.u32 %v1024, 7
        %v1026 = vsub.s32 0, %v1025
        %v1027 = vrot.slane %v986, %v1026
        %v1028 = vadd.f32 %v1022, %v1027
        %v1029 = vadd.f32 %v1023, %v1027
        %v1030 = vpack.c.bf16 %v1029, %v1028
        %v1031 = vld [vmem:[%s1 + $0x98] sm:$0xf]
        %v1032 = vld [vmem:[%s1 + $0x9c] sm:$0xf]
        %v1033 = vld [vmem:[%s1 + $0xa0] sm:$0xf]
        %v1034 = vld [vmem:[%s1 + $0xa4] sm:$0xf]
        %v1035 = vld [vmem:[%s2 + $0x40] sm:$0x1]
        %v1036 = vlaneseq
        %v1037 = vshrl.u32 %v1036, 7
        %v1038 = vsub.s32 0, %v1037
        %v1039 = vrot.slane %v1035, %v1038
        %v1044 = vunpack.c.l.b16 %v1031
        %v1045 = vunpack.c.l.b16 %v1032
        %v1046 = vunpack.c.l.b16 %v1033
        %v1047 = vunpack.c.l.b16 %v1034
        %v1048 = vpack.c.b16 %v1045, %v1044
        %v1049 = vpack.c.b16 %v1047, %v1046
        %v1053 = vsel %vm471, %v1030, 0
        %1055 = vmatprep.subr.bf16.mxu0 0
        %1056 = vmatpush1.bf16.msra.mxu0 %v1048
        %1057 = vmatprep.subr.bf16.mxu0 0
        %1058 = vmatpush1.bf16.msra.mxu0 %v1049
        %1059 = vmatprep.subr.bf16.mxu0 0
        %1060 = vmatpush1.bf16.msra.mxu0 0
        %1061 = vmatprep.subr.bf16.mxu0 0
        %1062 = vmatpush1.bf16.msra.mxu0 0
        %1063 = vmatprep.subr.bf16.mxu0 0
        %1064 = vmatpush1.bf16.msra.mxu0 0
        %1065 = vmatprep.subr.bf16.mxu0 0
        %1066 = vmatpush1.bf16.msra.mxu0 0
        %1067 = vmatprep.subr.bf16.mxu0 0
        %1068 = vmatpush1.bf16.msra.mxu0 0
        %1069 = vmatprep.subr.bf16.mxu0 0
        %1070 = vmatpush1.bf16.msra.mxu0 0
        %1071 = vmatprep.subr.bf16.mxu0 0
        %1072 = vmatpush1.bf16.msra.mxu0 0
        %1073 = vmatprep.subr.bf16.mxu0 0
        %1074 = vmatpush1.bf16.msra.mxu0 0
        %1075 = vmatprep.subr.bf16.mxu0 0
        %1076 = vmatpush1.bf16.msra.mxu0 0
        %1077 = vmatprep.subr.bf16.mxu0 0
        %1078 = vmatpush1.bf16.msra.mxu0 0
        %1079 = vmatprep.subr.bf16.mxu0 0
        %1080 = vmatpush1.bf16.msra.mxu0 0
        %1081 = vmatprep.subr.bf16.mxu0 0
        %1082 = vmatpush1.bf16.msra.mxu0 0
        %1083 = vmatprep.subr.bf16.mxu0 0
        %1084 = vmatpush1.bf16.msra.mxu0 0
        %1085 = vmatprep.subr.bf16.mxu0 0
        %1086 = vmatpush1.bf16.msra.mxu0 0
        %1087 = vmatprep.mubr.bf16.mxu0 0
        %1088 = vmatmul.mubr.bf16.gmra.mrb[0].mxu0 %v1053
        %v1089 = vpop.f32.mrb[0].mxu0
        %v1090 = vadd.f32 %v1039, %v1089
        %v1091 = vpop.f32.mrb[0].mxu0
        %v1092 = vpop.f32.mrb[0].mxu0
        %v1093 = vadd.f32 %v1039, %v1092
        %v1094 = vpop.f32.mrb[0].mxu0
        %1095 = vdwg.mxu0
        %v1096 = vmax.f32 %v1090, 0.0
        %v1097 = vmax.f32 %v1093, 0.0
        %v1098 = vpack.c.bf16 %v1097, %v1096
        %v1099 = vld [vmem:[%s1 + $0xa8] sm:$0xf]
        %v1100 = vld [vmem:[%s1 + $0xac] sm:$0xf]
        %v1101 = vld [vmem:[%s1 + $0xb0] sm:$0xf]
        %v1102 = vld [vmem:[%s1 + $0xb4] sm:$0xf]
        %v1103 = vld [vmem:[%s1 + $0xb8] sm:$0xf]
        %v1104 = vld [vmem:[%s1 + $0xbc] sm:$0xf]
        %v1105 = vld [vmem:[%s1 + $0xc0] sm:$0xf]
        %v1106 = vld [vmem:[%s1 + $0xc4] sm:$0xf]
        %v1107 = vld [vmem:[%s2 + $0x48] sm:$0x1]
        %v1108 = vlaneseq
        %v1109 = vshrl.u32 %v1108, 7
        %v1110 = vsub.s32 0, %v1109
        %v1111 = vrot.slane %v1107, %v1110
        %v1120 = vunpack.c.l.b16 %v1099
        %v1121 = vunpack.c.l.b16 %v1100
        %v1122 = vunpack.c.l.b16 %v1101
        %v1123 = vunpack.c.l.b16 %v1102
        %v1124 = vunpack.c.l.b16 %v1103
        %v1125 = vunpack.c.l.b16 %v1104
        %v1126 = vunpack.c.l.b16 %v1105
        %v1127 = vunpack.c.l.b16 %v1106
        %v1128 = vpack.c.b16 %v1121, %v1120
        %v1129 = vpack.c.b16 %v1123, %v1122
        %v1130 = vpack.c.b16 %v1125, %v1124
        %v1131 = vpack.c.b16 %v1127, %v1126
        %v1137 = vsel %vm327, %v1098, 0
        %1139 = vmatprep.subr.bf16.mxu0 0
        %1140 = vmatpush1.bf16.msra.mxu0 %v1128
        %1141 = vmatprep.subr.bf16.mxu0 0
        %1142 = vmatpush1.bf16.msra.mxu0 %v1129
        %1143 = vmatprep.subr.bf16.mxu0 0
        %1144 = vmatpush1.bf16.msra.mxu0 %v1130
        %1145 = vmatprep.subr.bf16.mxu0 0
        %1146 = vmatpush1.bf16.msra.mxu0 %v1131
        %1147 = vmatprep.subr.bf16.mxu0 0
        %1148 = vmatpush1.bf16.msra.mxu0 0
        %1149 = vmatprep.subr.bf16.mxu0 0
        %1150 = vmatpush1.bf16.msra.mxu0 0
        %1151 = vmatprep.subr.bf16.mxu0 0
        %1152 = vmatpush1.bf16.msra.mxu0 0
        %1153 = vmatprep.subr.bf16.mxu0 0
        %1154 = vmatpush1.bf16.msra.mxu0 0
        %1155 = vmatprep.subr.bf16.mxu0 0
        %1156 = vmatpush1.bf16.msra.mxu0 0
        %1157 = vmatprep.subr.bf16.mxu0 0
        %1158 = vmatpush1.bf16.msra.mxu0 0
        %1159 = vmatprep.subr.bf16.mxu0 0
        %1160 = vmatpush1.bf16.msra.mxu0 0
        %1161 = vmatprep.subr.bf16.mxu0 0
        %1162 = vmatpush1.bf16.msra.mxu0 0
        %1163 = vmatprep.subr.bf16.mxu0 0
        %1164 = vmatpush1.bf16.msra.mxu0 0
        %1165 = vmatprep.subr.bf16.mxu0 0
        %1166 = vmatpush1.bf16.msra.mxu0 0
        %1167 = vmatprep.subr.bf16.mxu0 0
        %1168 = vmatpush1.bf16.msra.mxu0 0
        %1169 = vmatprep.subr.bf16.mxu0 0
        %1170 = vmatpush1.bf16.msra.mxu0 0
        %1171 = vmatprep.mubr.bf16.mxu0 0
        %1172 = vmatmul.mubr.bf16.gmra.mrb[0].mxu0 %v1137
        %v1173 = vpop.f32.mrb[0].mxu0
        %v1174 = vadd.f32 %v1111, %v1173
        %v1175 = vpop.f32.mrb[0].mxu0
        %v1176 = vpop.f32.mrb[0].mxu0
        %v1177 = vadd.f32 %v1111, %v1176
        %v1178 = vpop.f32.mrb[0].mxu0
        %1179 = vdwg.mxu0
        %v1180 = vadd.f32 %v1028, %v1174
        %v1181 = vadd.f32 %v1029, %v1177
        %v1182 = vld [vmem:[%s2 + $0x50] sm:$0x1]
        %v1183 = vld [vmem:[%s2 + $0x58] sm:$0x1]
        %v1184 = vsel %vm471, %v1180, 0.0
        %1185 = vadd.xlane.f32.xlu0 %v1184
        %v1186 = vpop.xlane.xlu0 %1185
        %v1187 = vsel %vm471, %v1181, 0.0
        %1188 = vadd.xlane.f32.xlu0 %v1187
        %v1189 = vpop.xlane.xlu0 %1188
        %v1190 = vmul.f32 %v1186, %v993
        %v1191 = vmul.f32 %v1189, %v993
        %v1192 = vmul.f32 %v1180, %v1180
        %v1193 = vmul.f32 %v1181, %v1181
        %v1194 = vsel %vm471, %v1192, 0.0
        %1195 = vadd.xlane.f32.xlu0 %v1194
        %v1196 = vpop.xlane.xlu0 %1195
        %v1197 = vsel %vm471, %v1193, 0.0
        %1198 = vadd.xlane.f32.xlu0 %v1197
        %v1199 = vpop.xlane.xlu0 %1198
        %v1200 = vmul.f32 %v1196, %v993
        %v1201 = vmul.f32 %v1199, %v993
        %v1202 = vmul.f32 %v1190, %v1190
        %v1203 = vmul.f32 %v1191, %v1191
        %v1204 = vsub.f32 %v1200, %v1202
        %v1205 = vsub.f32 %v1201, %v1203
        %v1206 = vsub.f32 %v1180, %v1190
        %v1207 = vsub.f32 %v1181, %v1191
        %v1208 = vadd.f32 %v1204, 1e-05
        %v1209 = vadd.f32 %v1205, 1e-05
        %v1210 = vrsqrt.pop %v1208
        %v1211 = vrsqrt.pop %v1209
        %v1212 = vmul.f32 %v1206, %v1210
        %v1213 = vmul.f32 %v1207, %v1211
        %v1214 = vlaneseq
        %v1215 = vshrl.u32 %v1214, 7
        %v1216 = vsub.s32 0, %v1215
        %v1217 = vrot.slane %v1182, %v1216
        %v1218 = vmul.f32 %v1212, %v1217
        %v1219 = vmul.f32 %v1213, %v1217
        %v1220 = vlaneseq
        %v1221 = vshrl.u32 %v1220, 7
        %v1222 = vsub.s32 0, %v1221
        %v1223 = vrot.slane %v1183, %v1222
        %v1224 = vadd.f32 %v1218, %v1223
        %v1225 = vadd.f32 %v1219, %v1223
        %v1226 = vld [vmem:[%s1 + $0xc8] sm:$0xf]
        %v1227 = vld [vmem:[%s1 + $0xcc] sm:$0xf]
        %v1228 = vld [vmem:[%s1 + $0xd0] sm:$0xf]
        %v1229 = vld [vmem:[%s1 + $0xd4] sm:$0xf]
        %v1230 = vld [vmem:[%s2 + $0x60] sm:$0x1]
        %v1231 = vlaneseq
        %v1232 = vshrl.u32 %v1231, 7
        %v1233 = vsub.s32 0, %v1232
        %v1234 = vrot.slane %v1230, %v1233
        %v1239 = vunpack.c.l.b16 %v1226
        %v1240 = vunpack.c.l.b16 %v1227
        %v1241 = vunpack.c.l.b16 %v1228
        %v1242 = vunpack.c.l.b16 %v1229
        %v1243 = vpack.c.b16 %v1240, %v1239
        %v1244 = vpack.c.b16 %v1242, %v1241
        %v1248 = vsel %vm471, 0, 0
        %1250 = vmatprep.subr.bf16.mxu0 0
        %1251 = vmatpush1.bf16.msra.mxu0 %v1243
        %1252 = vmatprep.subr.bf16.mxu0 0
        %1253 = vmatpush1.bf16.msra.mxu0 %v1244
        %1254 = vmatprep.subr.bf16.mxu0 0
        %1255 = vmatpush1.bf16.msra.mxu0 0
        %1256 = vmatprep.subr.bf16.mxu0 0
        %1257 = vmatpush1.bf16.msra.mxu0 0
        %1258 = vmatprep.subr.bf16.mxu0 0
        %1259 = vmatpush1.bf16.msra.mxu0 0
        %1260 = vmatprep.subr.bf16.mxu0 0
        %1261 = vmatpush1.bf16.msra.mxu0 0
        %1262 = vmatprep.subr.bf16.mxu0 0
        %1263 = vmatpush1.bf16.msra.mxu0 0
        %1264 = vmatprep.subr.bf16.mxu0 0
        %1265 = vmatpush1.bf16.msra.mxu0 0
        %1266 = vmatprep.subr.bf16.mxu0 0
        %1267 = vmatpush1.bf16.msra.mxu0 0
        %1268 = vmatprep.subr.bf16.mxu0 0
        %1269 = vmatpush1.bf16.msra.mxu0 0
        %1270 = vmatprep.subr.bf16.mxu0 0
        %1271 = vmatpush1.bf16.msra.mxu0 0
        %1272 = vmatprep.subr.bf16.mxu0 0
        %1273 = vmatpush1.bf16.msra.mxu0 0
        %1274 = vmatprep.subr.bf16.mxu0 0
        %1275 = vmatpush1.bf16.msra.mxu0 0
        %1276 = vmatprep.subr.bf16.mxu0 0
        %1277 = vmatpush1.bf16.msra.mxu0 0
        %1278 = vmatprep.subr.bf16.mxu0 0
        %1279 = vmatpush1.bf16.msra.mxu0 0
        %1280 = vmatprep.subr.bf16.mxu0 0
        %1281 = vmatpush1.bf16.msra.mxu0 0
        %1282 = vmatprep.mubr.bf16.mxu0 0
        %1283 = vmatmul.mubr.bf16.gmra.mrb[0].mxu0 %v1248
        %v1284 = vpop.f32.mrb[0].mxu0
        %v1285 = vadd.f32 %v1234, %v1284
        %v1286 = vpop.f32.mrb[0].mxu0
        %v1287 = vpop.f32.mrb[0].mxu0
        %v1288 = vpop.f32.mrb[0].mxu0
        %1289 = vdwg.mxu0
        %v1290 = vld [vmem:[%s2 + $0x68] sm:$0xff]
        %v1291 = vadd.f32 %v1285, %v1290
        %1296 = vrot.lane.b32.xlu0 %v216, 32
        %v1297 = vpop.permute.xlu0 %1296
        %1298 = vrot.lane.b32.xlu0 %v217, 32
        %v1299 = vpop.permute.xlu0 %1298
        %1300 = vrot.lane.b32.xlu0 %v218, 32
        %v1301 = vpop.permute.xlu0 %1300
        %1302 = vrot.lane.b32.xlu0 %v219, 32
        %v1303 = vpop.permute.xlu0 %1302
        %v1308 = vmul.f32 %v1291, %v1297
        %v1309 = vmul.f32 %v1291, %v1299
        %v1310 = vmul.f32 %v1291, %v1301
        %v1311 = vmul.f32 %v1291, %v1303
        %1312 = vrot.lane.b32.xlu0 %v216, 64
        %v1313 = vpop.permute.xlu0 %1312
        %1314 = vrot.lane.b32.xlu0 %v217, 64
        %v1315 = vpop.permute.xlu0 %1314
        %1316 = vrot.lane.b32.xlu0 %v218, 64
        %v1317 = vpop.permute.xlu0 %1316
        %1318 = vrot.lane.b32.xlu0 %v219, 64
        %v1319 = vpop.permute.xlu0 %1318
        %v1324 = vmul.f32 %v1291, %v1313
        %v1325 = vmul.f32 %v1291, %v1315
        %v1326 = vmul.f32 %v1291, %v1317
        %v1327 = vmul.f32 %v1291, %v1319
        %1332 = vrot.lane.b32.xlu0 %v1308, 96
        %v1333 = vpop.permute.xlu0 %1332
        %1334 = vrot.lane.b32.xlu0 %v1309, 96
        %v1335 = vpop.permute.xlu0 %1334
        %1336 = vrot.lane.b32.xlu0 %v1310, 96
        %v1337 = vpop.permute.xlu0 %1336
        %1338 = vrot.lane.b32.xlu0 %v1311, 96
        %v1339 = vpop.permute.xlu0 %1338
        %v1341 = vsel %vm471, %v1291, 0
        %v1343 = vsel %vm471, %v1333, 0
        %v1345 = vsel %vm471, %v1335, 0
        %v1347 = vsel %vm471, %v1337, 0
        %v1349 = vsel %vm471, %v1339, 0
        %1351 = vmatprep.subr.mxu0 0.0
        %1352 = vmatpush1.xpose.msra.mxu0 %v1343
        %1353 = vmatprep.subr.mxu0 0.0
        %1354 = vmatpush1.xpose.msra.mxu0 %v1345
        %1355 = vmatprep.subr.mxu0 0.0
        %1356 = vmatpush1.xpose.msra.mxu0 %v1347
        %1357 = vmatprep.subr.mxu0 0.0
        %1358 = vmatpush1.xpose.msra.mxu0 %v1349
        %1359 = vmatprep.subr.mxu0 0.0
        %1360 = vmatpush1.xpose.msra.mxu0 0.0
        %1361 = vmatprep.subr.mxu0 0.0
        %1362 = vmatpush1.xpose.msra.mxu0 0.0
        %1363 = vmatprep.subr.mxu0 0.0
        %1364 = vmatpush1.xpose.msra.mxu0 0.0
        %1365 = vmatprep.subr.mxu0 0.0
        %1366 = vmatpush1.xpose.msra.mxu0 0.0
        %1367 = vmatprep.subr.mxu0 0.0
        %1368 = vmatpush1.xpose.msra.mxu0 0.0
        %1369 = vmatprep.subr.mxu0 0.0
        %1370 = vmatpush1.xpose.msra.mxu0 0.0
        %1371 = vmatprep.subr.mxu0 0.0
        %1372 = vmatpush1.xpose.msra.mxu0 0.0
        %1373 = vmatprep.subr.mxu0 0.0
        %1374 = vmatpush1.xpose.msra.mxu0 0.0
        %1375 = vmatprep.subr.mxu0 0.0
        %1376 = vmatpush1.xpose.msra.mxu0 0.0
        %1377 = vmatprep.subr.mxu0 0.0
        %1378 = vmatpush1.xpose.msra.mxu0 0.0
        %1379 = vmatprep.subr.mxu0 0.0
        %1380 = vmatpush1.xpose.msra.mxu0 0.0
        %1381 = vmatprep.subr.mxu0 0.0
        %1382 = vmatpush1.xpose.msra.mxu0 0.0
        %1383 = vmatprep.subr.mxu0 0.0
        %1384 = vmatpush1.xpose.msra.mxu0 0.0
        %1385 = vmatprep.subr.mxu0 0.0
        %1386 = vmatpush1.xpose.msra.mxu0 0.0
        %1387 = vmatprep.subr.mxu0 0.0
        %1388 = vmatpush1.xpose.msra.mxu0 0.0
        %1389 = vmatprep.subr.mxu0 0.0
        %1390 = vmatpush1.xpose.msra.mxu0 0.0
        %1391 = vmatprep.subr.mxu0 0.0
        %1392 = vmatpush1.xpose.msra.mxu0 0.0
        %1393 = vmatprep.subr.mxu0 0.0
        %1394 = vmatpush1.xpose.msra.mxu0 0.0
        %1395 = vmatprep.subr.mxu0 0.0
        %1396 = vmatpush1.xpose.msra.mxu0 0.0
        %1397 = vmatprep.subr.mxu0 0.0
        %1398 = vmatpush1.xpose.msra.mxu0 0.0
        %1399 = vmatprep.subr.mxu0 0.0
        %1400 = vmatpush1.xpose.msra.mxu0 0.0
        %1401 = vmatprep.subr.mxu0 0.0
        %1402 = vmatpush1.xpose.msra.mxu0 0.0
        %1403 = vmatprep.subr.mxu0 0.0
        %1404 = vmatpush1.xpose.msra.mxu0 0.0
        %1405 = vmatprep.subr.mxu0 0.0
        %1406 = vmatpush1.xpose.msra.mxu0 0.0
        %1407 = vmatprep.subr.mxu0 0.0
        %1408 = vmatpush1.xpose.msra.mxu0 0.0
        %1409 = vmatprep.subr.mxu0 0.0
        %1410 = vmatpush1.xpose.msra.mxu0 0.0
        %1411 = vmatprep.subr.mxu0 0.0
        %1412 = vmatpush1.xpose.msra.mxu0 0.0
        %1413 = vmatprep.subr.mxu0 0.0
        %1414 = vmatpush1.xpose.msra.mxu0 0.0
        %1415 = vmatprep.mubr.f32.mxu0 0.0
        %1416 = vmatmul.mubr.f32.gmra.mrb[0].mxu0 %v1341
        %v1417 = vpop.f32.mrb[0].mxu0
        %v1418 = vadd.f32 0.0, %v1417
        %v1419 = vpop.f32.mrb[0].mxu0
        %1420 = vdwg.mxu0
        %v1421 = vsel %vm471, %v1418, -inf
        %1422 = vmax.xlane.f32.xlu0 %v1421
        %v1423 = vpop.xlane.xlu0 %1422
        %v1424 = vsub.f32 %v1418, %v1423
        %v1425 = vmul.f32 %v1424, 1.442695
        %v1426 = vpow.pop %v1425
        %v1428 = vsel %vm471, %v1426, 0
        %1430 = vmatprep.subr.mxu0 0.0
        %1431 = vmatpush1.msra.mxu0 %v216
        %1432 = vmatprep.subr.mxu0 0.0
        %1433 = vmatpush1.msra.mxu0 %v217
        %1434 = vmatprep.subr.mxu0 0.0
        %1435 = vmatpush1.msra.mxu0 %v218
        %1436 = vmatprep.subr.mxu0 0.0
        %1437 = vmatpush1.msra.mxu0 %v219
        %1438 = vmatprep.subr.mxu0 0.0
        %1439 = vmatpush1.msra.mxu0 0.0
        %1440 = vmatprep.subr.mxu0 0.0
        %1441 = vmatpush1.msra.mxu0 0.0
        %1442 = vmatprep.subr.mxu0 0.0
        %1443 = vmatpush1.msra.mxu0 0.0
        %1444 = vmatprep.subr.mxu0 0.0
        %1445 = vmatpush1.msra.mxu0 0.0
        %1446 = vmatprep.subr.mxu0 0.0
        %1447 = vmatpush1.msra.mxu0 0.0
        %1448 = vmatprep.subr.mxu0 0.0
        %1449 = vmatpush1.msra.mxu0 0.0
        %1450 = vmatprep.subr.mxu0 0.0
        %1451 = vmatpush1.msra.mxu0 0.0
        %1452 = vmatprep.subr.mxu0 0.0
        %1453 = vmatpush1.msra.mxu0 0.0
        %1454 = vmatprep.subr.mxu0 0.0
        %1455 = vmatpush1.msra.mxu0 0.0
        %1456 = vmatprep.subr.mxu0 0.0
        %1457 = vmatpush1.msra.mxu0 0.0
        %1458 = vmatprep.subr.mxu0 0.0
        %1459 = vmatpush1.msra.mxu0 0.0
        %1460 = vmatprep.subr.mxu0 0.0
        %1461 = vmatpush1.msra.mxu0 0.0
        %1462 = vmatprep.subr.mxu0 0.0
        %1463 = vmatpush1.msra.mxu0 0.0
        %1464 = vmatprep.subr.mxu0 0.0
        %1465 = vmatpush1.msra.mxu0 0.0
        %1466 = vmatprep.subr.mxu0 0.0
        %1467 = vmatpush1.msra.mxu0 0.0
        %1468 = vmatprep.subr.mxu0 0.0
        %1469 = vmatpush1.msra.mxu0 0.0
        %1470 = vmatprep.subr.mxu0 0.0
        %1471 = vmatpush1.msra.mxu0 0.0
        %1472 = vmatprep.subr.mxu0 0.0
        %1473 = vmatpush1.msra.mxu0 0.0
        %1474 = vmatprep.subr.mxu0 0.0
        %1475 = vmatpush1.msra.mxu0 0.0
        %1476 = vmatprep.subr.mxu0 0.0
        %1477 = vmatpush1.msra.mxu0 0.0
        %1478 = vmatprep.subr.mxu0 0.0
        %1479 = vmatpush1.msra.mxu0 0.0
        %1480 = vmatprep.subr.mxu0 0.0
        %1481 = vmatpush1.msra.mxu0 0.0
        %1482 = vmatprep.subr.mxu0 0.0
        %1483 = vmatpush1.msra.mxu0 0.0
        %1484 = vmatprep.subr.mxu0 0.0
        %1485 = vmatpush1.msra.mxu0 0.0
        %1486 = vmatprep.subr.mxu0 0.0
        %1487 = vmatpush1.msra.mxu0 0.0
        %1488 = vmatprep.subr.mxu0 0.0
        %1489 = vmatpush1.msra.mxu0 0.0
        %1490 = vmatprep.subr.mxu0 0.0
        %1491 = vmatpush1.msra.mxu0 0.0
        %1492 = vmatprep.subr.mxu0 0.0
        %1493 = vmatpush1.msra.mxu0 0.0
        %1494 = vmatprep.mubr.f32.mxu0 0.0
        %1495 = vmatmul.mubr.f32.gmra.mrb[0].mxu0 %v1428
        %v1496 = vpop.f32.mrb[0].mxu0
        %v1497 = vadd.f32 0.0, %v1496
        %v1498 = vpop.f32.mrb[0].mxu0
        %1499 = vdwg.mxu0
        %1504 = vrot.lane.b32.xlu0 %v1324, 64
        %v1505 = vpop.permute.xlu0 %1504
        %1506 = vrot.lane.b32.xlu0 %v1325, 64
        %v1507 = vpop.permute.xlu0 %1506
        %1508 = vrot.lane.b32.xlu0 %v1326, 64
        %v1509 = vpop.permute.xlu0 %1508
        %1510 = vrot.lane.b32.xlu0 %v1327, 64
        %v1511 = vpop.permute.xlu0 %1510
        %1516 = vmatprep.subr.mxu0 0.0
        %1517 = vmatpush1.msra.mxu0 %v1505
        %1518 = vmatprep.subr.mxu0 0.0
        %1519 = vmatpush1.msra.mxu0 %v1507
        %1520 = vmatprep.subr.mxu0 0.0
        %1521 = vmatpush1.msra.mxu0 %v1509
        %1522 = vmatprep.subr.mxu0 0.0
        %1523 = vmatpush1.msra.mxu0 %v1511
        %1524 = vmatprep.subr.mxu0 0.0
        %1525 = vmatpush1.msra.mxu0 0.0
        %1526 = vmatprep.subr.mxu0 0.0
        %1527 = vmatpush1.msra.mxu0 0.0
        %1528 = vmatprep.subr.mxu0 0.0
        %1529 = vmatpush1.msra.mxu0 0.0
        %1530 = vmatprep.subr.mxu0 0.0
        %1531 = vmatpush1.msra.mxu0 0.0
        %1532 = vmatprep.subr.mxu0 0.0
        %1533 = vmatpush1.msra.mxu0 0.0
        %1534 = vmatprep.subr.mxu0 0.0
        %1535 = vmatpush1.msra.mxu0 0.0
        %1536 = vmatprep.subr.mxu0 0.0
        %1537 = vmatpush1.msra.mxu0 0.0
        %1538 = vmatprep.subr.mxu0 0.0
        %1539 = vmatpush1.msra.mxu0 0.0
        %1540 = vmatprep.subr.mxu0 0.0
        %1541 = vmatpush1.msra.mxu0 0.0
        %1542 = vmatprep.subr.mxu0 0.0
        %1543 = vmatpush1.msra.mxu0 0.0
        %1544 = vmatprep.subr.mxu0 0.0
        %1545 = vmatpush1.msra.mxu0 0.0
        %1546 = vmatprep.subr.mxu0 0.0
        %1547 = vmatpush1.msra.mxu0 0.0
        %1548 = vmatprep.subr.mxu0 0.0
        %1549 = vmatpush1.msra.mxu0 0.0
        %1550 = vmatprep.subr.mxu0 0.0
        %1551 = vmatpush1.msra.mxu0 0.0
        %1552 = vmatprep.subr.mxu0 0.0
        %1553 = vmatpush1.msra.mxu0 0.0
        %1554 = vmatprep.subr.mxu0 0.0
        %1555 = vmatpush1.msra.mxu0 0.0
        %1556 = vmatprep.subr.mxu0 0.0
        %1557 = vmatpush1.msra.mxu0 0.0
        %1558 = vmatprep.subr.mxu0 0.0
        %1559 = vmatpush1.msra.mxu0 0.0
        %1560 = vmatprep.subr.mxu0 0.0
        %1561 = vmatpush1.msra.mxu0 0.0
        %1562 = vmatprep.subr.mxu0 0.0
        %1563 = vmatpush1.msra.mxu0 0.0
        %1564 = vmatprep.subr.mxu0 0.0
        %1565 = vmatpush1.msra.mxu0 0.0
        %1566 = vmatprep.subr.mxu0 0.0
        %1567 = vmatpush1.msra.mxu0 0.0
        %1568 = vmatprep.subr.mxu0 0.0
        %1569 = vmatpush1.msra.mxu0 0.0
        %1570 = vmatprep.subr.mxu0 0.0
        %1571 = vmatpush1.msra.mxu0 0.0
        %1572 = vmatprep.subr.mxu0 0.0
        %1573 = vmatpush1.msra.mxu0 0.0
        %1574 = vmatprep.subr.mxu0 0.0
        %1575 = vmatpush1.msra.mxu0 0.0
        %1576 = vmatprep.subr.mxu0 0.0
        %1577 = vmatpush1.msra.mxu0 0.0
        %1578 = vmatprep.subr.mxu0 0.0
        %1579 = vmatpush1.msra.mxu0 0.0
        %1580 = vmatprep.mubr.f32.mxu0 0.0
        %1581 = vmatmul.mubr.f32.gmra.mrb[0].mxu0 %v1428
        %v1582 = vpop.f32.mrb[0].mxu0
        %v1583 = vadd.f32 0.0, %v1582
        %v1584 = vpop.f32.mrb[0].mxu0
        %1585 = vdwg.mxu0
        %v1586 = vrcp.pop %v1497
        %v1587 = vmul.f32 %v1583, %v1586
        %v1588 = vpack.c.bf16 %v1587, %v1587
        %v1589 = vld [vmem:[%s1 + $0xd8] sm:$0xf]
        %v1590 = vld [vmem:[%s1 + $0xdc] sm:$0xf]
        %v1591 = vld [vmem:[%s1 + $0xe0] sm:$0xf]
        %v1592 = vld [vmem:[%s1 + $0xe4] sm:$0xf]
        %v1593 = vld [vmem:[%s2 + $0x70] sm:$0x1]
        %v1594 = vlaneseq
        %v1595 = vshrl.u32 %v1594, 7
        %v1596 = vsub.s32 0, %v1595
        %v1597 = vrot.slane %v1593, %v1596
        %v1602 = vunpack.c.l.b16 %v1589
        %v1603 = vunpack.c.l.b16 %v1590
        %v1604 = vunpack.c.l.b16 %v1591
        %v1605 = vunpack.c.l.b16 %v1592
        %v1606 = vpack.c.b16 %v1603, %v1602
        %v1607 = vpack.c.b16 %v1605, %v1604
        %v1611 = vsel %vm471, %v1588, 0
        %1613 = vmatprep.subr.bf16.mxu0 0
        %1614 = vmatpush1.bf16.msra.mxu0 %v1606
        %1615 = vmatprep.subr.bf16.mxu0 0
        %1616 = vmatpush1.bf16.msra.mxu0 %v1607
        %1617 = vmatprep.subr.bf16.mxu0 0
        %1618 = vmatpush1.bf16.msra.mxu0 0
        %1619 = vmatprep.subr.bf16.mxu0 0
        %1620 = vmatpush1.bf16.msra.mxu0 0
        %1621 = vmatprep.subr.bf16.mxu0 0
        %1622 = vmatpush1.bf16.msra.mxu0 0
        %1623 = vmatprep.subr.bf16.mxu0 0
        %1624 = vmatpush1.bf16.msra.mxu0 0
        %1625 = vmatprep.subr.bf16.mxu0 0
        %1626 = vmatpush1.bf16.msra.mxu0 0
        %1627 = vmatprep.subr.bf16.mxu0 0
        %1628 = vmatpush1.bf16.msra.mxu0 0
        %1629 = vmatprep.subr.bf16.mxu0 0
        %1630 = vmatpush1.bf16.msra.mxu0 0
        %1631 = vmatprep.subr.bf16.mxu0 0
        %1632 = vmatpush1.bf16.msra.mxu0 0
        %1633 = vmatprep.subr.bf16.mxu0 0
        %1634 = vmatpush1.bf16.msra.mxu0 0
        %1635 = vmatprep.subr.bf16.mxu0 0
        %1636 = vmatpush1.bf16.msra.mxu0 0
        %1637 = vmatprep.subr.bf16.mxu0 0
        %1638 = vmatpush1.bf16.msra.mxu0 0
        %1639 = vmatprep.subr.bf16.mxu0 0
        %1640 = vmatpush1.bf16.msra.mxu0 0
        %1641 = vmatprep.subr.bf16.mxu0 0
        %1642 = vmatpush1.bf16.msra.mxu0 0
        %1643 = vmatprep.subr.bf16.mxu0 0
        %1644 = vmatpush1.bf16.msra.mxu0 0
        %1645 = vmatprep.mubr.bf16.mxu0 0
        %1646 = vmatmul.mubr.bf16.gmra.mrb[0].mxu0 %v1611
        %v1647 = vpop.f32.mrb[0].mxu0
        %v1648 = vadd.f32 %v1597, %v1647
        %v1649 = vpop.f32.mrb[0].mxu0
        %v1650 = vpop.f32.mrb[0].mxu0
        %v1651 = vpop.f32.mrb[0].mxu0
        %1652 = vdwg.mxu0
        %v1653 = vadd.f32 %v1648, 0.0
        %v1654 = vld [vmem:[%s2 + $0xa8] sm:$0x1]
        %v1655 = vld [vmem:[%s2 + $0xb0] sm:$0x1]
        %v1656 = vsel %vm471, %v1653, 0.0
        %1657 = vadd.xlane.f32.xlu0 %v1656
        %v1658 = vpop.xlane.xlu0 %1657
        %v1659 = vmul.f32 %v1658, %v993
        %v1660 = vmul.f32 %v1653, %v1653
        %v1661 = vsel %vm471, %v1660, 0.0
        %1662 = vadd.xlane.f32.xlu0 %v1661
        %v1663 = vpop.xlane.xlu0 %1662
        %v1664 = vmul.f32 %v1663, %v993
        %v1665 = vmul.f32 %v1659, %v1659
        %v1666 = vsub.f32 %v1664, %v1665
        %v1667 = vsub.f32 %v1653, %v1659
        %v1668 = vadd.f32 %v1666, 1e-05
        %v1669 = vrsqrt.pop %v1668
        %v1670 = vmul.f32 %v1667, %v1669
        %v1671 = vlaneseq
        %v1672 = vshrl.u32 %v1671, 7
        %v1673 = vsub.s32 0, %v1672
        %v1674 = vrot.slane %v1654, %v1673
        %v1675 = vmul.f32 %v1670, %v1674
        %v1676 = vlaneseq
        %v1677 = vshrl.u32 %v1676, 7
        %v1678 = vsub.s32 0, %v1677
        %v1679 = vrot.slane %v1655, %v1678
        %v1680 = vadd.f32 %v1675, %v1679
        %v1681 = vpack.c.bf16 %v1680, %v1680
        %v1682 = vld [vmem:[%s1 + $0xe8] sm:$0xf]
        %v1683 = vld [vmem:[%s1 + $0xec] sm:$0xf]
        %v1684 = vld [vmem:[%s1 + $0xf0] sm:$0xf]
        %v1685 = vld [vmem:[%s1 + $0xf4] sm:$0xf]
        %v1686 = vld [vmem:[%s2 + $0x78] sm:$0x1]
        %v1687 = vlaneseq
        %v1688 = vshrl.u32 %v1687, 7
        %v1689 = vsub.s32 0, %v1688
        %v1690 = vrot.slane %v1686, %v1689
        %v1695 = vunpack.c.l.b16 %v1682
        %v1696 = vunpack.c.l.b16 %v1683
        %v1697 = vunpack.c.l.b16 %v1684
        %v1698 = vunpack.c.l.b16 %v1685
        %v1699 = vpack.c.b16 %v1696, %v1695
        %v1700 = vpack.c.b16 %v1698, %v1697
        %v1704 = vsel %vm471, %v1681, 0
        %1706 = vmatprep.subr.bf16.mxu0 0
        %1707 = vmatpush1.bf16.msra.mxu0 %v1699
        %1708 = vmatprep.subr.bf16.mxu0 0
        %1709 = vmatpush1.bf16.msra.mxu0 %v1700
        %1710 = vmatprep.subr.bf16.mxu0 0
        %1711 = vmatpush1.bf16.msra.mxu0 0
        %1712 = vmatprep.subr.bf16.mxu0 0
        %1713 = vmatpush1.bf16.msra.mxu0 0
        %1714 = vmatprep.subr.bf16.mxu0 0
        %1715 = vmatpush1.bf16.msra.mxu0 0
        %1716 = vmatprep.subr.bf16.mxu0 0
        %1717 = vmatpush1.bf16.msra.mxu0 0
        %1718 = vmatprep.subr.bf16.mxu0 0
        %1719 = vmatpush1.bf16.msra.mxu0 0
        %1720 = vmatprep.subr.bf16.mxu0 0
        %1721 = vmatpush1.bf16.msra.mxu0 0
        %1722 = vmatprep.subr.bf16.mxu0 0
        %1723 = vmatpush1.bf16.msra.mxu0 0
        %1724 = vmatprep.subr.bf16.mxu0 0
        %1725 = vmatpush1.bf16.msra.mxu0 0
        %1726 = vmatprep.subr.bf16.mxu0 0
        %1727 = vmatpush1.bf16.msra.mxu0 0
        %1728 = vmatprep.subr.bf16.mxu0 0
        %1729 = vmatpush1.bf16.msra.mxu0 0
        %1730 = vmatprep.subr.bf16.mxu0 0
        %1731 = vmatpush1.bf16.msra.mxu0 0
        %1732 = vmatprep.subr.bf16.mxu0 0
        %1733 = vmatpush1.bf16.msra.mxu0 0
        %1734 = vmatprep.subr.bf16.mxu0 0
        %1735 = vmatpush1.bf16.msra.mxu0 0
        %1736 = vmatprep.subr.bf16.mxu0 0
        %1737 = vmatpush1.bf16.msra.mxu0 0
        %1738 = vmatprep.mubr.bf16.mxu0 0
        %1739 = vmatmul.mubr.bf16.gmra.mrb[0].mxu0 %v1704
        %v1740 = vpop.f32.mrb[0].mxu0
        %v1741 = vadd.f32 %v1690, %v1740
        %v1742 = vpop.f32.mrb[0].mxu0
        %v1743 = vpop.f32.mrb[0].mxu0
        %v1744 = vpop.f32.mrb[0].mxu0
        %1745 = vdwg.mxu0
        %v1746 = vld [vmem:[%s2 + $0x80] sm:$0xff]
        %v1747 = vadd.f32 %v1741, %v1746
        %v1748 = vpack.c.bf16 %v1225, %v1224
        %v1749 = vld [vmem:[%s1 + $0xf8] sm:$0xf]
        %v1750 = vld [vmem:[%s1 + $0xfc] sm:$0xf]
        %v1751 = vld [vmem:[%s1 + $0x100] sm:$0xf]
        %v1752 = vld [vmem:[%s1 + $0x104] sm:$0xf]
        %v1753 = vld [vmem:[%s2 + $0x88] sm:$0x1]
        %v1754 = vlaneseq
        %v1755 = vshrl.u32 %v1754, 7
        %v1756 = vsub.s32 0, %v1755
        %v1757 = vrot.slane %v1753, %v1756
        %v1762 = vunpack.c.l.b16 %v1749
        %v1763 = vunpack.c.l.b16 %v1750
        %v1764 = vunpack.c.l.b16 %v1751
        %v1765 = vunpack.c.l.b16 %v1752
        %v1766 = vpack.c.b16 %v1763, %v1762
        %v1767 = vpack.c.b16 %v1765, %v1764
        %v1771 = vsel %vm471, %v1748, 0
        %1773 = vmatprep.subr.bf16.mxu0 0
        %1774 = vmatpush1.bf16.msra.mxu0 %v1766
        %1775 = vmatprep.subr.bf16.mxu0 0
        %1776 = vmatpush1.bf16.msra.mxu0 %v1767
        %1777 = vmatprep.subr.bf16.mxu0 0
        %1778 = vmatpush1.bf16.msra.mxu0 0
        %1779 = vmatprep.subr.bf16.mxu0 0
        %1780 = vmatpush1.bf16.msra.mxu0 0
        %1781 = vmatprep.subr.bf16.mxu0 0
        %1782 = vmatpush1.bf16.msra.mxu0 0
        %1783 = vmatprep.subr.bf16.mxu0 0
        %1784 = vmatpush1.bf16.msra.mxu0 0
        %1785 = vmatprep.subr.bf16.mxu0 0
        %1786 = vmatpush1.bf16.msra.mxu0 0
        %1787 = vmatprep.subr.bf16.mxu0 0
        %1788 = vmatpush1.bf16.msra.mxu0 0
        %1789 = vmatprep.subr.bf16.mxu0 0
        %1790 = vmatpush1.bf16.msra.mxu0 0
        %1791 = vmatprep.subr.bf16.mxu0 0
        %1792 = vmatpush1.bf16.msra.mxu0 0
        %1793 = vmatprep.subr.bf16.mxu0 0
        %1794 = vmatpush1.bf16.msra.mxu0 0
        %1795 = vmatprep.subr.bf16.mxu0 0
        %1796 = vmatpush1.bf16.msra.mxu0 0
        %1797 = vmatprep.subr.bf16.mxu0 0
        %1798 = vmatpush1.bf16.msra.mxu0 0
        %1799 = vmatprep.subr.bf16.mxu0 0
        %1800 = vmatpush1.bf16.msra.mxu0 0
        %1801 = vmatprep.subr.bf16.mxu0 0
        %1802 = vmatpush1.bf16.msra.mxu0 0
        %1803 = vmatprep.subr.bf16.mxu0 0
        %1804 = vmatpush1.bf16.msra.mxu0 0
        %1805 = vmatprep.mubr.bf16.mxu0 0
        %1806 = vmatmul.mubr.bf16.gmra.mrb[0].mxu0 %v1771
        %v1807 = vpop.f32.mrb[0].mxu0
        %v1808 = vadd.f32 %v1757, %v1807
        %v1809 = vpop.f32.mrb[0].mxu0
        %v1810 = vpop.f32.mrb[0].mxu0
        %v1811 = vadd.f32 %v1757, %v1810
        %v1812 = vpop.f32.mrb[0].mxu0
        %1813 = vdwg.mxu0
        %v1814 = vld [vmem:[%s2 + $0x90] sm:$0xff]
        %v1815 = vld [vmem:[%s2 + $0x98] sm:$0xff]
        %v1816 = vadd.f32 %v1808, %v1814
        %v1817 = vadd.f32 %v1811, %v1815
        %v1818 = vmul.f32 %v1816, %v208
        %v1819 = vmul.f32 %v1817, %v209
        %v1820 = vmul.f32 %v1816, %v210
        %v1821 = vmul.f32 %v1817, %v211
        %v1822 = vmul.f32 %v1816, %v212
        %v1823 = vmul.f32 %v1817, %v213
        %v1824 = vmul.f32 %v1816, %v214
        %v1825 = vmul.f32 %v1817, %v215
        %v1826 = vmul.f32 %v1816, %v529
        %v1827 = vmul.f32 %v1817, %v531
        %v1828 = vmul.f32 %v1816, %v533
        %v1829 = vmul.f32 %v1817, %v535
        %v1830 = vmul.f32 %v1816, %v537
        %v1831 = vmul.f32 %v1817, %v539
        %v1832 = vmul.f32 %v1816, %v541
        %v1833 = vmul.f32 %v1817, %v543
        %v1835 = vsel %vm471, %v1747, 0
        %v1838 = vsel %vm471, %v1818, 0
        %v1841 = vsel %vm471, %v1819, 0
        %v1844 = vsel %vm471, %v1820, 0
        %v1847 = vsel %vm471, %v1821, 0
        %v1850 = vsel %vm471, %v1822, 0
        %v1853 = vsel %vm471, %v1823, 0
        %v1856 = vsel %vm471, %v1824, 0
        %v1859 = vsel %vm471, %v1825, 0
        %1861 = vmatprep.subr.mxu0 0.0
        %1862 = vmatpush1.xpose.msra.mxu0 %v1838
        %1863 = vmatprep.subr.mxu0 0.0
        %1864 = vmatpush1.xpose.msra.mxu0 %v1841
        %1865 = vmatprep.subr.mxu0 0.0
        %1866 = vmatpush1.xpose.msra.mxu0 %v1844
        %1867 = vmatprep.subr.mxu0 0.0
        %1868 = vmatpush1.xpose.msra.mxu0 %v1847
        %1869 = vmatprep.subr.mxu0 0.0
        %1870 = vmatpush1.xpose.msra.mxu0 %v1850
        %1871 = vmatprep.subr.mxu0 0.0
        %1872 = vmatpush1.xpose.msra.mxu0 %v1853
        %1873 = vmatprep.subr.mxu0 0.0
        %1874 = vmatpush1.xpose.msra.mxu0 %v1856
        %1875 = vmatprep.subr.mxu0 0.0
        %1876 = vmatpush1.xpose.msra.mxu0 %v1859
        %1877 = vmatprep.subr.mxu0 0.0
        %1878 = vmatpush1.xpose.msra.mxu0 0.0
        %1879 = vmatprep.subr.mxu0 0.0
        %1880 = vmatpush1.xpose.msra.mxu0 0.0
        %1881 = vmatprep.subr.mxu0 0.0
        %1882 = vmatpush1.xpose.msra.mxu0 0.0
        %1883 = vmatprep.subr.mxu0 0.0
        %1884 = vmatpush1.xpose.msra.mxu0 0.0
        %1885 = vmatprep.subr.mxu0 0.0
        %1886 = vmatpush1.xpose.msra.mxu0 0.0
        %1887 = vmatprep.subr.mxu0 0.0
        %1888 = vmatpush1.xpose.msra.mxu0 0.0
        %1889 = vmatprep.subr.mxu0 0.0
        %1890 = vmatpush1.xpose.msra.mxu0 0.0
        %1891 = vmatprep.subr.mxu0 0.0
        %1892 = vmatpush1.xpose.msra.mxu0 0.0
        %1893 = vmatprep.subr.mxu0 0.0
        %1894 = vmatpush1.xpose.msra.mxu0 0.0
        %1895 = vmatprep.subr.mxu0 0.0
        %1896 = vmatpush1.xpose.msra.mxu0 0.0
        %1897 = vmatprep.subr.mxu0 0.0
        %1898 = vmatpush1.xpose.msra.mxu0 0.0
        %1899 = vmatprep.subr.mxu0 0.0
        %1900 = vmatpush1.xpose.msra.mxu0 0.0
        %1901 = vmatprep.subr.mxu0 0.0
        %1902 = vmatpush1.xpose.msra.mxu0 0.0
        %1903 = vmatprep.subr.mxu0 0.0
        %1904 = vmatpush1.xpose.msra.mxu0 0.0
        %1905 = vmatprep.subr.mxu0 0.0
        %1906 = vmatpush1.xpose.msra.mxu0 0.0
        %1907 = vmatprep.subr.mxu0 0.0
        %1908 = vmatpush1.xpose.msra.mxu0 0.0
        %1909 = vmatprep.subr.mxu0 0.0
        %1910 = vmatpush1.xpose.msra.mxu0 0.0
        %1911 = vmatprep.subr.mxu0 0.0
        %1912 = vmatpush1.xpose.msra.mxu0 0.0
        %1913 = vmatprep.subr.mxu0 0.0
        %1914 = vmatpush1.xpose.msra.mxu0 0.0
        %1915 = vmatprep.subr.mxu0 0.0
        %1916 = vmatpush1.xpose.msra.mxu0 0.0
        %1917 = vmatprep.subr.mxu0 0.0
        %1918 = vmatpush1.xpose.msra.mxu0 0.0
        %1919 = vmatprep.subr.mxu0 0.0
        %1920 = vmatpush1.xpose.msra.mxu0 0.0
        %1921 = vmatprep.subr.mxu0 0.0
        %1922 = vmatpush1.xpose.msra.mxu0 0.0
        %1923 = vmatprep.subr.mxu0 0.0
        %1924 = vmatpush1.xpose.msra.mxu0 0.0
        %1925 = vmatprep.mubr.f32.mxu0 0.0
        %1926 = vmatmul.mubr.f32.gmra.mrb[0].mxu0 %v1835
        %v1927 = vpop.f32.mrb[0].mxu0
        %v1928 = vadd.f32 0.0, %v1927
        %v1929 = vpop.f32.mrb[0].mxu0
        %1930 = vdwg.mxu0
        %v1931 = vsel %vm327, %v1928, -inf
        %1932 = vmax.xlane.f32.xlu0 %v1931
        %v1933 = vpop.xlane.xlu0 %1932
        %v1934 = vsub.f32 %v1928, %v1933
        %v1935 = vmul.f32 %v1934, 1.442695
        %v1936 = vpow.pop %v1935
        %v1938 = vsel %vm327, %v1936, 0
        %1940 = vmatprep.subr.mxu0 0.0
        %1941 = vmatpush1.msra.mxu0 %v208
        %1942 = vmatprep.subr.mxu0 0.0
        %1943 = vmatpush1.msra.mxu0 %v209
        %1944 = vmatprep.subr.mxu0 0.0
        %1945 = vmatpush1.msra.mxu0 %v210
        %1946 = vmatprep.subr.mxu0 0.0
        %1947 = vmatpush1.msra.mxu0 %v211
        %1948 = vmatprep.subr.mxu0 0.0
        %1949 = vmatpush1.msra.mxu0 %v212
        %1950 = vmatprep.subr.mxu0 0.0
        %1951 = vmatpush1.msra.mxu0 %v213
        %1952 = vmatprep.subr.mxu0 0.0
        %1953 = vmatpush1.msra.mxu0 %v214
        %1954 = vmatprep.subr.mxu0 0.0
        %1955 = vmatpush1.msra.mxu0 %v215
        %1956 = vmatprep.subr.mxu0 0.0
        %1957 = vmatpush1.msra.mxu0 0.0
        %1958 = vmatprep.subr.mxu0 0.0
        %1959 = vmatpush1.msra.mxu0 0.0
        %1960 = vmatprep.subr.mxu0 0.0
        %1961 = vmatpush1.msra.mxu0 0.0
        %1962 = vmatprep.subr.mxu0 0.0
        %1963 = vmatpush1.msra.mxu0 0.0
        %1964 = vmatprep.subr.mxu0 0.0
        %1965 = vmatpush1.msra.mxu0 0.0
        %1966 = vmatprep.subr.mxu0 0.0
        %1967 = vmatpush1.msra.mxu0 0.0
        %1968 = vmatprep.subr.mxu0 0.0
        %1969 = vmatpush1.msra.mxu0 0.0
        %1970 = vmatprep.subr.mxu0 0.0
        %1971 = vmatpush1.msra.mxu0 0.0
        %1972 = vmatprep.subr.mxu0 0.0
        %1973 = vmatpush1.msra.mxu0 0.0
        %1974 = vmatprep.subr.mxu0 0.0
        %1975 = vmatpush1.msra.mxu0 0.0
        %1976 = vmatprep.subr.mxu0 0.0
        %1977 = vmatpush1.msra.mxu0 0.0
        %1978 = vmatprep.subr.mxu0 0.0
        %1979 = vmatpush1.msra.mxu0 0.0
        %1980 = vmatprep.subr.mxu0 0.0
        %1981 = vmatpush1.msra.mxu0 0.0
        %1982 = vmatprep.subr.mxu0 0.0
        %1983 = vmatpush1.msra.mxu0 0.0
        %1984 = vmatprep.subr.mxu0 0.0
        %1985 = vmatpush1.msra.mxu0 0.0
        %1986 = vmatprep.subr.mxu0 0.0
        %1987 = vmatpush1.msra.mxu0 0.0
        %1988 = vmatprep.subr.mxu0 0.0
        %1989 = vmatpush1.msra.mxu0 0.0
        %1990 = vmatprep.subr.mxu0 0.0
        %1991 = vmatpush1.msra.mxu0 0.0
        %1992 = vmatprep.subr.mxu0 0.0
        %1993 = vmatpush1.msra.mxu0 0.0
        %1994 = vmatprep.subr.mxu0 0.0
        %1995 = vmatpush1.msra.mxu0 0.0
        %1996 = vmatprep.subr.mxu0 0.0
        %1997 = vmatpush1.msra.mxu0 0.0
        %1998 = vmatprep.subr.mxu0 0.0
        %1999 = vmatpush1.msra.mxu0 0.0
        %2000 = vmatprep.subr.mxu0 0.0
        %2001 = vmatpush1.msra.mxu0 0.0
        %2002 = vmatprep.subr.mxu0 0.0
        %2003 = vmatpush1.msra.mxu0 0.0
        %2004 = vmatprep.mubr.f32.mxu0 0.0
        %2005 = vmatmul.mubr.f32.gmra.mrb[0].mxu0 %v1938
        %v2006 = vpop.f32.mrb[0].mxu0
        %v2007 = vadd.f32 0.0, %v2006
        %v2008 = vpop.f32.mrb[0].mxu0
        %2009 = vdwg.mxu0
        %2018 = vrot.lane.b32.xlu0 %v1826, 96
        %v2019 = vpop.permute.xlu0 %2018
        %2020 = vrot.lane.b32.xlu0 %v1827, 96
        %v2021 = vpop.permute.xlu0 %2020
        %2022 = vrot.lane.b32.xlu0 %v1828, 96
        %v2023 = vpop.permute.xlu0 %2022
        %2024 = vrot.lane.b32.xlu0 %v1829, 96
        %v2025 = vpop.permute.xlu0 %2024
        %2026 = vrot.lane.b32.xlu0 %v1830, 96
        %v2027 = vpop.permute.xlu0 %2026
        %2028 = vrot.lane.b32.xlu0 %v1831, 96
        %v2029 = vpop.permute.xlu0 %2028
        %2030 = vrot.lane.b32.xlu0 %v1832, 96
        %v2031 = vpop.permute.xlu0 %2030
        %2032 = vrot.lane.b32.xlu0 %v1833, 96
        %v2033 = vpop.permute.xlu0 %2032
        %2042 = vmatprep.subr.mxu0 0.0
        %2043 = vmatpush1.msra.mxu0 %v2019
        %2044 = vmatprep.subr.mxu0 0.0
        %2045 = vmatpush1.msra.mxu0 %v2021
        %2046 = vmatprep.subr.mxu0 0.0
        %2047 = vmatpush1.msra.mxu0 %v2023
        %2048 = vmatprep.subr.mxu0 0.0
        %2049 = vmatpush1.msra.mxu0 %v2025
        %2050 = vmatprep.subr.mxu0 0.0
        %2051 = vmatpush1.msra.mxu0 %v2027
        %2052 = vmatprep.subr.mxu0 0.0
        %2053 = vmatpush1.msra.mxu0 %v2029
        %2054 = vmatprep.subr.mxu0 0.0
        %2055 = vmatpush1.msra.mxu0 %v2031
        %2056 = vmatprep.subr.mxu0 0.0
        %2057 = vmatpush1.msra.mxu0 %v2033
        %2058 = vmatprep.subr.mxu0 0.0
        %2059 = vmatpush1.msra.mxu0 0.0
        %2060 = vmatprep.subr.mxu0 0.0
        %2061 = vmatpush1.msra.mxu0 0.0
        %2062 = vmatprep.subr.mxu0 0.0
        %2063 = vmatpush1.msra.mxu0 0.0
        %2064 = vmatprep.subr.mxu0 0.0
        %2065 = vmatpush1.msra.mxu0 0.0
        %2066 = vmatprep.subr.mxu0 0.0
        %2067 = vmatpush1.msra.mxu0 0.0
        %2068 = vmatprep.subr.mxu0 0.0
        %2069 = vmatpush1.msra.mxu0 0.0
        %2070 = vmatprep.subr.mxu0 0.0
        %2071 = vmatpush1.msra.mxu0 0.0
        %2072 = vmatprep.subr.mxu0 0.0
        %2073 = vmatpush1.msra.mxu0 0.0
        %2074 = vmatprep.subr.mxu0 0.0
        %2075 = vmatpush1.msra.mxu0 0.0
        %2076 = vmatprep.subr.mxu0 0.0
        %2077 = vmatpush1.msra.mxu0 0.0
        %2078 = vmatprep.subr.mxu0 0.0
        %2079 = vmatpush1.msra.mxu0 0.0
        %2080 = vmatprep.subr.mxu0 0.0
        %2081 = vmatpush1.msra.mxu0 0.0
        %2082 = vmatprep.subr.mxu0 0.0
        %2083 = vmatpush1.msra.mxu0 0.0
        %2084 = vmatprep.subr.mxu0 0.0
        %2085 = vmatpush1.msra.mxu0 0.0
        %2086 = vmatprep.subr.mxu0 0.0
        %2087 = vmatpush1.msra.mxu0 0.0
        %2088 = vmatprep.subr.mxu0 0.0
        %2089 = vmatpush1.msra.mxu0 0.0
        %2090 = vmatprep.subr.mxu0 0.0
        %2091 = vmatpush1.msra.mxu0 0.0
        %2092 = vmatprep.subr.mxu0 0.0
        %2093 = vmatpush1.msra.mxu0 0.0
        %2094 = vmatprep.subr.mxu0 0.0
        %2095 = vmatpush1.msra.mxu0 0.0
        %2096 = vmatprep.subr.mxu0 0.0
        %2097 = vmatpush1.msra.mxu0 0.0
        %2098 = vmatprep.subr.mxu0 0.0
        %2099 = vmatpush1.msra.mxu0 0.0
        %2100 = vmatprep.subr.mxu0 0.0
        %2101 = vmatpush1.msra.mxu0 0.0
        %2102 = vmatprep.subr.mxu0 0.0
        %2103 = vmatpush1.msra.mxu0 0.0
        %2104 = vmatprep.subr.mxu0 0.0
        %2105 = vmatpush1.msra.mxu0 0.0
        %2106 = vmatprep.mubr.f32.mxu0 0.0
        %2107 = vmatmul.mubr.f32.gmra.mrb[0].mxu0 %v1938
        %v2108 = vpop.f32.mrb[0].mxu0
        %v2109 = vadd.f32 0.0, %v2108
        %v2110 = vpop.f32.mrb[0].mxu0
        %2111 = vdwg.mxu0
        %v2112 = vrcp.pop %v2007
        %v2113 = vmul.f32 %v2109, %v2112
        %v2114 = vpack.c.bf16 %v2113, %v2113
        %v2115 = vld [vmem:[%s1 + $0x108] sm:$0xf]
        %v2116 = vld [vmem:[%s1 + $0x10c] sm:$0xf]
        %v2117 = vld [vmem:[%s1 + $0x110] sm:$0xf]
        %v2118 = vld [vmem:[%s1 + $0x114] sm:$0xf]
        %v2119 = vld [vmem:[%s2 + $0xa0] sm:$0x1]
        %v2120 = vlaneseq
        %v2121 = vshrl.u32 %v2120, 7
        %v2122 = vsub.s32 0, %v2121
        %v2123 = vrot.slane %v2119, %v2122
        %v2128 = vunpack.c.l.b16 %v2115
        %v2129 = vunpack.c.l.b16 %v2116
        %v2130 = vunpack.c.l.b16 %v2117
        %v2131 = vunpack.c.l.b16 %v2118
        %v2132 = vpack.c.b16 %v2129, %v2128
        %v2133 = vpack.c.b16 %v2131, %v2130
        %v2137 = vsel %vm471, %v2114, 0
        %2139 = vmatprep.subr.bf16.mxu0 0
        %2140 = vmatpush1.bf16.msra.mxu0 %v2132
        %2141 = vmatprep.subr.bf16.mxu0 0
        %2142 = vmatpush1.bf16.msra.mxu0 %v2133
        %2143 = vmatprep.subr.bf16.mxu0 0
        %2144 = vmatpush1.bf16.msra.mxu0 0
        %2145 = vmatprep.subr.bf16.mxu0 0
        %2146 = vmatpush1.bf16.msra.mxu0 0
        %2147 = vmatprep.subr.bf16.mxu0 0
        %2148 = vmatpush1.bf16.msra.mxu0 0
        %2149 = vmatprep.subr.bf16.mxu0 0
        %2150 = vmatpush1.bf16.msra.mxu0 0
        %2151 = vmatprep.subr.bf16.mxu0 0
        %2152 = vmatpush1.bf16.msra.mxu0 0
        %2153 = vmatprep.subr.bf16.mxu0 0
        %2154 = vmatpush1.bf16.msra.mxu0 0
        %2155 = vmatprep.subr.bf16.mxu0 0
        %2156 = vmatpush1.bf16.msra.mxu0 0
        %2157 = vmatprep.subr.bf16.mxu0 0
        %2158 = vmatpush1.bf16.msra.mxu0 0
        %2159 = vmatprep.subr.bf16.mxu0 0
        %2160 = vmatpush1.bf16.msra.mxu0 0
        %2161 = vmatprep.subr.bf16.mxu0 0
        %2162 = vmatpush1.bf16.msra.mxu0 0
        %2163 = vmatprep.subr.bf16.mxu0 0
        %2164 = vmatpush1.bf16.msra.mxu0 0
        %2165 = vmatprep.subr.bf16.mxu0 0
        %2166 = vmatpush1.bf16.msra.mxu0 0
        %2167 = vmatprep.subr.bf16.mxu0 0
        %2168 = vmatpush1.bf16.msra.mxu0 0
        %2169 = vmatprep.subr.bf16.mxu0 0
        %2170 = vmatpush1.bf16.msra.mxu0 0
        %2171 = vmatprep.mubr.bf16.mxu0 0
        %2172 = vmatmul.mubr.bf16.gmra.mrb[0].mxu0 %v2137
        %v2173 = vpop.f32.mrb[0].mxu0
        %v2174 = vadd.f32 %v2123, %v2173
        %v2175 = vpop.f32.mrb[0].mxu0
        %v2176 = vpop.f32.mrb[0].mxu0
        %v2177 = vpop.f32.mrb[0].mxu0
        %2178 = vdwg.mxu0
        %v2179 = vadd.f32 %v1680, %v2174
        %v2180 = vld [vmem:[%s2 + $0xb8] sm:$0x1]
        %v2181 = vld [vmem:[%s2 + $0xc0] sm:$0x1]
        %v2182 = vsel %vm471, %v2179, 0.0
        %2183 = vadd.xlane.f32.xlu0 %v2182
        %v2184 = vpop.xlane.xlu0 %2183
        %v2185 = vmul.f32 %v2184, %v993
        %v2186 = vmul.f32 %v2179, %v2179
        %v2187 = vsel %vm471, %v2186, 0.0
        %2188 = vadd.xlane.f32.xlu0 %v2187
        %v2189 = vpop.xlane.xlu0 %2188
        %v2190 = vmul.f32 %v2189, %v993
        %v2191 = vmul.f32 %v2185, %v2185
        %v2192 = vsub.f32 %v2190, %v2191
        %v2193 = vsub.f32 %v2179, %v2185
        %v2194 = vadd.f32 %v2192, 1e-05
        %v2195 = vrsqrt.pop %v2194
        %v2196 = vmul.f32 %v2193, %v2195
        %v2197 = vlaneseq
        %v2198 = vshrl.u32 %v2197, 7
        %v2199 = vsub.s32 0, %v2198
        %v2200 = vrot.slane %v2180, %v2199
        %v2201 = vmul.f32 %v2196, %v2200
        %v2202 = vlaneseq
        %v2203 = vshrl.u32 %v2202, 7
        %v2204 = vsub.s32 0, %v2203
        %v2205 = vrot.slane %v2181, %v2204
        %v2206 = vadd.f32 %v2201, %v2205
        %v2207 = vpack.c.bf16 %v2206, %v2206
        %v2208 = vld [vmem:[%s1 + $0x118] sm:$0xf]
        %v2209 = vld [vmem:[%s1 + $0x11c] sm:$0xf]
        %v2210 = vld [vmem:[%s1 + $0x120] sm:$0xf]
        %v2211 = vld [vmem:[%s1 + $0x124] sm:$0xf]
        %v2212 = vld [vmem:[%s2 + $0xc8] sm:$0x1]
        %v2213 = vlaneseq
        %v2214 = vshrl.u32 %v2213, 7
        %v2215 = vsub.s32 0, %v2214
        %v2216 = vrot.slane %v2212, %v2215
        %v2221 = vunpack.c.l.b16 %v2208
        %v2222 = vunpack.c.l.b16 %v2209
        %v2223 = vunpack.c.l.b16 %v2210
        %v2224 = vunpack.c.l.b16 %v2211
        %v2225 = vpack.c.b16 %v2222, %v2221
        %v2226 = vpack.c.b16 %v2224, %v2223
        %v2230 = vsel %vm471, %v2207, 0
        %2232 = vmatprep.subr.bf16.mxu0 0
        %2233 = vmatpush1.bf16.msra.mxu0 %v2225
        %2234 = vmatprep.subr.bf16.mxu0 0
        %2235 = vmatpush1.bf16.msra.mxu0 %v2226
        %2236 = vmatprep.subr.bf16.mxu0 0
        %2237 = vmatpush1.bf16.msra.mxu0 0
        %2238 = vmatprep.subr.bf16.mxu0 0
        %2239 = vmatpush1.bf16.msra.mxu0 0
        %2240 = vmatprep.subr.bf16.mxu0 0
        %2241 = vmatpush1.bf16.msra.mxu0 0
        %2242 = vmatprep.subr.bf16.mxu0 0
        %2243 = vmatpush1.bf16.msra.mxu0 0
        %2244 = vmatprep.subr.bf16.mxu0 0
        %2245 = vmatpush1.bf16.msra.mxu0 0
        %2246 = vmatprep.subr.bf16.mxu0 0
        %2247 = vmatpush1.bf16.msra.mxu0 0
        %2248 = vmatprep.subr.bf16.mxu0 0
        %2249 = vmatpush1.bf16.msra.mxu0 0
        %2250 = vmatprep.subr.bf16.mxu0 0
        %2251 = vmatpush1.bf16.msra.mxu0 0
        %2252 = vmatprep.subr.bf16.mxu0 0
        %2253 = vmatpush1.bf16.msra.mxu0 0
        %2254 = vmatprep.subr.bf16.mxu0 0
        %2255 = vmatpush1.bf16.msra.mxu0 0
        %2256 = vmatprep.subr.bf16.mxu0 0
        %2257 = vmatpush1.bf16.msra.mxu0 0
        %2258 = vmatprep.subr.bf16.mxu0 0
        %2259 = vmatpush1.bf16.msra.mxu0 0
        %2260 = vmatprep.subr.bf16.mxu0 0
        %2261 = vmatpush1.bf16.msra.mxu0 0
        %2262 = vmatprep.subr.bf16.mxu0 0
        %2263 = vmatpush1.bf16.msra.mxu0 0
        %2264 = vmatprep.mubr.bf16.mxu0 0
        %2265 = vmatmul.mubr.bf16.gmra.mrb[0].mxu0 %v2230
        %v2266 = vpop.f32.mrb[0].mxu0
        %v2267 = vadd.f32 %v2216, %v2266
        %v2268 = vpop.f32.mrb[0].mxu0
        %v2269 = vpop.f32.mrb[0].mxu0
        %v2270 = vpop.f32.mrb[0].mxu0
        %2271 = vdwg.mxu0
        %v2272 = vmax.f32 %v2267, 0.0
        %v2273 = vpack.c.bf16 %v2272, %v2272
        %v2274 = vld [vmem:[%s1 + $0x128] sm:$0xf]
        %v2275 = vld [vmem:[%s1 + $0x12c] sm:$0xf]
        %v2276 = vld [vmem:[%s1 + $0x130] sm:$0xf]
        %v2277 = vld [vmem:[%s1 + $0x134] sm:$0xf]
        %v2278 = vld [vmem:[%s1 + $0x138] sm:$0xf]
        %v2279 = vld [vmem:[%s1 + $0x13c] sm:$0xf]
        %v2280 = vld [vmem:[%s1 + $0x140] sm:$0xf]
        %v2281 = vld [vmem:[%s1 + $0x144] sm:$0xf]
        %v2282 = vld [vmem:[%s2 + $0xd0] sm:$0x1]
        %v2283 = vlaneseq
        %v2284 = vshrl.u32 %v2283, 7
        %v2285 = vsub.s32 0, %v2284
        %v2286 = vrot.slane %v2282, %v2285
        %v2295 = vunpack.c.l.b16 %v2274
        %v2296 = vunpack.c.l.b16 %v2275
        %v2297 = vunpack.c.l.b16 %v2276
        %v2298 = vunpack.c.l.b16 %v2277
        %v2299 = vunpack.c.l.b16 %v2278
        %v2300 = vunpack.c.l.b16 %v2279
        %v2301 = vunpack.c.l.b16 %v2280
        %v2302 = vunpack.c.l.b16 %v2281
        %v2303 = vpack.c.b16 %v2296, %v2295
        %v2304 = vpack.c.b16 %v2298, %v2297
        %v2305 = vpack.c.b16 %v2300, %v2299
        %v2306 = vpack.c.b16 %v2302, %v2301
        %v2312 = vsel %vm327, %v2273, 0
        %2314 = vmatprep.subr.bf16.mxu0 0
        %2315 = vmatpush1.bf16.msra.mxu0 %v2303
        %2316 = vmatprep.subr.bf16.mxu0 0
        %2317 = vmatpush1.bf16.msra.mxu0 %v2304
        %2318 = vmatprep.subr.bf16.mxu0 0
        %2319 = vmatpush1.bf16.msra.mxu0 %v2305
        %2320 = vmatprep.subr.bf16.mxu0 0
        %2321 = vmatpush1.bf16.msra.mxu0 %v2306
        %2322 = vmatprep.subr.bf16.mxu0 0
        %2323 = vmatpush1.bf16.msra.mxu0 0
        %2324 = vmatprep.subr.bf16.mxu0 0
        %2325 = vmatpush1.bf16.msra.mxu0 0
        %2326 = vmatprep.subr.bf16.mxu0 0
        %2327 = vmatpush1.bf16.msra.mxu0 0
        %2328 = vmatprep.subr.bf16.mxu0 0
        %2329 = vmatpush1.bf16.msra.mxu0 0
        %2330 = vmatprep.subr.bf16.mxu0 0
        %2331 = vmatpush1.bf16.msra.mxu0 0
        %2332 = vmatprep.subr.bf16.mxu0 0
        %2333 = vmatpush1.bf16.msra.mxu0 0
        %2334 = vmatprep.subr.bf16.mxu0 0
        %2335 = vmatpush1.bf16.msra.mxu0 0
        %2336 = vmatprep.subr.bf16.mxu0 0
        %2337 = vmatpush1.bf16.msra.mxu0 0
        %2338 = vmatprep.subr.bf16.mxu0 0
        %2339 = vmatpush1.bf16.msra.mxu0 0
        %2340 = vmatprep.subr.bf16.mxu0 0
        %2341 = vmatpush1.bf16.msra.mxu0 0
        %2342 = vmatprep.subr.bf16.mxu0 0
        %2343 = vmatpush1.bf16.msra.mxu0 0
        %2344 = vmatprep.subr.bf16.mxu0 0
        %2345 = vmatpush1.bf16.msra.mxu0 0
        %2346 = vmatprep.mubr.bf16.mxu0 0
        %2347 = vmatmul.mubr.bf16.gmra.mrb[0].mxu0 %v2312
        %v2348 = vpop.f32.mrb[0].mxu0
        %v2349 = vadd.f32 %v2286, %v2348
        %v2350 = vpop.f32.mrb[0].mxu0
        %v2351 = vpop.f32.mrb[0].mxu0
        %v2352 = vpop.f32.mrb[0].mxu0
        %2353 = vdwg.mxu0
        %v2354 = vadd.f32 %v2206, %v2349
        %v2355 = vld [vmem:[%s2 + $0xd8] sm:$0x1]
        %v2356 = vld [vmem:[%s2 + $0xe0] sm:$0x1]
        %v2357 = vsel %vm471, %v2354, 0.0
        %2358 = vadd.xlane.f32.xlu0 %v2357
        %v2359 = vpop.xlane.xlu0 %2358
        %v2360 = vmul.f32 %v2359, %v993
        %v2361 = vmul.f32 %v2354, %v2354
        %v2362 = vsel %vm471, %v2361, 0.0
        %2363 = vadd.xlane.f32.xlu0 %v2362
        %v2364 = vpop.xlane.xlu0 %2363
        %v2365 = vmul.f32 %v2364, %v993
        %v2366 = vmul.f32 %v2360, %v2360
        %v2367 = vsub.f32 %v2365, %v2366
        %v2368 = vsub.f32 %v2354, %v2360
        %v2369 = vadd.f32 %v2367, 1e-05
        %v2370 = vrsqrt.pop %v2369
        %v2371 = vmul.f32 %v2368, %v2370
        %v2372 = vlaneseq
        %v2373 = vshrl.u32 %v2372, 7
        %v2374 = vsub.s32 0, %v2373
        %v2375 = vrot.slane %v2355, %v2374
        %v2376 = vmul.f32 %v2371, %v2375
        %v2377 = vlaneseq
        %v2378 = vshrl.u32 %v2377, 7
        %v2379 = vsub.s32 0, %v2378
        %v2380 = vrot.slane %v2356, %v2379
        %v2381 = vadd.f32 %v2376, %v2380
        %v2382 = vld [vmem:[%s2 + $0xe8] sm:$0x1]
        %v2383 = vld [vmem:[%s2 + $0xf0] sm:$0x1]
        %v2384 = vsel %vm471, %v2381, 0.0
        %2385 = vadd.xlane.f32.xlu0 %v2384
        %v2386 = vpop.xlane.xlu0 %2385
        %v2387 = vmul.f32 %v2386, %v993
        %v2388 = vmul.f32 %v2381, %v2381
        %v2389 = vsel %vm471, %v2388, 0.0
        %2390 = vadd.xlane.f32.xlu0 %v2389
        %v2391 = vpop.xlane.xlu0 %2390
        %v2392 = vmul.f32 %v2391, %v993
        %v2393 = vmul.f32 %v2387, %v2387
        %v2394 = vsub.f32 %v2392, %v2393
        %v2395 = vsub.f32 %v2381, %v2387
        %v2396 = vadd.f32 %v2394, 1e-05
        %v2397 = vrsqrt.pop %v2396
        %v2398 = vmul.f32 %v2395, %v2397
        %v2399 = vlaneseq
        %v2400 = vshrl.u32 %v2399, 7
        %v2401 = vsub.s32 0, %v2400
        %v2402 = vrot.slane %v2382, %v2401
        %v2403 = vmul.f32 %v2398, %v2402
        %v2404 = vlaneseq
        %v2405 = vshrl.u32 %v2404, 7
        %v2406 = vsub.s32 0, %v2405
        %v2407 = vrot.slane %v2383, %v2406
        %v2408 = vadd.f32 %v2403, %v2407
        %v2409 = vpack.c.bf16 %v2408, %v2408
        %v2410 = vld [vmem:[%s1 + $0x148] sm:$0xf]
        %v2411 = vld [vmem:[%s1 + $0x14c] sm:$0xf]
        %v2412 = vld [vmem:[%s1 + $0x150] sm:$0xf]
        %v2413 = vld [vmem:[%s1 + $0x154] sm:$0xf]
        %v2414 = vld [vmem:[%s2 + $0xf8] sm:$0x1]
        %v2415 = vlaneseq
        %v2416 = vshrl.u32 %v2415, 7
        %v2417 = vsub.s32 0, %v2416
        %v2418 = vrot.slane %v2414, %v2417
        %v2423 = vunpack.c.l.b16 %v2410
        %v2424 = vunpack.c.l.b16 %v2411
        %v2425 = vunpack.c.l.b16 %v2412
        %v2426 = vunpack.c.l.b16 %v2413
        %v2427 = vpack.c.b16 %v2424, %v2423
        %v2428 = vpack.c.b16 %v2426, %v2425
        %v2432 = vsel %vm471, %v2409, 0
        %2434 = vmatprep.subr.bf16.mxu0 0
        %2435 = vmatpush1.bf16.msra.mxu0 %v2427
        %2436 = vmatprep.subr.bf16.mxu0 0
        %2437 = vmatpush1.bf16.msra.mxu0 %v2428
        %2438 = vmatprep.subr.bf16.mxu0 0
        %2439 = vmatpush1.bf16.msra.mxu0 0
        %2440 = vmatprep.subr.bf16.mxu0 0
        %2441 = vmatpush1.bf16.msra.mxu0 0
        %2442 = vmatprep.subr.bf16.mxu0 0
        %2443 = vmatpush1.bf16.msra.mxu0 0
        %2444 = vmatprep.subr.bf16.mxu0 0
        %2445 = vmatpush1.bf16.msra.mxu0 0
        %2446 = vmatprep.subr.bf16.mxu0 0
        %2447 = vmatpush1.bf16.msra.mxu0 0
        %2448 = vmatprep.subr.bf16.mxu0 0
        %2449 = vmatpush1.bf16.msra.mxu0 0
        %2450 = vmatprep.subr.bf16.mxu0 0
        %2451 = vmatpush1.bf16.msra.mxu0 0
        %2452 = vmatprep.subr.bf16.mxu0 0
        %2453 = vmatpush1.bf16.msra.mxu0 0
        %2454 = vmatprep.subr.bf16.mxu0 0
        %2455 = vmatpush1.bf16.msra.mxu0 0
        %2456 = vmatprep.subr.bf16.mxu0 0
        %2457 = vmatpush1.bf16.msra.mxu0 0
        %2458 = vmatprep.subr.bf16.mxu0 0
        %2459 = vmatpush1.bf16.msra.mxu0 0
        %2460 = vmatprep.subr.bf16.mxu0 0
        %2461 = vmatpush1.bf16.msra.mxu0 0
        %2462 = vmatprep.subr.bf16.mxu0 0
        %2463 = vmatpush1.bf16.msra.mxu0 0
        %2464 = vmatprep.subr.bf16.mxu0 0
        %2465 = vmatpush1.bf16.msra.mxu0 0
        %2466 = vmatprep.mubr.bf16.mxu0 0
        %2467 = vmatmul.mubr.bf16.gmra.mrb[0].mxu0 %v2432
        %v2468 = vpop.f32.mrb[0].mxu0
        %v2469 = vadd.f32 %v2418, %v2468
        %v2470 = vpop.f32.mrb[0].mxu0
        %v2471 = vpop.f32.mrb[0].mxu0
        %v2472 = vpop.f32.mrb[0].mxu0
        %2473 = vdwg.mxu0
        %2474 = vst [vmem:[%s191] sm:$0xff] %v2469
        %v2475 = vld [vmem:[%s1 + $0x158] sm:$0xf]
        %v2476 = vld [vmem:[%s1 + $0x15c] sm:$0xf]
        %v2477 = vld [vmem:[%s1 + $0x160] sm:$0xf]
        %v2478 = vld [vmem:[%s1 + $0x164] sm:$0xf]
        %v2479 = vld [vmem:[%s2 + $0x100] sm:$0x1]
        %v2480 = vlaneseq
        %v2481 = vshrl.u32 %v2480, 7
        %v2482 = vsub.s32 0, %v2481
        %v2483 = vrot.slane %v2479, %v2482
        %v2488 = vunpack.c.l.b16 %v2475
        %v2489 = vunpack.c.l.b16 %v2476
        %v2490 = vunpack.c.l.b16 %v2477
        %v2491 = vunpack.c.l.b16 %v2478
        %v2492 = vpack.c.b16 %v2489, %v2488
        %v2493 = vpack.c.b16 %v2491, %v2490
        %2496 = vmatprep.subr.bf16.mxu0 0
        %2497 = vmatpush1.bf16.msra.mxu0 %v2492
        %2498 = vmatprep.subr.bf16.mxu0 0
        %2499 = vmatpush1.bf16.msra.mxu0 %v2493
        %2500 = vmatprep.subr.bf16.mxu0 0
        %2501 = vmatpush1.bf16.msra.mxu0 0
        %2502 = vmatprep.subr.bf16.mxu0 0
        %2503 = vmatpush1.bf16.msra.mxu0 0
        %2504 = vmatprep.subr.bf16.mxu0 0
        %2505 = vmatpush1.bf16.msra.mxu0 0
        %2506 = vmatprep.subr.bf16.mxu0 0
        %2507 = vmatpush1.bf16.msra.mxu0 0
        %2508 = vmatprep.subr.bf16.mxu0 0
        %2509 = vmatpush1.bf16.msra.mxu0 0
        %2510 = vmatprep.subr.bf16.mxu0 0
        %2511 = vmatpush1.bf16.msra.mxu0 0
        %2512 = vmatprep.subr.bf16.mxu0 0
        %2513 = vmatpush1.bf16.msra.mxu0 0
        %2514 = vmatprep.subr.bf16.mxu0 0
        %2515 = vmatpush1.bf16.msra.mxu0 0
        %2516 = vmatprep.subr.bf16.mxu0 0
        %2517 = vmatpush1.bf16.msra.mxu0 0
        %2518 = vmatprep.subr.bf16.mxu0 0
        %2519 = vmatpush1.bf16.msra.mxu0 0
        %2520 = vmatprep.subr.bf16.mxu0 0
        %2521 = vmatpush1.bf16.msra.mxu0 0
        %2522 = vmatprep.subr.bf16.mxu0 0
        %2523 = vmatpush1.bf16.msra.mxu0 0
        %2524 = vmatprep.subr.bf16.mxu0 0
        %2525 = vmatpush1.bf16.msra.mxu0 0
        %2526 = vmatprep.subr.bf16.mxu0 0
        %2527 = vmatpush1.bf16.msra.mxu0 0
        %2528 = vmatprep.mubr.bf16.mxu0 0
        %2529 = vmatmul.mubr.bf16.gmra.mrb[0].mxu0 %v2432
        %v2530 = vpop.f32.mrb[0].mxu0
        %v2531 = vadd.f32 %v2483, %v2530
        %v2532 = vpop.f32.mrb[0].mxu0
        %v2533 = vpop.f32.mrb[0].mxu0
        %v2534 = vpop.f32.mrb[0].mxu0
        %2535 = vdwg.mxu0
        %v2536 = vmax.f32 %v2531, 0.0
        %v2537 = vpack.c.bf16 %v2536, %v2536
        %v2538 = vld [vmem:[%s1 + $0x168] sm:$0xf]
        %v2539 = vld [vmem:[%s1 + $0x16c] sm:$0xf]
        %v2540 = vld [vmem:[%s1 + $0x170] sm:$0xf]
        %v2541 = vld [vmem:[%s1 + $0x174] sm:$0xf]
        %v2542 = vld [vmem:[%s2 + $0x108] sm:$0x1]
        %v2543 = vlaneseq
        %v2544 = vshrl.u32 %v2543, 7
        %v2545 = vsub.s32 0, %v2544
        %v2546 = vrot.slane %v2542, %v2545
        %v2551 = vunpack.c.l.b16 %v2538
        %v2552 = vunpack.c.l.b16 %v2539
        %v2553 = vunpack.c.l.b16 %v2540
        %v2554 = vunpack.c.l.b16 %v2541
        %v2555 = vpack.c.b16 %v2552, %v2551
        %v2556 = vpack.c.b16 %v2554, %v2553
        %v2560 = vsel %vm471, %v2537, 0
        %2562 = vmatprep.subr.bf16.mxu0 0
        %2563 = vmatpush1.bf16.msra.mxu0 %v2555
        %2564 = vmatprep.subr.bf16.mxu0 0
        %2565 = vmatpush1.bf16.msra.mxu0 %v2556
        %2566 = vmatprep.subr.bf16.mxu0 0
        %2567 = vmatpush1.bf16.msra.mxu0 0
        %2568 = vmatprep.subr.bf16.mxu0 0
        %2569 = vmatpush1.bf16.msra.mxu0 0
        %2570 = vmatprep.subr.bf16.mxu0 0
        %2571 = vmatpush1.bf16.msra.mxu0 0
        %2572 = vmatprep.subr.bf16.mxu0 0
        %2573 = vmatpush1.bf16.msra.mxu0 0
        %2574 = vmatprep.subr.bf16.mxu0 0
        %2575 = vmatpush1.bf16.msra.mxu0 0
        %2576 = vmatprep.subr.bf16.mxu0 0
        %2577 = vmatpush1.bf16.msra.mxu0 0
        %2578 = vmatprep.subr.bf16.mxu0 0
        %2579 = vmatpush1.bf16.msra.mxu0 0
        %2580 = vmatprep.subr.bf16.mxu0 0
        %2581 = vmatpush1.bf16.msra.mxu0 0
        %2582 = vmatprep.subr.bf16.mxu0 0
        %2583 = vmatpush1.bf16.msra.mxu0 0
        %2584 = vmatprep.subr.bf16.mxu0 0
        %2585 = vmatpush1.bf16.msra.mxu0 0
        %2586 = vmatprep.subr.bf16.mxu0 0
        %2587 = vmatpush1.bf16.msra.mxu0 0
        %2588 = vmatprep.subr.bf16.mxu0 0
        %2589 = vmatpush1.bf16.msra.mxu0 0
        %2590 = vmatprep.subr.bf16.mxu0 0
        %2591 = vmatpush1.bf16.msra.mxu0 0
        %2592 = vmatprep.subr.bf16.mxu0 0
        %2593 = vmatpush1.bf16.msra.mxu0 0
        %2594 = vmatprep.mubr.bf16.mxu0 0
        %2595 = vmatmul.mubr.bf16.gmra.mrb[0].mxu0 %v2560
        %v2596 = vpop.f32.mrb[0].mxu0
        %v2597 = vadd.f32 %v2546, %v2596
        %v2598 = vpop.f32.mrb[0].mxu0
        %v2599 = vpop.f32.mrb[0].mxu0
        %v2600 = vpop.f32.mrb[0].mxu0
        %2601 = vdwg.mxu0
        %v2602 = vmax.f32 %v2597, 0.0
        %v2603 = vpack.c.bf16 %v2602, %v2602
        %v2604 = vld [vmem:[%s1 + $0x178] sm:$0xf]
        %v2605 = vld [vmem:[%s1 + $0x17c] sm:$0xf]
        %v2606 = vld [vmem:[%s1 + $0x180] sm:$0xf]
        %v2607 = vld [vmem:[%s1 + $0x184] sm:$0xf]
        %v2608 = vld [vmem:[%s2 + $0x110] sm:$0x1]
        %v2609 = vlaneseq
        %v2610 = vshrl.u32 %v2609, 7
        %v2611 = vsub.s32 0, %v2610
        %v2612 = vrot.slane %v2608, %v2611
        %v2617 = vunpack.c.l.b16 %v2604
        %v2618 = vunpack.c.l.b16 %v2605
        %v2619 = vunpack.c.l.b16 %v2606
        %v2620 = vunpack.c.l.b16 %v2607
        %v2621 = vpack.c.b16 %v2618, %v2617
        %v2622 = vpack.c.b16 %v2620, %v2619
        %v2626 = vsel %vm471, %v2603, 0
        %2628 = vmatprep.subr.bf16.mxu0 0
        %2629 = vmatpush1.bf16.msra.mxu0 %v2621
        %2630 = vmatprep.subr.bf16.mxu0 0
        %2631 = vmatpush1.bf16.msra.mxu0 %v2622
        %2632 = vmatprep.subr.bf16.mxu0 0
        %2633 = vmatpush1.bf16.msra.mxu0 0
        %2634 = vmatprep.subr.bf16.mxu0 0
        %2635 = vmatpush1.bf16.msra.mxu0 0
        %2636 = vmatprep.subr.bf16.mxu0 0
        %2637 = vmatpush1.bf16.msra.mxu0 0
        %2638 = vmatprep.subr.bf16.mxu0 0
        %2639 = vmatpush1.bf16.msra.mxu0 0
        %2640 = vmatprep.subr.bf16.mxu0 0
        %2641 = vmatpush1.bf16.msra.mxu0 0
        %2642 = vmatprep.subr.bf16.mxu0 0
        %2643 = vmatpush1.bf16.msra.mxu0 0
        %2644 = vmatprep.subr.bf16.mxu0 0
        %2645 = vmatpush1.bf16.msra.mxu0 0
        %2646 = vmatprep.subr.bf16.mxu0 0
        %2647 = vmatpush1.bf16.msra.mxu0 0
        %2648 = vmatprep.subr.bf16.mxu0 0
        %2649 = vmatpush1.bf16.msra.mxu0 0
        %2650 = vmatprep.subr.bf16.mxu0 0
        %2651 = vmatpush1.bf16.msra.mxu0 0
        %2652 = vmatprep.subr.bf16.mxu0 0
        %2653 = vmatpush1.bf16.msra.mxu0 0
        %2654 = vmatprep.subr.bf16.mxu0 0
        %2655 = vmatpush1.bf16.msra.mxu0 0
        %2656 = vmatprep.subr.bf16.mxu0 0
        %2657 = vmatpush1.bf16.msra.mxu0 0
        %2658 = vmatprep.subr.bf16.mxu0 0
        %2659 = vmatpush1.bf16.msra.mxu0 0
        %2660 = vmatprep.mubr.bf16.mxu0 0
        %2661 = vmatmul.mubr.bf16.gmra.mrb[0].mxu0 %v2626
        %v2662 = vpop.f32.mrb[0].mxu0
        %v2663 = vadd.f32 %v2612, %v2662
        %v2664 = vpop.f32.mrb[0].mxu0
        %v2665 = vpop.f32.mrb[0].mxu0
        %v2666 = vpop.f32.mrb[0].mxu0
        %2667 = vdwg.mxu0
        %v2668 = vxor.u32 %v2663, 2147483648
        %v2669 = vmul.f32 %v2668, 1.442695
        %v2670 = vpow.pop %v2669
        %v2671 = vadd.f32 %v2670, 1.0
        %v2672 = vrcp.pop %v2671
        %v2673 = vmul.f32 1.0, %v2672
        %2674 = vst [vmem:[%s206] sm:$0xff] %v2673
        %s2675 = sand.u32 %s95, 1
        %s2676 = scalar_lea.sflag [#allocation3], %s2675
        %s2677 = sand.u32 %s95, 1
        %s2678 = smul.addr %s2677, 8
        %s2679 = scalar_lea.vmem [#allocation2], %s2678
        %p2680 = scmp.lt.s32.totalorder %s19, 1
        %s2681 = scalar_select %p2680, %s19, 1
        %s2682 = smul.addr %s2681, 8
        %s2683 = scalar_lea.vmem %s4, %s2682
        // Predicated region
        $region33: #{fwd.1} parent=31 // pred_check
          %p2684 = pneg %p105
        $region34: #{fwd.1} parent=31 // pred_check_branch
          %2686 = sbr.rel (%p2684) target = $region36
        $region35: #{fwd.1} parent=31 // pred_region
          %s2688 = ssub.s32 128, 128
          %2689 = vsyncadd %s2676, %s2688
          %s2690 = smul.addr %s19, 128
          %s2691 = scalar_lea.hbm %s3, %s2690
          %s2693 = sshll.u32 %s2679, 4
          %s2694 = int_to_ptr.vmem [resolvable:$true] %s2693
          %2696 = dma.vmem_to_hbm [thread:$0]  %s2694, 128, %s2691, %s2676
        $region36: #{fwd.1} parent=31 // pred_fallthru
          _
        // Predicated region
        $region37: #{fwd.1} parent=31 // pred_check
          %p2697 = pneg %p131
        $region38: #{fwd.1} parent=31 // pred_check_branch
          %2699 = sbr.rel (%p2697) target = $region40
        $region39: #{fwd.1} parent=31 // pred_region
          _
        $region40: #{fwd.1} parent=31 // pred_fallthru
          _
      $region32: #{fwd.1} parent=5 // pred_fallthru
        _
      %p2700 = scmp.le.s32.totalorder 2, %s14
      // Predicated region
      $region41: #{fwd.1} parent=5 // pred_check
        %p2701 = pneg %p2700
      $region42: #{fwd.1} parent=5 // pred_check_branch
        %2703 = sbr.rel (%p2701) target = $region44
      $region43: #{fwd.1} parent=5 // pred_region
        %s2704 = ssub.s32 %s14, 2
        // Predicated region
        $region45: #{fwd.1} parent=43 // pred_check
          %p2705 = pneg %p111
        $region46: #{fwd.1} parent=43 // pred_check_branch
          %2707 = sbr.rel (%p2705) target = $region48
        $region47: #{fwd.1} parent=43 // pred_region
          %s2708 = sand.u32 %s96, 1
          %s2709 = scalar_lea.sflag [#allocation3], %s2708
          %s2710 = sand.u32 %s96, 1
          %s2711 = smul.addr %s2710, 8
          %s2712 = scalar_lea.vmem [#allocation2], %s2711
          %2713 = dma.done %s2709, 128
        $region48: #{fwd.1} parent=43 // pred_fallthru
          _
        // Predicated region
        $region49: #{fwd.1} parent=43 // pred_check
          %p2714 = pneg %p137
        $region50: #{fwd.1} parent=43 // pred_check_branch
          %2716 = sbr.rel (%p2714) target = $region52
        $region51: #{fwd.1} parent=43 // pred_region
          %p2717 = scmp.lt.s32.totalorder %s20, 1
          %s2718 = scalar_select %p2717, %s20, 1
          %s2719 = smul.addr %s2718, 8
          %s2720 = scalar_lea.vmem %s4, %s2719
        $region52: #{fwd.1} parent=43 // pred_fallthru
          _
      $region44: #{fwd.1} parent=5 // pred_fallthru
        _
    $region6: #{fwd.1} parent=1 // loop_footer
      %s18 = sadd.s32 1, %s14
    $region7: #{fwd.1} parent=1 // loop_footer_branch
      %13 = sbr.rel target = $region3
    $region8: #{fwd.1} parent=1 // loop_exit
      _
    %2721 = vsyncpa [#allocation3], 1
    %s2722 = scalar_lea.sflag [#allocation3], 1
    %2723 = vsyncpa %s2722, 1

</llo_original>
